<compile_context>
chip_gen: v6e
topology: v6e:2x2x1
jax: 0.10.0
libtpu: 0.0.40
codegen_flags: <defaults>
</compile_context>

<pallas_src>
import numpy as np
import jax
import jax.numpy as jnp
from jax import lax
from jax.experimental import pallas as pl
from jax.experimental.pallas import tpu as pltpu

feat_dims = {'node': {'node_d': 21, 'angle': 12, 'distance': 80, 'direction': 9},
             'edge': {'orientation': 4, 'distance': 96, 'direction': 15}}


# ----------------------------------------------------------------------------
# Pallas kernel 1: masked pairwise NEGATED adjusted distance (O(N^2) hot path of _dist)
#   D2 = |x_i|^2 + |x_j|^2 - 2 <x_i, x_j>   (cross term on the MXU, |x_j|^2 hoisted to wrapper)
#   score = -( mask2d ? sqrt(D2+eps) : 10000 + D_max + 1 )   -> largest score == nearest neighbor
# ----------------------------------------------------------------------------
def _dist_score_kernel(x_ref, xt_ref, x2r_ref, mcol_ref, mrow_ref, s_ref):
    # x_ref: (1, TM, 3)  xt_ref: (1, 3, N)  x2r_ref: (1, 1, N)
    # mcol_ref: (1, TM, 1)  mrow_ref: (1, 1, N)  s_ref: (1, TM, N)
    x = x_ref[0]                                          # (TM, 3) f32
    xt = xt_ref[0]                                        # (3, N)  f32
    x2_row = x2r_ref[0]                                   # (1, N)  f32  (hoisted)
    mcol = mcol_ref[0] > 0.5                              # (TM, 1) bool
    mrow = mrow_ref[0] > 0.5                              # (1, N)  bool
    x2_col = jnp.sum(x * x, axis=-1, keepdims=True)       # (TM, 1)
    cross = jnp.dot(x, xt, preferred_element_type=jnp.float32)   # (TM, N) on MXU
    d2 = jnp.maximum(x2_col + x2_row - 2.0 * cross, 0.0)
    mask2d = jnp.logical_and(mcol, mrow)                  # (TM, N)
    D = jnp.where(mask2d, jnp.sqrt(d2 + 1e-6), 10000.0)
    D_max = jnp.max(D, axis=-1, keepdims=True)            # row max over full N columns (as torch)
    D_adjust = jnp.where(mask2d, D, D + D_max + 1.0)
    s_ref[0] = (-D_adjust).astype(s_ref.dtype)            # negated: consumer does max-k directly


def _pick_row_tile(N, out_bytes, budget=12 << 20):
    # Largest power-of-two tile (<=512) whose double-buffered output fits the VMEM budget.
    # 12 MiB double-buffered output keeps headroom under v5e's 16 MiB scoped default and
    # well under v7x's 64 MiB physical VMEM.
    t = 512
    while t > 16 and 2 * t * N * out_bytes > budget:
        t //= 2
    return N if N <= t else t        # full-dim block for small N (always a legal BlockSpec)


def pairwise_neg_dist_scores(Xb, mask, score_dtype=jnp.bfloat16):
    # Xb: (B, N, 3) float32 backbone (P) coords, mask: (B, N) float32
    # Returns (B, N, N) scores = -D_adjust in `score_dtype` (bf16 halves HBM writeback + re-read).
    B, N, _ = Xb.shape
    out_bytes = jnp.dtype(score_dtype).itemsize
    tm = _pick_row_tile(N, out_bytes)
    Xb = Xb.astype(jnp.float32)
    Xt = jnp.transpose(Xb, (0, 2, 1))                     # (B, 3, N)
    x2_row = jnp.sum(Xb * Xb, axis=-1)[:, None, :]        # (B, 1, N)  hoisted |x_j|^2
    m_col = mask[:, :, None].astype(jnp.float32)          # (B, N, 1)
    m_row = mask[:, None, :].astype(jnp.float32)          # (B, 1, N)
    cost = pl.CostEstimate(
        flops=int(16 * B * N * N),
        transcendentals=int(B * N * N),
        bytes_accessed=int(B * N * N * out_bytes + B * N * 4 * 9))
    return pl.pallas_call(
        _dist_score_kernel,
        out_shape=jax.ShapeDtypeStruct((B, N, N), score_dtype),
        grid=(B, pl.cdiv(N, tm)),
        in_specs=[
            pl.BlockSpec((1, tm, 3), lambda b, i: (b, i, 0)),
            pl.BlockSpec((1, 3, N), lambda b, i: (b, 0, 0)),
            pl.BlockSpec((1, 1, N), lambda b, i: (b, 0, 0)),
            pl.BlockSpec((1, tm, 1), lambda b, i: (b, i, 0)),
            pl.BlockSpec((1, 1, N), lambda b, i: (b, 0, 0)),
        ],
        out_specs=pl.BlockSpec((1, tm, N), lambda b, i: (b, i, 0)),
        compiler_params=pltpu.CompilerParams(
            dimension_semantics=("parallel", "parallel")),
        cost_estimate=cost,
    )(Xb, Xt, x2_row, m_col, m_row)


# ----------------------------------------------------------------------------
# Pallas kernel 2: fused Linear (bf16 MXU matmul) + Normalize (f32 layer norm, unbiased var)
# ----------------------------------------------------------------------------
def _linear_norm_kernel(x_ref, wt_ref, b_ref, g_ref, beta_ref, o_ref):
    x = x_ref[...]                            # (TM, Din)  bf16
    wt = wt_ref[...]                          # (Din, Dout) bf16 (resident across the grid)
    y = jnp.dot(x, wt, preferred_element_type=jnp.float32) + b_ref[...]   # (TM, Dout) f32
    dout = y.shape[-1]
    mu = jnp.mean(y, axis=-1, keepdims=True)
    yc = y - mu
    var = jnp.sum(yc * yc, axis=-1, keepdims=True) * (1.0 / (dout - 1))   # torch.var (unbiased)
    inv = pl.reciprocal(jnp.sqrt(var + 1e-6) + 1e-6, approx=True)         # EUP, off the VALU
    o_ref[...] = (g_ref[...] * yc * inv + beta_ref[...]).astype(o_ref.dtype)


def fused_linear_normalize(x, W, b, gain, bias, tm=1024):
    # x: (M, Din), W: (Dout, Din) torch-style, b/gain/bias: (Dout,)
    M, Din = x.shape
    Dout = W.shape[0]
    tm_eff = M if M <= tm else tm             # full-dim block for small M, else 1024-row tiles
    grid_m = pl.cdiv(M, tm_eff)               # no jnp.pad copy: ragged last block is masked
    x_bf = x.astype(jnp.bfloat16)             # bf16 MXU operand halves activation HBM traffic
    Wt = jnp.transpose(W).astype(jnp.bfloat16)   # (Din, Dout)
    cost = pl.CostEstimate(
        flops=int(2 * M * Din * Dout + 8 * M * Dout),
        transcendentals=int(2 * M),
        bytes_accessed=int(M * Din * 2 + M * Dout * 4 + Din * Dout * 2 + 3 * Dout * 4))
    out = pl.pallas_call(
        _linear_norm_kernel,
        out_shape=jax.ShapeDtypeStruct((M, Dout), jnp.float32),
        grid=(grid_m,),
        in_specs=[
            pl.BlockSpec((tm_eff, Din), lambda i: (i, 0)),
            pl.BlockSpec((Din, Dout), lambda i: (0, 0)),
            pl.BlockSpec((1, Dout), lambda i: (0, 0)),
            pl.BlockSpec((1, Dout), lambda i: (0, 0)),
            pl.BlockSpec((1, Dout), lambda i: (0, 0)),
        ],
        out_specs=pl.BlockSpec((tm_eff, Dout), lambda i: (i, 0)),
        compiler_params=pltpu.CompilerParams(dimension_semantics=("parallel",)),
        cost_estimate=cost,
    )(x_bf, Wt, b.reshape(1, -1).astype(jnp.float32),
      gain.reshape(1, -1).astype(jnp.float32), bias.reshape(1, -1).astype(jnp.float32))
    return out


# ----------------------------------------------------------------------------
# Plain-JAX geometric feature helpers (mirror the torch code exactly)
# ----------------------------------------------------------------------------
def nan_to_num(x, nan=0.0):
    return jnp.where(jnp.isnan(x), nan, x)


def _normalize(x, axis=-1):
    return nan_to_num(x / jnp.linalg.norm(x, axis=axis, keepdims=True))


def f_normalize(x, axis=-1, eps=1e-12):   # torch.nn.functional.normalize
    return x / jnp.maximum(jnp.linalg.norm(x, axis=axis, keepdims=True), eps)


def gather_nodes(nodes, idx):
    # nodes: (B, N, C), idx: (B, N, K) -> (B, N, K, C)   (single XLA gather)
    return jax.vmap(lambda n, i: n[i])(nodes, idx)


def _rbf(D, num_rbf):
    # D: (...,) -> (..., num_rbf)
    D_mu = jnp.linspace(0.0, 20.0, num_rbf).reshape((1,) * D.ndim + (-1,))
    D_sigma = 20.0 / num_rbf
    return jnp.exp(-((D[..., None] - D_mu) / D_sigma) ** 2)


def _quaternions(R):
    diag = jnp.diagonal(R, axis1=-2, axis2=-1)
    Rxx, Ryy, Rzz = diag[..., 0], diag[..., 1], diag[..., 2]
    magnitudes = 0.5 * jnp.sqrt(jnp.abs(
        1 + jnp.stack([Rxx - Ryy - Rzz, -Rxx + Ryy - Rzz, -Rxx - Ryy + Rzz], -1)))
    signs = jnp.sign(jnp.stack([R[..., 2, 1] - R[..., 1, 2],
                                R[..., 0, 2] - R[..., 2, 0],
                                R[..., 1, 0] - R[..., 0, 1]], -1))
    xyz = signs * magnitudes
    w = jnp.sqrt(jnp.maximum(1 + jnp.sum(diag, -1, keepdims=True), 0.0)) / 2.0
    Q = jnp.concatenate((xyz, w), -1)
    return f_normalize(Q, axis=-1)


def _dihedrals(X, eps=1e-7):
    B, N = X.shape[0], X.shape[1]
    Xf = X[:, :, :6, :].reshape(B, 6 * N, 3)
    dX = Xf[:, 5:, :] - Xf[:, :-5, :]
    U = f_normalize(dX, axis=-1)
    u_2, u_1, u_0 = U[:, :-2, :], U[:, 1:-1, :], U[:, 2:, :]
    n_2 = f_normalize(jnp.cross(u_2, u_1), axis=-1)
    n_1 = f_normalize(jnp.cross(u_1, u_0), axis=-1)
    cosD = jnp.sum(n_2 * n_1, -1)
    cosD = jnp.clip(cosD, -1 + eps, 1 - eps)
    D = jnp.sign(jnp.sum(u_2 * n_1, -1)) * jnp.arccos(cosD)
    D = jnp.pad(D, ((0, 0), (3, 4)))
    D = D.reshape(B, D.shape[1] // 6, 6)
    return jnp.concatenate((jnp.cos(D), jnp.sin(D)), 2)


def _local_frames(X):
    # Per-node local frame Q (B,N,9) and frame origin Xc (B,N,3); same math as torch code.
    B, N = X.shape[0], X.shape[1]
    Xf = X[:, :, :6, :].reshape(B, 6 * N, 3)
    dX = Xf[:, 1:, :] - Xf[:, :-1, :]
    U = _normalize(dX, axis=-1)
    u_0, u_1 = U[:, :-2, :], U[:, 1:-1, :]
    n_0 = _normalize(jnp.cross(u_0, u_1), axis=-1)
    b_1 = _normalize(u_0 - u_1, axis=-1)
    n_0 = n_0[:, 4::6, :]
    b_1 = b_1[:, 4::6, :]
    Xc = Xf[:, 4::6, :]                                    # (B, N, 3)
    Q = jnp.stack((b_1, n_0, jnp.cross(b_1, n_0)), 2).reshape(B, N - 1, 9)
    Q = jnp.pad(Q, ((0, 0), (0, 1), (0, 0)))               # (B, N, 9)
    return Q, Xc


def _orientation_feats(X, Q, Xc, X_nbr, Q_nbr):
    # X: (B,N,7,3), Q: (B,N,9), Xc: (B,N,3), X_nbr: (B,N,K,7,3), Q_nbr: (B,N,K,9)
    B, N, K = X_nbr.shape[0], X_nbr.shape[1], X_nbr.shape[2]
    Qm = Q.reshape(B, N, 3, 3)[:, :, None]                 # (B, N, 1, 3, 3)
    Qn = Q_nbr.reshape(B, N, K, 3, 3)
    nbr_sel = X_nbr[:, :, :, jnp.array([0, 1, 2, 3, 5]), :]          # P,O5',C5',C4',O3' neighbors
    dXn = nbr_sel - Xc[:, :, None, None, :]                          # (B, N, K, 5, 3)
    dU = jnp.matmul(Qm[:, :, :, None, :, :], dXn[..., None])[..., 0] # (B, N, K, 5, 3)
    E_direct = _normalize(dU, axis=-1).reshape(B, N, K, -1)
    R = jnp.matmul(jnp.swapaxes(Qm, -1, -2), Qn)
    E_orient = _quaternions(R)
    dX_inner = X[:, :, jnp.array([0, 2, 3]), :] - Xc[:, :, None, :]
    dU_inner = jnp.matmul(Qm, dX_inner[..., None])[..., 0]           # (B, N, 3, 3)
    V_direct = _normalize(dU_inner, axis=-1).reshape(B, N, -1)
    return V_direct, E_direct, E_orient


# ----------------------------------------------------------------------------
# RNAFeatures (forward only, eval mode)
# ----------------------------------------------------------------------------
class RNAFeaturesPallas:
    def __init__(self, edge_features, node_features, node_feat_types, edge_feat_types,
                 num_rbf=16, top_k=30, key=jax.random.PRNGKey(0)):
        self.edge_features = edge_features
        self.node_features = node_features
        self.top_k = top_k
        self.num_rbf = num_rbf
        self.node_feat_types = node_feat_types
        self.edge_feat_types = edge_feat_types
        node_in = sum(feat_dims['node'][f] for f in node_feat_types)
        edge_in = sum(feat_dims['edge'][f] for f in edge_feat_types)
        k1, k2, k3, k4 = jax.random.split(key, 4)
        # deterministic synthetic parameters
        self.Wn = (jax.random.normal(k1, (node_features, node_in)) / np.sqrt(node_in)).astype(jnp.float32)
        self.bn = (0.01 * jax.random.normal(k2, (node_features,))).astype(jnp.float32)
        self.We = (jax.random.normal(k3, (edge_features, edge_in)) / np.sqrt(edge_in)).astype(jnp.float32)
        self.be = (0.01 * jax.random.normal(k4, (edge_features,))).astype(jnp.float32)
        self.gain_n = jnp.ones((node_features,), jnp.float32)
        self.bias_n = jnp.zeros((node_features,), jnp.float32)
        self.gain_e = jnp.ones((edge_features,), jnp.float32)
        self.bias_e = jnp.zeros((edge_features,), jnp.float32)
        # single jitted device function: Pallas kernels + k-selection + all geometric features
        self._fwd = jax.jit(self._device_forward)

    # ---- fully static-shaped, jit-compiled device portion ------------------
    def _device_forward(self, X, mask):
        X = X.astype(jnp.float32)
        mask = mask.astype(jnp.float32)
        B, N = X.shape[0], X.shape[1]
        atoms = X[:, :, :6, :]                               # P, O5', C5', C4', C3', O3'

        # k-NN graph: Pallas negated-score kernel + TPU k-selection on the kernel output.
        score = pairwise_neg_dist_scores(X[:, :, 0, :], mask)     # (B, N, N) bf16, = -D_adjust
        k = min(self.top_k, N)
        if N <= 128:
            _, E_idx = lax.top_k(score, k)                   # exact for small N (test path)
        else:
            _, E_idx = lax.approx_max_k(score, k, recall_target=0.95)  # precision-accepted

        # per-node local frames (needed before the consolidated gather)
        Q, Xc = _local_frames(X)                             # (B,N,9), (B,N,3)

        # ONE consolidated neighbor gather: [flattened X (21) | Q (9) | mask (1)]
        gather_src = jnp.concatenate([X.reshape(B, N, -1), Q, mask[..., None]], -1)  # (B,N,31)
        nbr = gather_nodes(gather_src, E_idx)                # (B, N, K, 31)
        K = nbr.shape[2]
        X_nbr = nbr[..., :21].reshape(B, N, K, 7, 3)
        Q_nbr = nbr[..., 21:30]
        mask_attend_f = nbr[..., 30]
        mask_attend = (mask[:, :, None] * mask_attend_f) == 1.0     # (B, N, K) bool

        # node features
        V_angle = _dihedrals(X)                                           # (B, N, 12)
        # node RBFs: atoms 1..5 vs P (pair-major, rbf-minor order == torch concat order)
        D_node = jnp.sqrt(jnp.sum((atoms[:, :, 1:6, :] - atoms[:, :, 0:1, :]) ** 2, -1) + 1e-6)
        V_dist = _rbf(D_node, self.num_rbf).reshape(B, N, -1)             # (B, N, 80)
        V_direct, E_direct, E_orient = _orientation_feats(X, Q, Xc, X_nbr, Q_nbr)

        # edge RBFs: atoms 0..5 of node i vs gathered P neighbors (B*N*K work, one tensor)
        P_nbr = X_nbr[:, :, :, 0, :]                                      # (B, N, K, 3)
        D_edge = jnp.sqrt(jnp.sum(
            (atoms[:, :, None, :, :] - P_nbr[:, :, :, None, :]) ** 2, -1) + 1e-6)   # (B,N,K,6)
        E_dist = _rbf(D_edge, self.num_rbf).reshape(B, N, K, -1)          # (B, N, K, 96)

        x_node = X.reshape(B, N, -1)
        h_V_feats = [x_node]
        if 'angle' in self.node_feat_types: h_V_feats.append(V_angle)
        if 'distance' in self.node_feat_types: h_V_feats.append(V_dist)
        if 'direction' in self.node_feat_types: h_V_feats.append(V_direct)
        h_E_feats = []
        if 'orientation' in self.edge_feat_types: h_E_feats.append(E_orient)
        if 'distance' in self.edge_feat_types: h_E_feats.append(E_dist)
        if 'direction' in self.edge_feat_types: h_E_feats.append(E_direct)

        hv_in = jnp.concatenate(h_V_feats, -1)               # (B, N, node_in)
        he_in = jnp.concatenate(h_E_feats, -1)               # (B, N, K, edge_in)

        # fused Linear + Normalize (Pallas, bf16 MXU / f32 norm): applied to all rows; the
        # data-dependent-shape row selection happens once on host afterwards — row-wise op,
        # so project-then-select == select-then-project.
        h_V_full = fused_linear_normalize(hv_in.reshape(B * N, -1), self.Wn, self.bn,
                                          self.gain_n, self.bias_n).reshape(B, N, -1)
        h_E_full = fused_linear_normalize(he_in.reshape(B * N * K, -1), self.We, self.be,
                                          self.gain_e, self.bias_e).reshape(B, N, K, -1)
        return h_V_full, h_E_full, E_idx, mask_attend

    # ---- forward: one device round-trip, then numpy bookkeeping ------------
    def forward(self, X, S, mask):
        B, N = X.shape[0], X.shape[1]
        h_V_full, h_E_full, E_idx, mask_attend = self._fwd(X, mask)

        # single host transfer; torch.masked_select / nonzero (data-dependent shapes) in numpy
        # TODO(synk): data-dependent output shapes have no static-shape Pallas equivalent.
        (h_V_np, h_E_np, E_idx_np, mask_attend_np, mask_np, S_np, X_np) = jax.device_get(
            (h_V_full, h_E_full, E_idx, mask_attend, mask, S, X))
        mask_bool_np = mask_np == 1

        h_V = jnp.asarray(h_V_np[mask_bool_np])                         # (Nn, node_features)
        h_E = jnp.asarray(h_E_np[mask_attend_np])                       # (Ne, edge_features)
        S_out = jnp.asarray(S_np[mask_bool_np])

        ms = mask_np.sum(axis=1)
        shift = np.cumsum(ms) - ms                                      # (B,)
        K = E_idx_np.shape[-1]
        src = shift.reshape(B, 1, 1) + E_idx_np
        src = src[mask_attend_np].reshape(1, -1)
        dst = shift.reshape(B, 1, 1) + np.broadcast_to(
            np.arange(N).reshape(1, N, 1), (B, N, K))
        dst = dst[mask_attend_np].reshape(1, -1)
        E_idx_out = jnp.asarray(np.concatenate((dst, src), 0).astype(np.int32))
        sparse_idx = np.argwhere(mask_np > 0)
        X_out = jnp.asarray(X_np[sparse_idx[:, 0], sparse_idx[:, 1], :, :])
        batch_id = jnp.asarray(sparse_idx[:, 0].astype(np.int32))
        return X_out, S_out, h_V, h_E, E_idx_out, batch_id


if __name__ == "__main__":
    key = jax.random.PRNGKey(0)
    kx, ks, kp = jax.random.split(key, 3)
    B, N, A = 2, 16, 7                         # X: (B, N, 7 atoms, 3) -> node_d = 21
    X = jax.random.normal(kx, (B, N, A, 3), jnp.float32) * 2.0
    S = jax.random.randint(ks, (B, N), 0, 4, jnp.int32)
    mask = jnp.ones((B, N), jnp.float32).at[1, -2:].set(0.0)   # a couple of masked positions

    model = RNAFeaturesPallas(
        edge_features=128, node_features=128,
        node_feat_types=['node_d', 'angle', 'distance', 'direction'],
        edge_feat_types=['orientation', 'distance', 'direction'],
        num_rbf=16, top_k=30, key=kp)

    X_out, S_out, h_V, h_E, E_idx, batch_id = model.forward(X, S, mask)
    jax.block_until_ready((X_out, S_out, h_V, h_E, E_idx, batch_id))

    Nn = int(np.asarray(mask).sum())
    assert h_V.shape == (Nn, 128) and h_E.shape[1] == 128 and E_idx.shape[0] == 2
    assert X_out.shape == (Nn, A, 3) and S_out.shape == (Nn,) and batch_id.shape == (Nn,)
    assert np.all(np.isfinite(np.asarray(h_V))) and np.all(np.isfinite(np.asarray(h_E)))
    print("KERNEL_OK")
</pallas_src>

<mosaic_0001>
module attributes {stable_mosaic.version = 11 : i64} {
  func.func @_dist_score_kernel(%arg0: i32, %arg1: i32, %arg2: memref<1x16x3xf32, #tpu.memory_space<vmem>>, %arg3: memref<1x3x16xf32, #tpu.memory_space<vmem>>, %arg4: memref<1x1x16xf32, #tpu.memory_space<vmem>>, %arg5: memref<1x16x1xf32, #tpu.memory_space<vmem>>, %arg6: memref<1x1x16xf32, #tpu.memory_space<vmem>>, %arg7: memref<1x16x16xbf16, #tpu.memory_space<vmem>>) attributes {dimension_semantics = [#tpu.dimension_semantics<parallel>, #tpu.dimension_semantics<parallel>], iteration_bounds = array<i64: 2, 1>, scalar_prefetch = 0 : i64, scratch_operands = 0 : i64, tpu.core_type = #tpu.core_type<tc>, window_params = [{transform_indices = @transform_0, window_bounds = array<i64: 1, 16, 3>}, {transform_indices = @transform_1, window_bounds = array<i64: 1, 3, 16>}, {transform_indices = @transform_2, window_bounds = array<i64: 1, 1, 16>}, {transform_indices = @transform_3, window_bounds = array<i64: 1, 16, 1>}, {transform_indices = @transform_4, window_bounds = array<i64: 1, 1, 16>}, {transform_indices = @transform_5, window_bounds = array<i64: 1, 16, 16>}]} {
    %c0 = arith.constant 0 : index
    %c0_0 = arith.constant 0 : index
    %c0_1 = arith.constant 0 : index
    %0 = vector.load %arg2[%c0, %c0_0, %c0_1] : memref<1x16x3xf32, #tpu.memory_space<vmem>>, vector<1x16x3xf32>
    %1 = vector.shape_cast %0 : vector<1x16x3xf32> to vector<16x3xf32>
    %c0_2 = arith.constant 0 : index
    %c0_3 = arith.constant 0 : index
    %c0_4 = arith.constant 0 : index
    %2 = vector.load %arg3[%c0_2, %c0_3, %c0_4] : memref<1x3x16xf32, #tpu.memory_space<vmem>>, vector<1x3x16xf32>
    %3 = vector.shape_cast %2 : vector<1x3x16xf32> to vector<3x16xf32>
    %c0_5 = arith.constant 0 : index
    %c0_6 = arith.constant 0 : index
    %c0_7 = arith.constant 0 : index
    %4 = vector.load %arg4[%c0_5, %c0_6, %c0_7] : memref<1x1x16xf32, #tpu.memory_space<vmem>>, vector<1x1x16xf32>
    %5 = vector.shape_cast %4 : vector<1x1x16xf32> to vector<1x16xf32>
    %c0_8 = arith.constant 0 : index
    %c0_9 = arith.constant 0 : index
    %c0_10 = arith.constant 0 : index
    %6 = vector.load %arg5[%c0_8, %c0_9, %c0_10] : memref<1x16x1xf32, #tpu.memory_space<vmem>>, vector<1x16x1xf32>
    %7 = vector.shape_cast %6 : vector<1x16x1xf32> to vector<16x1xf32>
    %cst = arith.constant 5.000000e-01 : f32
    %8 = vector.broadcast %cst : f32 to vector<16x1xf32>
    %9 = arith.cmpf ogt, %7, %8 : vector<16x1xf32>
    %c0_11 = arith.constant 0 : index
    %c0_12 = arith.constant 0 : index
    %c0_13 = arith.constant 0 : index
    %10 = vector.load %arg6[%c0_11, %c0_12, %c0_13] : memref<1x1x16xf32, #tpu.memory_space<vmem>>, vector<1x1x16xf32>
    %11 = vector.shape_cast %10 : vector<1x1x16xf32> to vector<1x16xf32>
    %cst_14 = arith.constant 5.000000e-01 : f32
    %12 = vector.broadcast %cst_14 : f32 to vector<1x16xf32>
    %13 = arith.cmpf ogt, %11, %12 : vector<1x16xf32>
    %14 = arith.mulf %1, %1 : vector<16x3xf32>
    %cst_15 = arith.constant dense<0.000000e+00> : vector<16xf32>
    %15 = vector.multi_reduction <add>, %14, %cst_15 [1] : vector<16x3xf32> to vector<16xf32>
    %16 = vector.shape_cast %15 : vector<16xf32> to vector<16x1xf32>
    %cst_16 = arith.constant dense<0.000000e+00> : vector<16x16xf32>
    %17 = tpu.matmul %1, %3, %cst_16 {dimension_numbers = #tpu.dot_dimension_numbers<[1], [0], [0], [1], [0, 0, 1, 1], [], []>} : vector<16x3xf32>, vector<3x16xf32>, vector<16x16xf32> -> vector<16x16xf32>
    %18 = vector.broadcast %16 : vector<16x1xf32> to vector<16x16xf32>
    %19 = vector.broadcast %5 : vector<1x16xf32> to vector<16x16xf32>
    %20 = arith.addf %18, %19 : vector<16x16xf32>
    %cst_17 = arith.constant 2.000000e+00 : f32
    %21 = vector.broadcast %cst_17 : f32 to vector<16x16xf32>
    %22 = arith.mulf %21, %17 : vector<16x16xf32>
    %23 = arith.subf %20, %22 : vector<16x16xf32>
    %cst_18 = arith.constant 0.000000e+00 : f32
    %24 = vector.broadcast %cst_18 : f32 to vector<16x16xf32>
    %25 = arith.maximumf %23, %24 : vector<16x16xf32>
    %26 = vector.broadcast %9 : vector<16x1xi1> to vector<16x16xi1>
    %27 = vector.broadcast %13 : vector<1x16xi1> to vector<16x16xi1>
    %28 = arith.andi %26, %27 : vector<16x16xi1>
    %cst_19 = arith.constant 9.99999997E-7 : f32
    %29 = vector.broadcast %cst_19 : f32 to vector<16x16xf32>
    %30 = arith.addf %25, %29 : vector<16x16xf32>
    %31 = math.sqrt %30 : vector<16x16xf32>
    %cst_20 = arith.constant 1.000000e+04 : f32
    %32 = vector.broadcast %cst_20 : f32 to vector<16x16xf32>
    %33 = arith.select %28, %31, %32 : vector<16x16xi1>, vector<16x16xf32>
    %cst_21 = arith.constant dense<0xFF800000> : vector<16xf32>
    %34 = vector.multi_reduction <maximumf>, %33, %cst_21 [1] : vector<16x16xf32> to vector<16xf32>
    %35 = vector.shape_cast %34 : vector<16xf32> to vector<16x1xf32>
    %36 = vector.broadcast %35 : vector<16x1xf32> to vector<16x16xf32>
    %37 = arith.addf %33, %36 : vector<16x16xf32>
    %cst_22 = arith.constant 1.000000e+00 : f32
    %38 = vector.broadcast %cst_22 : f32 to vector<16x16xf32>
    %39 = arith.addf %37, %38 : vector<16x16xf32>
    %40 = arith.select %28, %33, %39 : vector<16x16xi1>, vector<16x16xf32>
    %cst_23 = arith.constant 0.000000e+00 : f32
    %41 = vector.broadcast %cst_23 : f32 to vector<16x16xf32>
    %42 = arith.subf %41, %40 : vector<16x16xf32>
    %43 = arith.truncf %42 : vector<16x16xf32> to vector<16x16xbf16>
    %c0_24 = arith.constant 0 : index
    %c0_25 = arith.constant 0 : index
    %c0_26 = arith.constant 0 : index
    %44 = vector.load %arg7[%c0_24, %c0_25, %c0_26] : memref<1x16x16xbf16, #tpu.memory_space<vmem>>, vector<1x16x16xbf16>
    %45 = vector.shape_cast %44 : vector<1x16x16xbf16> to vector<16x16xbf16>
    %46 = vector.shape_cast %43 : vector<16x16xbf16> to vector<1x16x16xbf16>
    tpu.vector_store %arg7[%c0_24, %c0_25, %c0_26], %46 {strides = array<i32>} : memref<1x16x16xbf16, #tpu.memory_space<vmem>>, vector<1x16x16xbf16>,
    return
  }
  func.func @transform_0(%arg0: i32, %arg1: i32) -> (i32, i32, i32) {
    %c0_i32 = arith.constant 0 : i32
    %c0_i32_0 = arith.constant 0 : i32
    return %arg0, %arg1, %c0_i32 : i32, i32, i32
  }
  func.func @transform_1(%arg0: i32, %arg1: i32) -> (i32, i32, i32) {
    %c0_i32 = arith.constant 0 : i32
    %c0_i32_0 = arith.constant 0 : i32
    %c0_i32_1 = arith.constant 0 : i32
    return %arg0, %c0_i32, %c0_i32_0 : i32, i32, i32
  }
  func.func @transform_2(%arg0: i32, %arg1: i32) -> (i32, i32, i32) {
    %c0_i32 = arith.constant 0 : i32
    %c0_i32_0 = arith.constant 0 : i32
    %c0_i32_1 = arith.constant 0 : i32
    return %arg0, %c0_i32, %c0_i32_0 : i32, i32, i32
  }
  func.func @transform_3(%arg0: i32, %arg1: i32) -> (i32, i32, i32) {
    %c0_i32 = arith.constant 0 : i32
    %c0_i32_0 = arith.constant 0 : i32
    return %arg0, %arg1, %c0_i32 : i32, i32, i32
  }
  func.func @transform_4(%arg0: i32, %arg1: i32) -> (i32, i32, i32) {
    %c0_i32 = arith.constant 0 : i32
    %c0_i32_0 = arith.constant 0 : i32
    %c0_i32_1 = arith.constant 0 : i32
    return %arg0, %c0_i32, %c0_i32_0 : i32, i32, i32
  }
  func.func @transform_5(%arg0: i32, %arg1: i32) -> (i32, i32, i32) {
    %c0_i32 = arith.constant 0 : i32
    %c0_i32_0 = arith.constant 0 : i32
    return %arg0, %arg1, %c0_i32 : i32, i32, i32
  }
}

module attributes {stable_mosaic.version = 11 : i64} {
  func.func @_linear_norm_kernel(%arg0: i32, %arg1: memref<32x122xbf16, #tpu.memory_space<vmem>>, %arg2: memref<122x128xbf16, #tpu.memory_space<vmem>>, %arg3: memref<1x128xf32, #tpu.memory_space<vmem>>, %arg4: memref<1x128xf32, #tpu.memory_space<vmem>>, %arg5: memref<1x128xf32, #tpu.memory_space<vmem>>, %arg6: memref<32x128xf32, #tpu.memory_space<vmem>>) attributes {dimension_semantics = [#tpu.dimension_semantics<parallel>], iteration_bounds = array<i64: 1>, scalar_prefetch = 0 : i64, scratch_operands = 0 : i64, tpu.core_type = #tpu.core_type<tc>, window_params = [{transform_indices = @transform_0, window_bounds = array<i64: 32, 122>}, {pipeline_mode = #tpu.pipeline_mode<synchronous>, transform_indices = @transform_1, window_bounds = array<i64: 122, 128>}, {pipeline_mode = #tpu.pipeline_mode<synchronous>, transform_indices = @transform_2, window_bounds = array<i64: 1, 128>}, {pipeline_mode = #tpu.pipeline_mode<synchronous>, transform_indices = @transform_3, window_bounds = array<i64: 1, 128>}, {pipeline_mode = #tpu.pipeline_mode<synchronous>, transform_indices = @transform_4, window_bounds = array<i64: 1, 128>}, {transform_indices = @transform_5, window_bounds = array<i64: 32, 128>}]} {
    %c0 = arith.constant 0 : index
    %c0_0 = arith.constant 0 : index
    %0 = vector.load %arg1[%c0, %c0_0] : memref<32x122xbf16, #tpu.memory_space<vmem>>, vector<32x122xbf16>
    %c0_1 = arith.constant 0 : index
    %c0_2 = arith.constant 0 : index
    %1 = vector.load %arg2[%c0_1, %c0_2] : memref<122x128xbf16, #tpu.memory_space<vmem>>, vector<122x128xbf16>
    %cst = arith.constant dense<0.000000e+00> : vector<32x128xf32>
    %2 = tpu.matmul %0, %1, %cst {dimension_numbers = #tpu.dot_dimension_numbers<[1], [0], [0], [1], [0, 0, 1, 1], [], []>} : vector<32x122xbf16>, vector<122x128xbf16>, vector<32x128xf32> -> vector<32x128xf32>
    %c0_3 = arith.constant 0 : index
    %c0_4 = arith.constant 0 : index
    %3 = vector.load %arg3[%c0_3, %c0_4] : memref<1x128xf32, #tpu.memory_space<vmem>>, vector<1x128xf32>
    %4 = vector.broadcast %3 : vector<1x128xf32> to vector<32x128xf32>
    %5 = arith.addf %2, %4 : vector<32x128xf32>
    %cst_5 = arith.constant dense<0.000000e+00> : vector<32xf32>
    %6 = vector.multi_reduction <add>, %5, %cst_5 [1] : vector<32x128xf32> to vector<32xf32>
    %7 = vector.shape_cast %6 : vector<32xf32> to vector<32x1xf32>
    %cst_6 = arith.constant 1.280000e+02 : f32
    %8 = vector.broadcast %cst_6 : f32 to vector<32x1xf32>
    %9 = arith.divf %7, %8 : vector<32x1xf32>
    %10 = vector.broadcast %9 : vector<32x1xf32> to vector<32x128xf32>
    %11 = arith.subf %5, %10 : vector<32x128xf32>
    %12 = arith.mulf %11, %11 : vector<32x128xf32>
    %cst_7 = arith.constant dense<0.000000e+00> : vector<32xf32>
    %13 = vector.multi_reduction <add>, %12, %cst_7 [1] : vector<32x128xf32> to vector<32xf32>
    %14 = vector.shape_cast %13 : vector<32xf32> to vector<32x1xf32>
    %cst_8 = arith.constant 0.00787401571 : f32
    %15 = vector.broadcast %cst_8 : f32 to vector<32x1xf32>
    %16 = arith.mulf %14, %15 : vector<32x1xf32>
    %cst_9 = arith.constant 9.99999997E-7 : f32
    %17 = vector.broadcast %cst_9 : f32 to vector<32x1xf32>
    %18 = arith.addf %16, %17 : vector<32x1xf32>
    %19 = math.sqrt %18 : vector<32x1xf32>
    %cst_10 = arith.constant 9.99999997E-7 : f32
    %20 = vector.broadcast %cst_10 : f32 to vector<32x1xf32>
    %21 = arith.addf %19, %20 : vector<32x1xf32>
    %22 = tpu.reciprocal %21 {approx = true} : vector<32x1xf32> -> vector<32x1xf32>
    %c0_11 = arith.constant 0 : index
    %c0_12 = arith.constant 0 : index
    %23 = vector.load %arg4[%c0_11, %c0_12] : memref<1x128xf32, #tpu.memory_space<vmem>>, vector<1x128xf32>
    %24 = vector.broadcast %23 : vector<1x128xf32> to vector<32x128xf32>
    %25 = arith.mulf %24, %11 : vector<32x128xf32>
    %26 = vector.broadcast %22 : vector<32x1xf32> to vector<32x128xf32>
    %27 = arith.mulf %25, %26 : vector<32x128xf32>
    %c0_13 = arith.constant 0 : index
    %c0_14 = arith.constant 0 : index
    %28 = vector.load %arg5[%c0_13, %c0_14] : memref<1x128xf32, #tpu.memory_space<vmem>>, vector<1x128xf32>
    %29 = vector.broadcast %28 : vector<1x128xf32> to vector<32x128xf32>
    %30 = arith.addf %27, %29 : vector<32x128xf32>
    %c0_15 = arith.constant 0 : index
    %c0_16 = arith.constant 0 : index
    %31 = vector.load %arg6[%c0_15, %c0_16] : memref<32x128xf32, #tpu.memory_space<vmem>>, vector<32x128xf32>
    tpu.vector_store %arg6[%c0_15, %c0_16], %30 {strides = array<i32>} : memref<32x128xf32, #tpu.memory_space<vmem>>, vector<32x128xf32>,
    return
  }
  func.func @transform_0(%arg0: i32) -> (i32, i32) {
    %c0_i32 = arith.constant 0 : i32
    %c0_i32_0 = arith.constant 0 : i32
    return %arg0, %c0_i32 : i32, i32
  }
  func.func @transform_1(%arg0: i32) -> (i32, i32) {
    %c0_i32 = arith.constant 0 : i32
    %c0_i32_0 = arith.constant 0 : i32
    %c0_i32_1 = arith.constant 0 : i32
    return %c0_i32, %c0_i32_0 : i32, i32
  }
  func.func @transform_2(%arg0: i32) -> (i32, i32) {
    %c0_i32 = arith.constant 0 : i32
    %c0_i32_0 = arith.constant 0 : i32
    %c0_i32_1 = arith.constant 0 : i32
    return %c0_i32, %c0_i32_0 : i32, i32
  }
  func.func @transform_3(%arg0: i32) -> (i32, i32) {
    %c0_i32 = arith.constant 0 : i32
    %c0_i32_0 = arith.constant 0 : i32
    %c0_i32_1 = arith.constant 0 : i32
    return %c0_i32, %c0_i32_0 : i32, i32
  }
  func.func @transform_4(%arg0: i32) -> (i32, i32) {
    %c0_i32 = arith.constant 0 : i32
    %c0_i32_0 = arith.constant 0 : i32
    %c0_i32_1 = arith.constant 0 : i32
    return %c0_i32, %c0_i32_0 : i32, i32
  }
  func.func @transform_5(%arg0: i32) -> (i32, i32) {
    %c0_i32 = arith.constant 0 : i32
    %c0_i32_0 = arith.constant 0 : i32
    return %arg0, %c0_i32 : i32, i32
  }
}

module attributes {stable_mosaic.version = 11 : i64} {
  func.func @_linear_norm_kernel(%arg0: i32, %arg1: memref<512x115xbf16, #tpu.memory_space<vmem>>, %arg2: memref<115x128xbf16, #tpu.memory_space<vmem>>, %arg3: memref<1x128xf32, #tpu.memory_space<vmem>>, %arg4: memref<1x128xf32, #tpu.memory_space<vmem>>, %arg5: memref<1x128xf32, #tpu.memory_space<vmem>>, %arg6: memref<512x128xf32, #tpu.memory_space<vmem>>) attributes {dimension_semantics = [#tpu.dimension_semantics<parallel>], iteration_bounds = array<i64: 1>, scalar_prefetch = 0 : i64, scratch_operands = 0 : i64, tpu.core_type = #tpu.core_type<tc>, window_params = [{transform_indices = @transform_0, window_bounds = array<i64: 512, 115>}, {pipeline_mode = #tpu.pipeline_mode<synchronous>, transform_indices = @transform_1, window_bounds = array<i64: 115, 128>}, {pipeline_mode = #tpu.pipeline_mode<synchronous>, transform_indices = @transform_2, window_bounds = array<i64: 1, 128>}, {pipeline_mode = #tpu.pipeline_mode<synchronous>, transform_indices = @transform_3, window_bounds = array<i64: 1, 128>}, {pipeline_mode = #tpu.pipeline_mode<synchronous>, transform_indices = @transform_4, window_bounds = array<i64: 1, 128>}, {transform_indices = @transform_5, window_bounds = array<i64: 512, 128>}]} {
    %c0 = arith.constant 0 : index
    %c0_0 = arith.constant 0 : index
    %0 = vector.load %arg1[%c0, %c0_0] : memref<512x115xbf16, #tpu.memory_space<vmem>>, vector<512x115xbf16>
    %c0_1 = arith.constant 0 : index
    %c0_2 = arith.constant 0 : index
    %1 = vector.load %arg2[%c0_1, %c0_2] : memref<115x128xbf16, #tpu.memory_space<vmem>>, vector<115x128xbf16>
    %cst = arith.constant dense<0.000000e+00> : vector<512x128xf32>
    %2 = tpu.matmul %0, %1, %cst {dimension_numbers = #tpu.dot_dimension_numbers<[1], [0], [0], [1], [0, 0, 1, 1], [], []>} : vector<512x115xbf16>, vector<115x128xbf16>, vector<512x128xf32> -> vector<512x128xf32>
    %c0_3 = arith.constant 0 : index
    %c0_4 = arith.constant 0 : index
    %3 = vector.load %arg3[%c0_3, %c0_4] : memref<1x128xf32, #tpu.memory_space<vmem>>, vector<1x128xf32>
    %4 = vector.broadcast %3 : vector<1x128xf32> to vector<512x128xf32>
    %5 = arith.addf %2, %4 : vector<512x128xf32>
    %cst_5 = arith.constant dense<0.000000e+00> : vector<512xf32>
    %6 = vector.multi_reduction <add>, %5, %cst_5 [1] : vector<512x128xf32> to vector<512xf32>
    %7 = vector.shape_cast %6 : vector<512xf32> to vector<512x1xf32>
    %cst_6 = arith.constant 1.280000e+02 : f32
    %8 = vector.broadcast %cst_6 : f32 to vector<512x1xf32>
    %9 = arith.divf %7, %8 : vector<512x1xf32>
    %10 = vector.broadcast %9 : vector<512x1xf32> to vector<512x128xf32>
    %11 = arith.subf %5, %10 : vector<512x128xf32>
    %12 = arith.mulf %11, %11 : vector<512x128xf32>
    %cst_7 = arith.constant dense<0.000000e+00> : vector<512xf32>
    %13 = vector.multi_reduction <add>, %12, %cst_7 [1] : vector<512x128xf32> to vector<512xf32>
    %14 = vector.shape_cast %13 : vector<512xf32> to vector<512x1xf32>
    %cst_8 = arith.constant 0.00787401571 : f32
    %15 = vector.broadcast %cst_8 : f32 to vector<512x1xf32>
    %16 = arith.mulf %14, %15 : vector<512x1xf32>
    %cst_9 = arith.constant 9.99999997E-7 : f32
    %17 = vector.broadcast %cst_9 : f32 to vector<512x1xf32>
    %18 = arith.addf %16, %17 : vector<512x1xf32>
    %19 = math.sqrt %18 : vector<512x1xf32>
    %cst_10 = arith.constant 9.99999997E-7 : f32
    %20 = vector.broadcast %cst_10 : f32 to vector<512x1xf32>
    %21 = arith.addf %19, %20 : vector<512x1xf32>
    %22 = tpu.reciprocal %21 {approx = true} : vector<512x1xf32> -> vector<512x1xf32>
    %c0_11 = arith.constant 0 : index
    %c0_12 = arith.constant 0 : index
    %23 = vector.load %arg4[%c0_11, %c0_12] : memref<1x128xf32, #tpu.memory_space<vmem>>, vector<1x128xf32>
    %24 = vector.broadcast %23 : vector<1x128xf32> to vector<512x128xf32>
    %25 = arith.mulf %24, %11 : vector<512x128xf32>
    %26 = vector.broadcast %22 : vector<512x1xf32> to vector<512x128xf32>
    %27 = arith.mulf %25, %26 : vector<512x128xf32>
    %c0_13 = arith.constant 0 : index
    %c0_14 = arith.constant 0 : index
    %28 = vector.load %arg5[%c0_13, %c0_14] : memref<1x128xf32, #tpu.memory_space<vmem>>, vector<1x128xf32>
    %29 = vector.broadcast %28 : vector<1x128xf32> to vector<512x128xf32>
    %30 = arith.addf %27, %29 : vector<512x128xf32>
    %c0_15 = arith.constant 0 : index
    %c0_16 = arith.constant 0 : index
    %31 = vector.load %arg6[%c0_15, %c0_16] : memref<512x128xf32, #tpu.memory_space<vmem>>, vector<512x128xf32>
    tpu.vector_store %arg6[%c0_15, %c0_16], %30 {strides = array<i32>} : memref<512x128xf32, #tpu.memory_space<vmem>>, vector<512x128xf32>,
    return
  }
  func.func @transform_0(%arg0: i32) -> (i32, i32) {
    %c0_i32 = arith.constant 0 : i32
    %c0_i32_0 = arith.constant 0 : i32
    return %arg0, %c0_i32 : i32, i32
  }
  func.func @transform_1(%arg0: i32) -> (i32, i32) {
    %c0_i32 = arith.constant 0 : i32
    %c0_i32_0 = arith.constant 0 : i32
    %c0_i32_1 = arith.constant 0 : i32
    return %c0_i32, %c0_i32_0 : i32, i32
  }
  func.func @transform_2(%arg0: i32) -> (i32, i32) {
    %c0_i32 = arith.constant 0 : i32
    %c0_i32_0 = arith.constant 0 : i32
    %c0_i32_1 = arith.constant 0 : i32
    return %c0_i32, %c0_i32_0 : i32, i32
  }
  func.func @transform_3(%arg0: i32) -> (i32, i32) {
    %c0_i32 = arith.constant 0 : i32
    %c0_i32_0 = arith.constant 0 : i32
    %c0_i32_1 = arith.constant 0 : i32
    return %c0_i32, %c0_i32_0 : i32, i32
  }
  func.func @transform_4(%arg0: i32) -> (i32, i32) {
    %c0_i32 = arith.constant 0 : i32
    %c0_i32_0 = arith.constant 0 : i32
    %c0_i32_1 = arith.constant 0 : i32
    return %c0_i32, %c0_i32_0 : i32, i32
  }
  func.func @transform_5(%arg0: i32) -> (i32, i32) {
    %c0_i32 = arith.constant 0 : i32
    %c0_i32_0 = arith.constant 0 : i32
    return %arg0, %c0_i32 : i32, i32
  }
}

</mosaic_0001>

<llo_original>
// kernel: _device_forward.3
$region0: #{_device_forward.3}
  #allocation0 [shape = 'u32[]', space=smem, size = 0x4, offset = 0x4, fixed_abs, tag = 'smem constant byte address 0x4 - core index']
  #allocation1 [shape = 'u32[144,128]{1,0:T(1,128)}', space=vmem, size = 0x12000, scoped, tag = 'internal scratch']
  %s0 = inlined_call_operand.vmem [shape: f32[2,16,3], index: 0, kind: input, shape index: {}]
  %s1 = inlined_call_operand.vmem [shape: f32[2,3,16], index: 1, kind: input, shape index: {}]
  %s2 = inlined_call_operand.vmem [shape: f32[2,1,16], index: 2, kind: input, shape index: {}]
  %s3 = inlined_call_operand.vmem [shape: f32[2,16,1], index: 3, kind: input, shape index: {}]
  %s4 = inlined_call_operand.hbm [shape: f32[2,1,16], index: 4, kind: input, shape index: {}]
  %s5 = inlined_call_operand.vmem [shape: bf16[2,16,16], index: 5, kind: output, shape index: {}]
  %s6 = sld [smem:[#allocation0]]
  $region57: #{_device_forward.3} parent=0
    _
  %s8 = ssub.s32 1, %s6
  %s9 = scalar_select 0, %s8, %s6
  $region1: #{_device_forward.3} parent=0
    #allocation2 [shape = 'u8[1024]{0}', space=vmem, size = 0x400, scoped, tag = 'input window, operand 4']
    #allocation3 [shape = 's32[2]{0}', space=sflag, size = 0x8, scoped, tag = 'scoped memory for _device_forward.3']
    %10 = vsyncpa [#allocation3], 0
    %s11 = scalar_lea.sflag [#allocation3], 1
    %12 = vsyncpa %s11, 0
    loop: start=0, step=1, limit=4
    $region2: #{_device_forward.3} parent=1 // loop_pre_header
      _
    $region3: #{_device_forward.3} parent=1 // loop_header
      %s14 = sphi 0, %s18
      %p15 = scmp.ge.s32.totalorder %s14, 4
      %s21 = sphi 0, %s33
      %s22 = sphi 0, %s29
      %s23 = sphi 0, %s21
      %s24 = sphi 0, %s22
      %s25 = sphi 0, %s23
      %s26 = sphi 0, %s24
      %s38 = sphi 0, %s40
      %s41 = sphi 0, %s38
      %s42 = sphi 0, %s41
      %s58 = sphi 0, %s42
      %s64 = sphi 0, %s66
      %s67 = sphi 0, %s64
      %s68 = sphi 0, %s67
      %s84 = sphi 0, %s68
      %s90 = sphi 0, %s92
      %s93 = sphi 0, %s90
      %s94 = sphi 0, %s93
      %s110 = sphi 0, %s94
      %s118 = sphi 0, %s120
      %s121 = sphi 0, %s118
      %s122 = sphi 0, %s121
      %s138 = sphi 0, %s122
      %s144 = sphi 0, %s146
      %s147 = sphi 0, %s144
      %s148 = sphi 0, %s147
      %s164 = sphi 0, %s148
      %s172 = sphi 0, %s174
      %s175 = sphi 0, %s172
      %s176 = sphi 0, %s175
      %s192 = sphi 0, %s176
    $region4: #{_device_forward.3} parent=1 // loop_header_branch
      %17 = sbr.rel (%p15) target = $region8
    $region5: #{_device_forward.3} parent=1 // loop_body
      %s19 = ssub.s32 %s14, 1
      %s20 = ssub.s32 %s14, 2
      %s27 = sadd.s32 1, %s22
      %p28 = scmp.ge.s32.totalorder %s27, 1
      %s29 = scalar_select %p28, 0, %s27
      %s30 = sadd.s32 1, %s21
      %s31 = scalar_select %p28, %s30, %s21
      %p32 = scmp.ge.s32.totalorder %s31, 2
      %s33 = scalar_select %p32, 0, %s31
      %s34 = ssub.s32 %s21, %s33
      %s35 = ssub.s32 %s22, %s29
      %s36 = sor.u32 %s34, %s35
      %p37 = scmp.eq.s32.totalorder %s36, 0
      %s39 = sadd.s32 %s38, 1
      %s40 = scalar_select %p37, %s38, %s39
      %p43 = pneg %p37
      %p44 = scmp.eq.s32.totalorder %s14, 1
      %p45 = por %p43, %p44
      %p46 = scmp.ne.s32.totalorder %s38, %s41
      %p47 = scmp.eq.s32.totalorder %s14, 0
      %p48 = por %p46, %p47
      %p49 = scmp.ne.s32.totalorder %s38, %s41
      %p50 = scmp.eq.s32.totalorder %s19, 1
      %p51 = por %p49, %p50
      %p52 = scmp.ne.s32.totalorder %s41, %s42
      %p53 = scmp.eq.s32.totalorder %s19, 0
      %p54 = por %p52, %p53
      %p55 = scmp.ne.s32.totalorder %s41, %s42
      %p56 = scmp.eq.s32.totalorder %s20, 1
      %p57 = por %p55, %p56
      %p59 = scmp.ne.s32.totalorder %s42, %s58
      %p60 = scmp.eq.s32.totalorder %s20, 0
      %p61 = por %p59, %p60
      %s62 = ssub.s32 %s21, %s33
      %p63 = scmp.eq.s32.totalorder %s62, 0
      %s65 = sadd.s32 %s64, 1
      %s66 = scalar_select %p63, %s64, %s65
      %p69 = pneg %p63
      %p70 = scmp.eq.s32.totalorder %s14, 1
      %p71 = por %p69, %p70
      %p72 = scmp.ne.s32.totalorder %s64, %s67
      %p73 = scmp.eq.s32.totalorder %s14, 0
      %p74 = por %p72, %p73
      %p75 = scmp.ne.s32.totalorder %s64, %s67
      %p76 = scmp.eq.s32.totalorder %s19, 1
      %p77 = por %p75, %p76
      %p78 = scmp.ne.s32.totalorder %s67, %s68
      %p79 = scmp.eq.s32.totalorder %s19, 0
      %p80 = por %p78, %p79
      %p81 = scmp.ne.s32.totalorder %s67, %s68
      %p82 = scmp.eq.s32.totalorder %s20, 1
      %p83 = por %p81, %p82
      %p85 = scmp.ne.s32.totalorder %s68, %s84
      %p86 = scmp.eq.s32.totalorder %s20, 0
      %p87 = por %p85, %p86
      %s88 = ssub.s32 %s21, %s33
      %p89 = scmp.eq.s32.totalorder %s88, 0
      %s91 = sadd.s32 %s90, 1
      %s92 = scalar_select %p89, %s90, %s91
      %p95 = pneg %p89
      %p96 = scmp.eq.s32.totalorder %s14, 1
      %p97 = por %p95, %p96
      %p98 = scmp.ne.s32.totalorder %s90, %s93
      %p99 = scmp.eq.s32.totalorder %s14, 0
      %p100 = por %p98, %p99
      %p101 = scmp.ne.s32.totalorder %s90, %s93
      %p102 = scmp.eq.s32.totalorder %s19, 1
      %p103 = por %p101, %p102
      %p104 = scmp.ne.s32.totalorder %s93, %s94
      %p105 = scmp.eq.s32.totalorder %s19, 0
      %p106 = por %p104, %p105
      %p107 = scmp.ne.s32.totalorder %s93, %s94
      %p108 = scmp.eq.s32.totalorder %s20, 1
      %p109 = por %p107, %p108
      %p111 = scmp.ne.s32.totalorder %s94, %s110
      %p112 = scmp.eq.s32.totalorder %s20, 0
      %p113 = por %p111, %p112
      %s114 = ssub.s32 %s21, %s33
      %s115 = ssub.s32 %s22, %s29
      %s116 = sor.u32 %s114, %s115
      %p117 = scmp.eq.s32.totalorder %s116, 0
      %s119 = sadd.s32 %s118, 1
      %s120 = scalar_select %p117, %s118, %s119
      %p123 = pneg %p117
      %p124 = scmp.eq.s32.totalorder %s14, 1
      %p125 = por %p123, %p124
      %p126 = scmp.ne.s32.totalorder %s118, %s121
      %p127 = scmp.eq.s32.totalorder %s14, 0
      %p128 = por %p126, %p127
      %p129 = scmp.ne.s32.totalorder %s118, %s121
      %p130 = scmp.eq.s32.totalorder %s19, 1
      %p131 = por %p129, %p130
      %p132 = scmp.ne.s32.totalorder %s121, %s122
      %p133 = scmp.eq.s32.totalorder %s19, 0
      %p134 = por %p132, %p133
      %p135 = scmp.ne.s32.totalorder %s121, %s122
      %p136 = scmp.eq.s32.totalorder %s20, 1
      %p137 = por %p135, %p136
      %p139 = scmp.ne.s32.totalorder %s122, %s138
      %p140 = scmp.eq.s32.totalorder %s20, 0
      %p141 = por %p139, %p140
      %s142 = ssub.s32 %s21, %s33
      %p143 = scmp.eq.s32.totalorder %s142, 0
      %s145 = sadd.s32 %s144, 1
      %s146 = scalar_select %p143, %s144, %s145
      %p149 = pneg %p143
      %p150 = scmp.eq.s32.totalorder %s14, 1
      %p151 = por %p149, %p150
      %p152 = scmp.ne.s32.totalorder %s144, %s147
      %p153 = scmp.eq.s32.totalorder %s14, 0
      %p154 = por %p152, %p153
      %p155 = scmp.ne.s32.totalorder %s144, %s147
      %p156 = scmp.eq.s32.totalorder %s19, 1
      %p157 = por %p155, %p156
      %p158 = scmp.ne.s32.totalorder %s147, %s148
      %p159 = scmp.eq.s32.totalorder %s19, 0
      %p160 = por %p158, %p159
      %p161 = scmp.ne.s32.totalorder %s147, %s148
      %p162 = scmp.eq.s32.totalorder %s20, 1
      %p163 = por %p161, %p162
      %p165 = scmp.ne.s32.totalorder %s148, %s164
      %p166 = scmp.eq.s32.totalorder %s20, 0
      %p167 = por %p165, %p166
      %s168 = ssub.s32 %s21, %s33
      %s169 = ssub.s32 %s22, %s29
      %s170 = sor.u32 %s168, %s169
      %p171 = scmp.eq.s32.totalorder %s170, 0
      %s173 = sadd.s32 %s172, 1
      %s174 = scalar_select %p171, %s172, %s173
      %p177 = pneg %p171
      %p178 = scmp.eq.s32.totalorder %s14, 1
      %p179 = por %p177, %p178
      %p180 = scmp.ne.s32.totalorder %s172, %s175
      %p181 = scmp.eq.s32.totalorder %s14, 0
      %p182 = por %p180, %p181
      %p183 = scmp.ne.s32.totalorder %s172, %s175
      %p184 = scmp.eq.s32.totalorder %s19, 1
      %p185 = por %p183, %p184
      %p186 = scmp.ne.s32.totalorder %s175, %s176
      %p187 = scmp.eq.s32.totalorder %s19, 0
      %p188 = por %p186, %p187
      %p189 = scmp.ne.s32.totalorder %s175, %s176
      %p190 = scmp.eq.s32.totalorder %s20, 1
      %p191 = por %p189, %p190
      %p193 = scmp.ne.s32.totalorder %s176, %s192
      %p194 = scmp.eq.s32.totalorder %s20, 0
      %p195 = por %p193, %p194
      %p196 = scmp.le.s32.totalorder 1, %s14
      %p197 = scmp.lt.s32.totalorder %s14, 3
      %p198 = pnand %p196, %p197
      %p199 = pneg %p198
      // Predicated region
      $region9: #{_device_forward.3} parent=5 // pred_check
        _
      $region10: #{_device_forward.3} parent=5 // pred_check_branch
        %201 = sbr.rel (%p198) target = $region12
      $region11: #{_device_forward.3} parent=5 // pred_region
        %s202 = ssub.s32 %s14, 1
      $region12: #{_device_forward.3} parent=5 // pred_fallthru
        _
      %p203 = scmp.lt.s32.totalorder %s14, 2
      // Predicated region
      $region13: #{_device_forward.3} parent=5 // pred_check
        %p204 = pneg %p203
      $region14: #{_device_forward.3} parent=5 // pred_check_branch
        %206 = sbr.rel (%p204) target = $region16
      $region15: #{_device_forward.3} parent=5 // pred_region
        // Predicated region
        $region17: #{_device_forward.3} parent=15 // pred_check
          %p207 = pneg %p48
        $region18: #{_device_forward.3} parent=15 // pred_check_branch
          %209 = sbr.rel (%p207) target = $region20
        $region19: #{_device_forward.3} parent=15 // pred_region
          %s210 = smul.u32 2, %s22
          %p211 = scmp.lt.s32.totalorder %s21, 1
          %s212 = scalar_select %p211, %s21, 1
          %p213 = scmp.lt.s32.totalorder %s210, 1
          %s214 = scalar_select %p213, %s210, 1
          %s215 = smul.addr %s212, 2
          %s216 = sadd.s32 %s214, %s215
          %s217 = smul.addr %s216, 8
          %s218 = scalar_lea.vmem %s0, %s217
          %s219 = smul.u32 2, %s22
        $region20: #{_device_forward.3} parent=15 // pred_fallthru
          _
        // Predicated region
        $region21: #{_device_forward.3} parent=15 // pred_check
          %p220 = pneg %p74
        $region22: #{_device_forward.3} parent=15 // pred_check_branch
          %222 = sbr.rel (%p220) target = $region24
        $region23: #{_device_forward.3} parent=15 // pred_region
          %p223 = scmp.lt.s32.totalorder %s21, 1
          %s224 = scalar_select %p223, %s21, 1
          %s225 = smul.addr %s224, 4
          %s226 = scalar_lea.vmem %s1, %s225
        $region24: #{_device_forward.3} parent=15 // pred_fallthru
          _
        // Predicated region
        $region25: #{_device_forward.3} parent=15 // pred_check
          %p227 = pneg %p100
        $region26: #{_device_forward.3} parent=15 // pred_check_branch
          %229 = sbr.rel (%p227) target = $region28
        $region27: #{_device_forward.3} parent=15 // pred_region
          %p230 = scmp.lt.s32.totalorder %s21, 1
          %s231 = scalar_select %p230, %s21, 1
          %s232 = scalar_lea.vmem %s2, %s231
        $region28: #{_device_forward.3} parent=15 // pred_fallthru
          _
        // Predicated region
        $region29: #{_device_forward.3} parent=15 // pred_check
          %p233 = pneg %p128
        $region30: #{_device_forward.3} parent=15 // pred_check_branch
          %235 = sbr.rel (%p233) target = $region32
        $region31: #{_device_forward.3} parent=15 // pred_region
          %s236 = smul.u32 2, %s22
          %p237 = scmp.lt.s32.totalorder %s21, 1
          %s238 = scalar_select %p237, %s21, 1
          %p239 = scmp.lt.s32.totalorder %s236, 1
          %s240 = scalar_select %p239, %s236, 1
          %s241 = smul.addr %s238, 2
          %s242 = sadd.s32 %s240, %s241
          %s243 = smul.addr %s242, 8
          %s244 = scalar_lea.vmem %s3, %s243
          %s245 = smul.u32 2, %s22
        $region32: #{_device_forward.3} parent=15 // pred_fallthru
          _
        // Predicated region
        $region33: #{_device_forward.3} parent=15 // pred_check
          %p246 = pneg %p154
        $region34: #{_device_forward.3} parent=15 // pred_check_branch
          %248 = sbr.rel (%p246) target = $region36
        $region35: #{_device_forward.3} parent=15 // pred_region
          %s249 = sand.u32 %s144, 1
          %s250 = scalar_lea.sflag [#allocation3], %s249
          %s251 = sand.u32 %s144, 1
          %s252 = scalar_lea.vmem [#allocation2], %s251
          %s254 = ssub.s32 16, 16
          %255 = vsyncadd %s250, %s254
          %s256 = smul.addr %s21, 16
          %s257 = scalar_lea.hbm %s4, %s256
          %s259 = sshll.u32 %s252, 4
          %s260 = int_to_ptr.vmem [resolvable:$true] %s259
          %262 = dma.hbm_to_vmem [thread:$0]  %s257, 16, %s260, %s250
        $region36: #{_device_forward.3} parent=15 // pred_fallthru
          _
      $region16: #{_device_forward.3} parent=5 // pred_fallthru
        _
      %p263 = scmp.le.s32.totalorder 1, %s14
      %p264 = scmp.lt.s32.totalorder %s14, 3
      %p265 = pnand %p263, %p264
      %p266 = pneg %p265
      // Predicated region
      $region37: #{_device_forward.3} parent=5 // pred_check
        _
      $region38: #{_device_forward.3} parent=5 // pred_check_branch
        %268 = sbr.rel (%p265) target = $region40
      $region39: #{_device_forward.3} parent=5 // pred_region
        %s269 = ssub.s32 %s14, 1
        %s270 = sand.u32 %s147, 1
        %s271 = scalar_lea.sflag [#allocation3], %s270
        %s272 = sand.u32 %s147, 1
        %s273 = scalar_lea.vmem [#allocation2], %s272
        // Predicated region
        $region41: #{_device_forward.3} parent=39 // pred_check
          %p274 = pneg %p160
        $region42: #{_device_forward.3} parent=39 // pred_check_branch
          %276 = sbr.rel (%p274) target = $region44
        $region43: #{_device_forward.3} parent=39 // pred_region
          %277 = dma.done %s271, 16
        $region44: #{_device_forward.3} parent=39 // pred_fallthru
          _
        %s278 = smul.u32 2, %s24
        %p279 = scmp.lt.s32.totalorder %s23, 1
        %s280 = scalar_select %p279, %s23, 1
        %p281 = scmp.lt.s32.totalorder %s278, 1
        %s282 = scalar_select %p281, %s278, 1
        %s283 = smul.addr %s280, 2
        %s284 = sadd.s32 %s282, %s283
        %s285 = smul.addr %s284, 8
        %s286 = scalar_lea.vmem %s0, %s285
        %p287 = pneg %p54
        %p288 = pneg %p51
        %p289 = scmp.lt.s32.totalorder %s23, 1
        %s290 = scalar_select %p289, %s23, 1
        %s291 = smul.addr %s290, 4
        %s292 = scalar_lea.vmem %s1, %s291
        %p293 = pneg %p80
        %p294 = pneg %p77
        %p295 = scmp.lt.s32.totalorder %s23, 1
        %s296 = scalar_select %p295, %s23, 1
        %s297 = scalar_lea.vmem %s2, %s296
        %p298 = pneg %p106
        %p299 = pneg %p103
        %s300 = smul.u32 2, %s24
        %p301 = scmp.lt.s32.totalorder %s23, 1
        %s302 = scalar_select %p301, %s23, 1
        %p303 = scmp.lt.s32.totalorder %s300, 1
        %s304 = scalar_select %p303, %s300, 1
        %s305 = smul.addr %s302, 2
        %s306 = sadd.s32 %s304, %s305
        %s307 = smul.addr %s306, 8
        %s308 = scalar_lea.vmem %s3, %s307
        %p309 = pneg %p134
        %p310 = pneg %p131
        %s311 = sand.u32 %s147, 1
        %s312 = scalar_lea.sflag [#allocation3], %s311
        %s313 = sand.u32 %s147, 1
        %s314 = scalar_lea.vmem [#allocation2], %s313
        %p315 = pneg %p160
        %p316 = pneg %p157
        %p317 = pneg %p188
        %p318 = pneg %p185
        %s319 = smul.u32 2, %s24
        %p320 = scmp.lt.s32.totalorder %s23, 1
        %s321 = scalar_select %p320, %s23, 1
        %p322 = scmp.lt.s32.totalorder %s319, 1
        %s323 = scalar_select %p322, %s319, 1
        %s324 = smul.addr %s321, 2
        %s325 = sadd.s32 %s323, %s324
        %s326 = smul.addr %s325, 4
        %s327 = scalar_lea.vmem %s5, %s326
        %s328 = smul.u32 2, %s24
        %p329 = scmp.lt.s32.totalorder %s23, 1
        %s330 = scalar_select %p329, %s23, 1
        %p331 = scmp.lt.s32.totalorder %s328, 1
        %s332 = scalar_select %p331, %s328, 1
        %s333 = smul.addr %s330, 2
        %s334 = sadd.s32 %s332, %s333
        %s335 = smul.addr %s334, 8
        %s336 = scalar_lea.vmem %s0, %s335
        %s337 = smul.u32 2, %s24
        %p338 = scmp.lt.s32.totalorder %s23, 1
        %s339 = scalar_select %p338, %s23, 1
        %s340 = smul.addr %s339, 4
        %s341 = scalar_lea.vmem %s1, %s340
        %p342 = scmp.lt.s32.totalorder %s23, 1
        %s343 = scalar_select %p342, %s23, 1
        %s344 = scalar_lea.vmem %s2, %s343
        %s345 = smul.u32 2, %s24
        %p346 = scmp.lt.s32.totalorder %s23, 1
        %s347 = scalar_select %p346, %s23, 1
        %p348 = scmp.lt.s32.totalorder %s345, 1
        %s349 = scalar_select %p348, %s345, 1
        %s350 = smul.addr %s347, 2
        %s351 = sadd.s32 %s349, %s350
        %s352 = smul.addr %s351, 8
        %s353 = scalar_lea.vmem %s3, %s352
        %s354 = smul.u32 2, %s24
        %s355 = smul.u32 2, %s24
        %p356 = scmp.lt.s32.totalorder %s23, 1
        %s357 = scalar_select %p356, %s23, 1
        %p358 = scmp.lt.s32.totalorder %s355, 1
        %s359 = scalar_select %p358, %s355, 1
        %s360 = smul.addr %s357, 2
        %s361 = sadd.s32 %s359, %s360
        %s362 = smul.addr %s361, 4
        %s363 = scalar_lea.vmem %s5, %s362
        %s364 = smul.u32 2, %s24
        %v365 = vld [vmem:[%s336] sm:$0xff]
        %v366 = vld [vmem:[%s336 + $0x8] sm:$0xff]
        %v367 = vld [vmem:[%s341] sm:$0x7]
        %v368 = vld [vmem:[%s344] sm:$0x1]
        %v369 = vld [vmem:[%s353] sm:$0xff]
        %v370 = vld [vmem:[%s353 + $0x8] sm:$0xff]
        %vm371 = vcmp.gt.f32.partialorder %v369, 0.5
        %vm372 = vcmp.gt.f32.partialorder %v370, 0.5
        %v373 = vld [vmem:[%s273] sm:$0x1]
        %vm374 = vcmp.gt.f32.partialorder %v373, 0.5
        %v375 = vmul.f32 %v365, %v365
        %v376 = vmul.f32 %v366, %v366
        %vm377 = vcmask 23552
        %v378 = vsel %vm377, %v375, 0.0
        %379 = vadd.xlane.f32.xlu0 %v378
        %v380 = vpop.xlane.xlu0 %379
        %v381 = vsel %vm377, %v376, 0.0
        %382 = vadd.xlane.f32.xlu0 %v381
        %v383 = vpop.xlane.xlu0 %382
        %v385 = vsel %vm377, %v365, 0
        %v388 = vsel %vm377, %v366, 0
        %vm390 = vcmask 1042432
        %v392 = vsel %vm390, %v367, 0
        %394 = vmatprep.subr.mxu0 0.0
        %395 = vmatpush1.msra.mxu0 0.0
        %396 = vmatprep.subr.mxu0 0.0
        %397 = vmatpush1.msra.mxu0 0.0
        %398 = vmatprep.subr.mxu0 0.0
        %399 = vmatpush1.msra.mxu0 0.0
        %400 = vmatprep.subr.mxu0 0.0
        %401 = vmatpush1.msra.mxu0 0.0
        %402 = vmatprep.subr.mxu0 0.0
        %403 = vmatpush1.msra.mxu0 0.0
        %404 = vmatprep.subr.mxu0 0.0
        %405 = vmatpush1.msra.mxu0 0.0
        %406 = vmatprep.subr.mxu0 0.0
        %407 = vmatpush1.msra.mxu0 0.0
        %408 = vmatprep.subr.mxu0 0.0
        %409 = vmatpush1.msra.mxu0 0.0
        %410 = vmatprep.subr.mxu0 0.0
        %411 = vmatpush1.msra.mxu0 0.0
        %412 = vmatprep.subr.mxu0 0.0
        %413 = vmatpush1.msra.mxu0 0.0
        %414 = vmatprep.subr.mxu0 0.0
        %415 = vmatpush1.msra.mxu0 0.0
        %416 = vmatprep.subr.mxu0 0.0
        %417 = vmatpush1.msra.mxu0 0.0
        %418 = vmatprep.subr.mxu0 0.0
        %419 = vmatpush1.msra.mxu0 0.0
        %420 = vmatprep.subr.mxu0 0.0
        %421 = vmatpush1.msra.mxu0 0.0
        %422 = vmatprep.subr.mxu0 0.0
        %423 = vmatpush1.msra.mxu0 0.0
        %424 = vmatprep.subr.mxu0 0.0
        %425 = vmatpush1.msra.mxu0 %v392
        %426 = vmatprep.subr.mxu0 0.0
        %427 = vmatpush2.msra.mxu0 0.0
        %428 = vmatprep.subr.mxu0 0.0
        %429 = vmatpush2.msra.mxu0 0.0
        %430 = vmatprep.subr.mxu0 0.0
        %431 = vmatpush2.msra.mxu0 0.0
        %432 = vmatprep.subr.mxu0 0.0
        %433 = vmatpush2.msra.mxu0 0.0
        %434 = vmatprep.subr.mxu0 0.0
        %435 = vmatpush2.msra.mxu0 0.0
        %436 = vmatprep.subr.mxu0 0.0
        %437 = vmatpush2.msra.mxu0 0.0
        %438 = vmatprep.subr.mxu0 0.0
        %439 = vmatpush2.msra.mxu0 0.0
        %440 = vmatprep.subr.mxu0 0.0
        %441 = vmatpush2.msra.mxu0 0.0
        %442 = vmatprep.subr.mxu0 0.0
        %443 = vmatpush2.msra.mxu0 0.0
        %444 = vmatprep.subr.mxu0 0.0
        %445 = vmatpush2.msra.mxu0 0.0
        %446 = vmatprep.subr.mxu0 0.0
        %447 = vmatpush2.msra.mxu0 0.0
        %448 = vmatprep.subr.mxu0 0.0
        %449 = vmatpush2.msra.mxu0 0.0
        %450 = vmatprep.subr.mxu0 0.0
        %451 = vmatpush2.msra.mxu0 0.0
        %452 = vmatprep.subr.mxu0 0.0
        %453 = vmatpush2.msra.mxu0 0.0
        %454 = vmatprep.subr.mxu0 0.0
        %455 = vmatpush2.msra.mxu0 0.0
        %456 = vmatprep.subr.mxu0 0.0
        %457 = vmatpush2.msra.mxu0 0.0
        %458 = vmatprep.mubr.f32.mxu0 0.0
        %459 = vmatmul.mubr.f32.gmra.mxu0 %v385
        %v460 = vpop.f32.mrf.mxu0
        %v461 = vadd.f32 0.0, %v460
        %v462 = vpop.f32.mrf.mxu0
        %463 = vmatprep.mubr.f32.mxu0 0.0
        %464 = vmatmul.mubr.f32.gmra.mxu0 %v388
        %v465 = vpop.f32.mrf.mxu0
        %v466 = vadd.f32 0.0, %v465
        %v467 = vpop.f32.mrf.mxu0
        %468 = vdwg.mxu0
        %v470 = vlaneseq
        %v471 = vshrl.u32 %v470, 7
        %v472 = vsub.s32 0, %v471
        %v473 = vrot.slane %v368, %v472
        %v475 = vadd.f32 %v380, %v473
        %v476 = vadd.f32 %v383, %v473
        %v477 = vmul.f32 %v461, 2.0
        %v478 = vmul.f32 %v466, 2.0
        %v479 = vsub.f32 %v475, %v477
        %v480 = vsub.f32 %v476, %v478
        %v481 = vmax.f32 %v479, 0.0
        %v482 = vmax.f32 %v480, 0.0
        %v483 = vsel %vm371, 1, 0
        %v484 = vsel %vm372, 1, 0
        %485 = vset.pattern.permute.xlu0 0
        %486 = vperm.xlu0 %485, %v483
        %v487 = vpop.permute.xlu0 %486
        %488 = vset.pattern.permute.xlu0 0
        %489 = vperm.xlu0 %488, %v484
        %v490 = vpop.permute.xlu0 %489
        %vm491 = vcmp.eq.s32.totalorder %v487, 1
        %vm492 = vcmp.eq.s32.totalorder %v490, 1
        %v493 = vsel %vm374, 1, 0
        %v494 = vlaneseq
        %v495 = vshrl.u32 %v494, 7
        %v496 = vsub.s32 0, %v495
        %v497 = vrot.slane %v493, %v496
        %vm498 = vcmp.eq.s32.totalorder %v497, 1
        %vm499 = vmand %vm491, %vm498
        %vm500 = vmand %vm492, %vm498
        %v501 = vadd.f32 %v481, 1e-06
        %v502 = vadd.f32 %v482, 1e-06
        %v503 = vrsqrt.pop %v501
        %v504 = vmul.f32 %v501, %v503
        %vm505 = vcmp.eq.f32.partialorder %v501, inf
        %v506 = vsel %vm505, %v501, %v504
        %vm507 = vcmp.eq.f32.partialorder %v501, 0.0
        %v508 = vand.u32 %v501, 2147483648
        %v509 = vsel %vm507, %v508, %v506
        %v510 = vrsqrt.pop %v502
        %v511 = vmul.f32 %v502, %v510
        %vm512 = vcmp.eq.f32.partialorder %v502, inf
        %v513 = vsel %vm512, %v502, %v511
        %vm514 = vcmp.eq.f32.partialorder %v502, 0.0
        %v515 = vand.u32 %v502, 2147483648
        %v516 = vsel %vm514, %v515, %v513
        %v517 = vsel %vm499, %v509, 10000.0
        %v518 = vsel %vm500, %v516, 10000.0
        %vm519 = vcmask 130048
        %v520 = vsel %vm519, %v517, -inf
        %521 = vmax.xlane.f32.xlu0 %v520
        %v522 = vpop.xlane.xlu0 %521
        %v523 = vsel %vm519, %v518, -inf
        %524 = vmax.xlane.f32.xlu0 %v523
        %v525 = vpop.xlane.xlu0 %524
        %v526 = vadd.f32 %v517, %v522
        %v527 = vadd.f32 %v518, %v525
        %v528 = vadd.f32 %v526, 1.0
        %v529 = vadd.f32 %v527, 1.0
        %v530 = vsel %vm499, %v509, %v528
        %v531 = vsel %vm500, %v516, %v529
        %v532 = vsub.f32 0.0, %v530
        %v533 = vsub.f32 0.0, %v531
        %v534 = vpack.c.bf16 %v533, %v532
        %v536 = vunpack.c.l.b16 %v534
        %v537 = vunpack.c.h.b16 %v534
        %v538 = vpack.c.b16 %v536, %v536
        %v539 = vpack.c.b16 %v537, %v537
        %vm542 = vcmask 125952
        %543 = vst.msk [vmem:[%s363] sm:$0xf] %vm542, %v538
        %544 = vst.msk [vmem:[%s363 + $0x4] sm:$0xf] %vm542, %v539
        %s545 = smul.u32 2, %s24
        %p546 = scmp.lt.s32.totalorder %s23, 1
        %s547 = scalar_select %p546, %s23, 1
        %p548 = scmp.lt.s32.totalorder %s545, 1
        %s549 = scalar_select %p548, %s545, 1
        %s550 = smul.addr %s547, 2
        %s551 = sadd.s32 %s549, %s550
        %s552 = smul.addr %s551, 4
        %s553 = scalar_lea.vmem %s5, %s552
        // Predicated region
        $region45: #{_device_forward.3} parent=39 // pred_check
          %p554 = pneg %p185
        $region46: #{_device_forward.3} parent=39 // pred_check_branch
          %556 = sbr.rel (%p554) target = $region48
        $region47: #{_device_forward.3} parent=39 // pred_region
          %s557 = smul.u32 2, %s24
        $region48: #{_device_forward.3} parent=39 // pred_fallthru
          _
      $region40: #{_device_forward.3} parent=5 // pred_fallthru
        _
      %p558 = scmp.le.s32.totalorder 2, %s14
      // Predicated region
      $region49: #{_device_forward.3} parent=5 // pred_check
        %p559 = pneg %p558
      $region50: #{_device_forward.3} parent=5 // pred_check_branch
        %561 = sbr.rel (%p559) target = $region52
      $region51: #{_device_forward.3} parent=5 // pred_region
        %s562 = ssub.s32 %s14, 2
        // Predicated region
        $region53: #{_device_forward.3} parent=51 // pred_check
          %p563 = pneg %p191
        $region54: #{_device_forward.3} parent=51 // pred_check_branch
          %565 = sbr.rel (%p563) target = $region56
        $region55: #{_device_forward.3} parent=51 // pred_region
          %s566 = smul.u32 2, %s26
          %p567 = scmp.lt.s32.totalorder %s25, 1
          %s568 = scalar_select %p567, %s25, 1
          %p569 = scmp.lt.s32.totalorder %s566, 1
          %s570 = scalar_select %p569, %s566, 1
          %s571 = smul.addr %s568, 2
          %s572 = sadd.s32 %s570, %s571
          %s573 = smul.addr %s572, 4
          %s574 = scalar_lea.vmem %s5, %s573
        $region56: #{_device_forward.3} parent=51 // pred_fallthru
          _
      $region52: #{_device_forward.3} parent=5 // pred_fallthru
        _
    $region6: #{_device_forward.3} parent=1 // loop_footer
      %s18 = sadd.s32 1, %s14
    $region7: #{_device_forward.3} parent=1 // loop_footer_branch
      %13 = sbr.rel target = $region3
    $region8: #{_device_forward.3} parent=1 // loop_exit
      _
    %575 = vsyncpa [#allocation3], 1
    %s576 = scalar_lea.sflag [#allocation3], 1
    %577 = vsyncpa %s576, 1

// kernel: _device_forward.4
$region0: #{_device_forward.4}
  #allocation0 [shape = 'u32[]', space=smem, size = 0x4, offset = 0x4, fixed_abs, tag = 'smem constant byte address 0x4 - core index']
  #allocation1 [shape = 'u32[144,128]{1,0:T(1,128)}', space=vmem, size = 0x12000, scoped, tag = 'internal scratch']
  %s0 = inlined_call_operand.vmem [shape: bf16[32,122], index: 0, kind: input, shape index: {}]
  %s1 = inlined_call_operand.vmem [shape: bf16[122,128], index: 1, kind: input, shape index: {}]
  %s2 = inlined_call_operand.vmem [shape: f32[1,128], index: 2, kind: input, shape index: {}]
  %s3 = inlined_call_operand.vmem [shape: f32[1,128], index: 3, kind: input, shape index: {}]
  %s4 = inlined_call_operand.vmem [shape: f32[1,128], index: 4, kind: input, shape index: {}]
  %s5 = inlined_call_operand.hbm [shape: f32[32,128], index: 5, kind: output, shape index: {}]
  %s6 = sld [smem:[#allocation0]]
  $region30: #{_device_forward.4} parent=0
    _
  %s8 = ssub.s32 1, %s6
  %s9 = scalar_select 0, %s8, %s6
  $region1: #{_device_forward.4} parent=0
    #allocation2 [shape = 'u8[16384]{0}', space=vmem, size = 0x4000, scoped, tag = 'output window, operand 0, single buffered']
    #allocation3 [shape = 's32[1]{0}', space=sflag, size = 0x4, scoped, tag = 'scoped memory for _device_forward.4']
    %10 = vsyncpa [#allocation3], 0
    // Predicated region
    $region2: #{_device_forward.4} parent=1 // pred_check
      _
    $region3: #{_device_forward.4} parent=1 // pred_check_branch
      %12 = sbr.rel (0) target = $region5
    $region4: #{_device_forward.4} parent=1 // pred_region
      _
    $region5: #{_device_forward.4} parent=1 // pred_fallthru
      _
    // Predicated region
    $region6: #{_device_forward.4} parent=1 // pred_check
      _
    $region7: #{_device_forward.4} parent=1 // pred_check_branch
      %14 = sbr.rel (0) target = $region9
    $region8: #{_device_forward.4} parent=1 // pred_region
      _
    $region9: #{_device_forward.4} parent=1 // pred_fallthru
      _
    // Predicated region
    $region10: #{_device_forward.4} parent=1 // pred_check
      _
    $region11: #{_device_forward.4} parent=1 // pred_check_branch
      %16 = sbr.rel (0) target = $region13
    $region12: #{_device_forward.4} parent=1 // pred_region
      _
    $region13: #{_device_forward.4} parent=1 // pred_fallthru
      _
    // Predicated region
    $region14: #{_device_forward.4} parent=1 // pred_check
      _
    $region15: #{_device_forward.4} parent=1 // pred_check_branch
      %18 = sbr.rel (0) target = $region17
    $region16: #{_device_forward.4} parent=1 // pred_region
      _
    $region17: #{_device_forward.4} parent=1 // pred_fallthru
      _
    // Predicated region
    $region18: #{_device_forward.4} parent=1 // pred_check
      _
    $region19: #{_device_forward.4} parent=1 // pred_check_branch
      %20 = sbr.rel (0) target = $region21
    $region20: #{_device_forward.4} parent=1 // pred_region
      _
    $region21: #{_device_forward.4} parent=1 // pred_fallthru
      _
    %v22 = vld [vmem:[%s0] sm:$0xf]
    %v23 = vld [vmem:[%s0 + $0x4] sm:$0xf]
    %v24 = vld [vmem:[%s0 + $0x8] sm:$0xf]
    %v25 = vld [vmem:[%s0 + $0xc] sm:$0xf]
    %v26 = vld [vmem:[%s1] sm:$0xf]
    %v27 = vld [vmem:[%s1 + $0x4] sm:$0xf]
    %v28 = vld [vmem:[%s1 + $0x8] sm:$0xf]
    %v29 = vld [vmem:[%s1 + $0xc] sm:$0xf]
    %v30 = vld [vmem:[%s1 + $0x10] sm:$0xf]
    %v31 = vld [vmem:[%s1 + $0x14] sm:$0xf]
    %v32 = vld [vmem:[%s1 + $0x18] sm:$0xf]
    %v33 = vld [vmem:[%s1 + $0x1c] sm:$0xf]
    %v34 = vld [vmem:[%s1 + $0x20] sm:$0xf]
    %v35 = vld [vmem:[%s1 + $0x24] sm:$0xf]
    %v36 = vld [vmem:[%s1 + $0x28] sm:$0xf]
    %v37 = vld [vmem:[%s1 + $0x2c] sm:$0xf]
    %v38 = vld [vmem:[%s1 + $0x30] sm:$0xf]
    %v39 = vld [vmem:[%s1 + $0x34] sm:$0xf]
    %v40 = vld [vmem:[%s1 + $0x38] sm:$0xf]
    %v41 = vld [vmem:[%s1 + $0x3c] sm:$0x1]
    %v42 = vld [vmem:[%s2] sm:$0x1]
    %v44 = vlaneseq
    %v45 = vshrl.u32 %v44, 7
    %v46 = vsub.s32 0, %v45
    %v47 = vrot.slane %v42, %v46
    %v53 = vunpack.c.l.b16 %v22
    %v54 = vunpack.c.l.b16 %v23
    %v55 = vunpack.c.l.b16 %v24
    %v56 = vunpack.c.l.b16 %v25
    %v57 = vpack.c.b16 %v54, %v53
    %v58 = vpack.c.b16 %v56, %v55
    %v75 = vunpack.c.l.b16 %v26
    %v76 = vunpack.c.l.b16 %v27
    %v77 = vunpack.c.l.b16 %v28
    %v78 = vunpack.c.l.b16 %v29
    %v79 = vunpack.c.l.b16 %v30
    %v80 = vunpack.c.l.b16 %v31
    %v81 = vunpack.c.l.b16 %v32
    %v82 = vunpack.c.l.b16 %v33
    %v83 = vunpack.c.l.b16 %v34
    %v84 = vunpack.c.l.b16 %v35
    %v85 = vunpack.c.l.b16 %v36
    %v86 = vunpack.c.l.b16 %v37
    %v87 = vunpack.c.l.b16 %v38
    %v88 = vunpack.c.l.b16 %v39
    %v89 = vunpack.c.l.b16 %v40
    %v90 = vunpack.c.l.b16 %v41
    %v91 = vpack.c.b16 %v76, %v75
    %v92 = vpack.c.b16 %v78, %v77
    %v93 = vpack.c.b16 %v80, %v79
    %v94 = vpack.c.b16 %v82, %v81
    %v95 = vpack.c.b16 %v84, %v83
    %v96 = vpack.c.b16 %v86, %v85
    %v97 = vpack.c.b16 %v88, %v87
    %v98 = vpack.c.b16 %v90, %v89
    %vm106 = vcmask 998400
    %v108 = vsel %vm106, %v57, 0
    %v111 = vsel %vm106, %v58, 0
    %vm113 = vcmask 1044480
    %v115 = vsel %vm113, %v98, 0
    %117 = vmatprep.subr.bf16.mxu0 0
    %118 = vmatpush1.bf16.msra.mxu0 %v115
    %119 = vmatprep.subr.bf16.mxu0 0
    %120 = vmatpush1.bf16.msra.mxu0 %v97
    %121 = vmatprep.subr.bf16.mxu0 0
    %122 = vmatpush1.bf16.msra.mxu0 %v96
    %123 = vmatprep.subr.bf16.mxu0 0
    %124 = vmatpush1.bf16.msra.mxu0 %v95
    %125 = vmatprep.subr.bf16.mxu0 0
    %126 = vmatpush1.bf16.msra.mxu0 %v94
    %127 = vmatprep.subr.bf16.mxu0 0
    %128 = vmatpush1.bf16.msra.mxu0 %v93
    %129 = vmatprep.subr.bf16.mxu0 0
    %130 = vmatpush1.bf16.msra.mxu0 %v92
    %131 = vmatprep.subr.bf16.mxu0 0
    %132 = vmatpush1.bf16.msra.mxu0 %v91
    %133 = vmatprep.subr.bf16.mxu0 0
    %134 = vmatpush2.bf16.msra.mxu0 0
    %135 = vmatprep.subr.bf16.mxu0 0
    %136 = vmatpush2.bf16.msra.mxu0 0
    %137 = vmatprep.subr.bf16.mxu0 0
    %138 = vmatpush2.bf16.msra.mxu0 0
    %139 = vmatprep.subr.bf16.mxu0 0
    %140 = vmatpush2.bf16.msra.mxu0 0
    %141 = vmatprep.subr.bf16.mxu0 0
    %142 = vmatpush2.bf16.msra.mxu0 0
    %143 = vmatprep.subr.bf16.mxu0 0
    %144 = vmatpush2.bf16.msra.mxu0 0
    %145 = vmatprep.subr.bf16.mxu0 0
    %146 = vmatpush2.bf16.msra.mxu0 0
    %147 = vmatprep.subr.bf16.mxu0 0
    %148 = vmatpush2.bf16.msra.mxu0 0
    %149 = vmatprep.mubr.bf16.mxu0 0
    %150 = vmatmul.mubr.bf16.gmra.mxu0 %v108
    %v151 = vpop.f32.mrf.mxu0
    %v152 = vadd.f32 %v47, %v151
    %v153 = vpop.f32.mrf.mxu0
    %v154 = vpop.f32.mrf.mxu0
    %v155 = vadd.f32 %v47, %v154
    %v156 = vpop.f32.mrf.mxu0
    %157 = vmatprep.mubr.bf16.mxu0 0
    %158 = vmatmul.mubr.bf16.gmra.mxu0 %v111
    %v159 = vpop.f32.mrf.mxu0
    %v160 = vadd.f32 %v47, %v159
    %v161 = vpop.f32.mrf.mxu0
    %v162 = vpop.f32.mrf.mxu0
    %v163 = vadd.f32 %v47, %v162
    %v164 = vpop.f32.mrf.mxu0
    %165 = vdwg.mxu0
    %166 = vadd.xlane.f32.xlu0 %v152
    %v167 = vpop.xlane.xlu0 %166
    %168 = vadd.xlane.f32.xlu0 %v155
    %v169 = vpop.xlane.xlu0 %168
    %170 = vadd.xlane.f32.xlu0 %v160
    %v171 = vpop.xlane.xlu0 %170
    %172 = vadd.xlane.f32.xlu0 %v163
    %v173 = vpop.xlane.xlu0 %172
    %v174 = vrcp.pop 128.0
    %v175 = vmul.f32 %v167, %v174
    %v176 = vmul.f32 %v169, %v174
    %v177 = vmul.f32 %v171, %v174
    %v178 = vmul.f32 %v173, %v174
    %v179 = vsub.f32 %v152, %v175
    %v180 = vsub.f32 %v155, %v176
    %v181 = vsub.f32 %v160, %v177
    %v182 = vsub.f32 %v163, %v178
    %v183 = vmul.f32 %v179, %v179
    %v184 = vmul.f32 %v180, %v180
    %v185 = vmul.f32 %v181, %v181
    %v186 = vmul.f32 %v182, %v182
    %187 = vadd.xlane.f32.xlu0 %v183
    %v188 = vpop.xlane.xlu0 %187
    %189 = vadd.xlane.f32.xlu0 %v184
    %v190 = vpop.xlane.xlu0 %189
    %191 = vadd.xlane.f32.xlu0 %v185
    %v192 = vpop.xlane.xlu0 %191
    %193 = vadd.xlane.f32.xlu0 %v186
    %v194 = vpop.xlane.xlu0 %193
    %v195 = vmul.f32 %v188, 0.007874016
    %v196 = vmul.f32 %v190, 0.007874016
    %v197 = vmul.f32 %v192, 0.007874016
    %v198 = vmul.f32 %v194, 0.007874016
    %v199 = vadd.f32 %v195, 1e-06
    %v200 = vadd.f32 %v196, 1e-06
    %v201 = vadd.f32 %v197, 1e-06
    %v202 = vadd.f32 %v198, 1e-06
    %v203 = vrsqrt.pop %v199
    %v204 = vmul.f32 %v199, %v203
    %vm205 = vcmp.eq.f32.partialorder %v199, inf
    %v206 = vsel %vm205, %v199, %v204
    %vm207 = vcmp.eq.f32.partialorder %v199, 0.0
    %v208 = vand.u32 %v199, 2147483648
    %v209 = vsel %vm207, %v208, %v206
    %v210 = vrsqrt.pop %v200
    %v211 = vmul.f32 %v200, %v210
    %vm212 = vcmp.eq.f32.partialorder %v200, inf
    %v213 = vsel %vm212, %v200, %v211
    %vm214 = vcmp.eq.f32.partialorder %v200, 0.0
    %v215 = vand.u32 %v200, 2147483648
    %v216 = vsel %vm214, %v215, %v213
    %v217 = vrsqrt.pop %v201
    %v218 = vmul.f32 %v201, %v217
    %vm219 = vcmp.eq.f32.partialorder %v201, inf
    %v220 = vsel %vm219, %v201, %v218
    %vm221 = vcmp.eq.f32.partialorder %v201, 0.0
    %v222 = vand.u32 %v201, 2147483648
    %v223 = vsel %vm221, %v222, %v220
    %v224 = vrsqrt.pop %v202
    %v225 = vmul.f32 %v202, %v224
    %vm226 = vcmp.eq.f32.partialorder %v202, inf
    %v227 = vsel %vm226, %v202, %v225
    %vm228 = vcmp.eq.f32.partialorder %v202, 0.0
    %v229 = vand.u32 %v202, 2147483648
    %v230 = vsel %vm228, %v229, %v227
    %v231 = vadd.f32 %v209, 1e-06
    %v232 = vadd.f32 %v216, 1e-06
    %v233 = vadd.f32 %v223, 1e-06
    %v234 = vadd.f32 %v230, 1e-06
    %v235 = vrcp.pop %v231
    %v236 = vrcp.pop %v232
    %v237 = vrcp.pop %v233
    %v238 = vrcp.pop %v234
    %v239 = vld [vmem:[%s3] sm:$0x1]
    %v241 = vlaneseq
    %v242 = vshrl.u32 %v241, 7
    %v243 = vsub.s32 0, %v242
    %v244 = vrot.slane %v239, %v243
    %v246 = vmul.f32 %v244, %v179
    %v247 = vmul.f32 %v244, %v180
    %v248 = vmul.f32 %v244, %v181
    %v249 = vmul.f32 %v244, %v182
    %v250 = vmul.f32 %v246, %v235
    %v251 = vmul.f32 %v247, %v236
    %v252 = vmul.f32 %v248, %v237
    %v253 = vmul.f32 %v249, %v238
    %v254 = vld [vmem:[%s4] sm:$0x1]
    %v256 = vlaneseq
    %v257 = vshrl.u32 %v256, 7
    %v258 = vsub.s32 0, %v257
    %v259 = vrot.slane %v254, %v258
    %v261 = vadd.f32 %v250, %v259
    %v262 = vadd.f32 %v251, %v259
    %v263 = vadd.f32 %v252, %v259
    %v264 = vadd.f32 %v253, %v259
    %265 = vst [vmem:[#allocation2] sm:$0xff] %v261
    %266 = vst [vmem:[#allocation2 + $0x8] sm:$0xff] %v262
    %267 = vst [vmem:[#allocation2 + $0x10] sm:$0xff] %v263
    %268 = vst [vmem:[#allocation2 + $0x18] sm:$0xff] %v264
    // Predicated region
    $region22: #{_device_forward.4} parent=1 // pred_check
      _
    $region23: #{_device_forward.4} parent=1 // pred_check_branch
      %270 = sbr.rel (0) target = $region25
    $region24: #{_device_forward.4} parent=1 // pred_region
      %s272 = ssub.s32 512, 512
      %273 = vsyncadd [#allocation3], %s272
      %s274 = sshll.u32 [#allocation2], 4
      %s275 = int_to_ptr.vmem [resolvable:$true] %s274
      %280 = dma.vmem_to_hbm [thread:$0]  %s275, 512, %s5, [#allocation3], 128, 128, 8
    $region25: #{_device_forward.4} parent=1 // pred_fallthru
      _
    // Predicated region
    $region26: #{_device_forward.4} parent=1 // pred_check
      _
    $region27: #{_device_forward.4} parent=1 // pred_check_branch
      %282 = sbr.rel (0) target = $region29
    $region28: #{_device_forward.4} parent=1 // pred_region
      %283 = dma.done [#allocation3], 512
    $region29: #{_device_forward.4} parent=1 // pred_fallthru
      _
    %284 = vsyncpa [#allocation3], 1

// kernel: sub.164
$region0: #{sub.164}
  #allocation0 [shape = 's32[1]{0}', space=sflag, size = 0x4, scoped, tag = 'scoped memory for sub.164']
  %s0 = inlined_call_operand.vmem [shape: f32[2,16,16,1,1], index: 0, kind: input, shape index: {}]
  %s1 = inlined_call_operand.vmem [shape: f32[2,16,16,1,1], index: 1, kind: input, shape index: {}]
  %s2 = inlined_call_operand.vmem [shape: f32[2,16,16,1,1], index: 2, kind: output, shape index: {}]
  %v3 = vld [vmem:[%s0] sm:$0xff]
  %v4 = vld [vmem:[%s1] sm:$0xff]
  %5 = xla_tuple %v3, %v4
  %6 = xla_tuple %5
  %v7 = vsub.f32 %v3, %v4
  %8 = xla_tuple %v7
  %9 = vst [vmem:[%s2] sm:$0xff] %v7
  %s10 = scalar_lea.vmem %s0, 16
  %v11 = vld [vmem:[%s10] sm:$0xff]
  %s12 = scalar_lea.vmem %s1, 16
  %v13 = vld [vmem:[%s12] sm:$0xff]
  %14 = xla_tuple %v11, %v13
  %15 = xla_tuple %14
  %v16 = vsub.f32 %v11, %v13
  %17 = xla_tuple %v16
  %s18 = scalar_lea.vmem %s2, 16
  %19 = vst [vmem:[%s18] sm:$0xff] %v16
  %s20 = scalar_lea.vmem %s0, 8
  %v21 = vld [vmem:[%s20] sm:$0xff]
  %s22 = scalar_lea.vmem %s1, 8
  %v23 = vld [vmem:[%s22] sm:$0xff]
  %24 = xla_tuple %v21, %v23
  %25 = xla_tuple %24
  %v26 = vsub.f32 %v21, %v23
  %27 = xla_tuple %v26
  %s28 = scalar_lea.vmem %s2, 8
  %29 = vst [vmem:[%s28] sm:$0xff] %v26
  %s30 = scalar_lea.vmem %s0, 24
  %v31 = vld [vmem:[%s30] sm:$0xff]
  %s32 = scalar_lea.vmem %s1, 24
  %v33 = vld [vmem:[%s32] sm:$0xff]
  %34 = xla_tuple %v31, %v33
  %35 = xla_tuple %34
  %v36 = vsub.f32 %v31, %v33
  %37 = xla_tuple %v36
  %s38 = scalar_lea.vmem %s2, 24
  %39 = vst [vmem:[%s38] sm:$0xff] %v36

// kernel: _device_forward.5
$region0: #{_device_forward.5}
  #allocation0 [shape = 'u32[]', space=smem, size = 0x4, offset = 0x4, fixed_abs, tag = 'smem constant byte address 0x4 - core index']
  #allocation1 [shape = 'u32[144,128]{1,0:T(1,128)}', space=vmem, size = 0x12000, scoped, tag = 'internal scratch']
  %s0 = inlined_call_operand.vmem [shape: bf16[512,115], index: 0, kind: input, shape index: {}]
  %s1 = inlined_call_operand.vmem [shape: bf16[115,128], index: 1, kind: input, shape index: {}]
  %s2 = inlined_call_operand.vmem [shape: f32[1,128], index: 2, kind: input, shape index: {}]
  %s3 = inlined_call_operand.vmem [shape: f32[1,128], index: 3, kind: input, shape index: {}]
  %s4 = inlined_call_operand.vmem [shape: f32[1,128], index: 4, kind: input, shape index: {}]
  %s5 = inlined_call_operand.hbm [shape: f32[512,128], index: 5, kind: output, shape index: {}]
  %s6 = sld [smem:[#allocation0]]
  $region30: #{_device_forward.5} parent=0
    _
  %s8 = ssub.s32 1, %s6
  %s9 = scalar_select 0, %s8, %s6
  $region1: #{_device_forward.5} parent=0
    #allocation2 [shape = 'u8[262144]{0}', space=vmem, size = 0x40000, scoped, tag = 'output window, operand 0, single buffered']
    #allocation3 [shape = 's32[1]{0}', space=sflag, size = 0x4, scoped, tag = 'scoped memory for _device_forward.5']
    %10 = vsyncpa [#allocation3], 0
    // Predicated region
    $region2: #{_device_forward.5} parent=1 // pred_check
      _
    $region3: #{_device_forward.5} parent=1 // pred_check_branch
      %12 = sbr.rel (0) target = $region5
    $region4: #{_device_forward.5} parent=1 // pred_region
      _
    $region5: #{_device_forward.5} parent=1 // pred_fallthru
      _
    // Predicated region
    $region6: #{_device_forward.5} parent=1 // pred_check
      _
    $region7: #{_device_forward.5} parent=1 // pred_check_branch
      %14 = sbr.rel (0) target = $region9
    $region8: #{_device_forward.5} parent=1 // pred_region
      _
    $region9: #{_device_forward.5} parent=1 // pred_fallthru
      _
    // Predicated region
    $region10: #{_device_forward.5} parent=1 // pred_check
      _
    $region11: #{_device_forward.5} parent=1 // pred_check_branch
      %16 = sbr.rel (0) target = $region13
    $region12: #{_device_forward.5} parent=1 // pred_region
      _
    $region13: #{_device_forward.5} parent=1 // pred_fallthru
      _
    // Predicated region
    $region14: #{_device_forward.5} parent=1 // pred_check
      _
    $region15: #{_device_forward.5} parent=1 // pred_check_branch
      %18 = sbr.rel (0) target = $region17
    $region16: #{_device_forward.5} parent=1 // pred_region
      _
    $region17: #{_device_forward.5} parent=1 // pred_fallthru
      _
    // Predicated region
    $region18: #{_device_forward.5} parent=1 // pred_check
      _
    $region19: #{_device_forward.5} parent=1 // pred_check_branch
      %20 = sbr.rel (0) target = $region21
    $region20: #{_device_forward.5} parent=1 // pred_region
      _
    $region21: #{_device_forward.5} parent=1 // pred_fallthru
      _
    %v22 = vld [vmem:[%s0] sm:$0xf]
    %v23 = vld [vmem:[%s0 + $0x4] sm:$0xf]
    %v24 = vld [vmem:[%s0 + $0x8] sm:$0xf]
    %v25 = vld [vmem:[%s0 + $0xc] sm:$0xf]
    %v26 = vld [vmem:[%s0 + $0x10] sm:$0xf]
    %v27 = vld [vmem:[%s0 + $0x14] sm:$0xf]
    %v28 = vld [vmem:[%s0 + $0x18] sm:$0xf]
    %v29 = vld [vmem:[%s0 + $0x1c] sm:$0xf]
    %v30 = vld [vmem:[%s0 + $0x20] sm:$0xf]
    %v31 = vld [vmem:[%s0 + $0x24] sm:$0xf]
    %v32 = vld [vmem:[%s0 + $0x28] sm:$0xf]
    %v33 = vld [vmem:[%s0 + $0x2c] sm:$0xf]
    %v34 = vld [vmem:[%s0 + $0x30] sm:$0xf]
    %v35 = vld [vmem:[%s0 + $0x34] sm:$0xf]
    %v36 = vld [vmem:[%s0 + $0x38] sm:$0xf]
    %v37 = vld [vmem:[%s0 + $0x3c] sm:$0xf]
    %v38 = vld [vmem:[%s0 + $0x40] sm:$0xf]
    %v39 = vld [vmem:[%s0 + $0x44] sm:$0xf]
    %v40 = vld [vmem:[%s0 + $0x48] sm:$0xf]
    %v41 = vld [vmem:[%s0 + $0x4c] sm:$0xf]
    %v42 = vld [vmem:[%s0 + $0x50] sm:$0xf]
    %v43 = vld [vmem:[%s0 + $0x54] sm:$0xf]
    %v44 = vld [vmem:[%s0 + $0x58] sm:$0xf]
    %v45 = vld [vmem:[%s0 + $0x5c] sm:$0xf]
    %v46 = vld [vmem:[%s0 + $0x60] sm:$0xf]
    %v47 = vld [vmem:[%s0 + $0x64] sm:$0xf]
    %v48 = vld [vmem:[%s0 + $0x68] sm:$0xf]
    %v49 = vld [vmem:[%s0 + $0x6c] sm:$0xf]
    %v50 = vld [vmem:[%s0 + $0x70] sm:$0xf]
    %v51 = vld [vmem:[%s0 + $0x74] sm:$0xf]
    %v52 = vld [vmem:[%s0 + $0x78] sm:$0xf]
    %v53 = vld [vmem:[%s0 + $0x7c] sm:$0xf]
    %v54 = vld [vmem:[%s0 + $0x80] sm:$0xf]
    %v55 = vld [vmem:[%s0 + $0x84] sm:$0xf]
    %v56 = vld [vmem:[%s0 + $0x88] sm:$0xf]
    %v57 = vld [vmem:[%s0 + $0x8c] sm:$0xf]
    %v58 = vld [vmem:[%s0 + $0x90] sm:$0xf]
    %v59 = vld [vmem:[%s0 + $0x94] sm:$0xf]
    %v60 = vld [vmem:[%s0 + $0x98] sm:$0xf]
    %v61 = vld [vmem:[%s0 + $0x9c] sm:$0xf]
    %v62 = vld [vmem:[%s0 + $0xa0] sm:$0xf]
    %v63 = vld [vmem:[%s0 + $0xa4] sm:$0xf]
    %v64 = vld [vmem:[%s0 + $0xa8] sm:$0xf]
    %v65 = vld [vmem:[%s0 + $0xac] sm:$0xf]
    %v66 = vld [vmem:[%s0 + $0xb0] sm:$0xf]
    %v67 = vld [vmem:[%s0 + $0xb4] sm:$0xf]
    %v68 = vld [vmem:[%s0 + $0xb8] sm:$0xf]
    %v69 = vld [vmem:[%s0 + $0xbc] sm:$0xf]
    %v70 = vld [vmem:[%s0 + $0xc0] sm:$0xf]
    %v71 = vld [vmem:[%s0 + $0xc4] sm:$0xf]
    %v72 = vld [vmem:[%s0 + $0xc8] sm:$0xf]
    %v73 = vld [vmem:[%s0 + $0xcc] sm:$0xf]
    %v74 = vld [vmem:[%s0 + $0xd0] sm:$0xf]
    %v75 = vld [vmem:[%s0 + $0xd4] sm:$0xf]
    %v76 = vld [vmem:[%s0 + $0xd8] sm:$0xf]
    %v77 = vld [vmem:[%s0 + $0xdc] sm:$0xf]
    %v78 = vld [vmem:[%s0 + $0xe0] sm:$0xf]
    %v79 = vld [vmem:[%s0 + $0xe4] sm:$0xf]
    %v80 = vld [vmem:[%s0 + $0xe8] sm:$0xf]
    %v81 = vld [vmem:[%s0 + $0xec] sm:$0xf]
    %v82 = vld [vmem:[%s0 + $0xf0] sm:$0xf]
    %v83 = vld [vmem:[%s0 + $0xf4] sm:$0xf]
    %v84 = vld [vmem:[%s0 + $0xf8] sm:$0xf]
    %v85 = vld [vmem:[%s0 + $0xfc] sm:$0xf]
    %v86 = vld [vmem:[%s1] sm:$0xf]
    %v87 = vld [vmem:[%s1 + $0x4] sm:$0xf]
    %v88 = vld [vmem:[%s1 + $0x8] sm:$0xf]
    %v89 = vld [vmem:[%s1 + $0xc] sm:$0xf]
    %v90 = vld [vmem:[%s1 + $0x10] sm:$0xf]
    %v91 = vld [vmem:[%s1 + $0x14] sm:$0xf]
    %v92 = vld [vmem:[%s1 + $0x18] sm:$0xf]
    %v93 = vld [vmem:[%s1 + $0x1c] sm:$0xf]
    %v94 = vld [vmem:[%s1 + $0x20] sm:$0xf]
    %v95 = vld [vmem:[%s1 + $0x24] sm:$0xf]
    %v96 = vld [vmem:[%s1 + $0x28] sm:$0xf]
    %v97 = vld [vmem:[%s1 + $0x2c] sm:$0xf]
    %v98 = vld [vmem:[%s1 + $0x30] sm:$0xf]
    %v99 = vld [vmem:[%s1 + $0x34] sm:$0xf]
    %v100 = vld [vmem:[%s1 + $0x38] sm:$0x3]
    %v101 = vld [vmem:[%s2] sm:$0x1]
    %v103 = vlaneseq
    %v104 = vshrl.u32 %v103, 7
    %v105 = vsub.s32 0, %v104
    %v106 = vrot.slane %v101, %v105
    %v172 = vunpack.c.l.b16 %v22
    %v173 = vunpack.c.l.b16 %v23
    %v174 = vunpack.c.l.b16 %v24
    %v175 = vunpack.c.l.b16 %v25
    %v176 = vunpack.c.l.b16 %v26
    %v177 = vunpack.c.l.b16 %v27
    %v178 = vunpack.c.l.b16 %v28
    %v179 = vunpack.c.l.b16 %v29
    %v180 = vunpack.c.l.b16 %v30
    %v181 = vunpack.c.l.b16 %v31
    %v182 = vunpack.c.l.b16 %v32
    %v183 = vunpack.c.l.b16 %v33
    %v184 = vunpack.c.l.b16 %v34
    %v185 = vunpack.c.l.b16 %v35
    %v186 = vunpack.c.l.b16 %v36
    %v187 = vunpack.c.l.b16 %v37
    %v188 = vunpack.c.l.b16 %v38
    %v189 = vunpack.c.l.b16 %v39
    %v190 = vunpack.c.l.b16 %v40
    %v191 = vunpack.c.l.b16 %v41
    %v192 = vunpack.c.l.b16 %v42
    %v193 = vunpack.c.l.b16 %v43
    %v194 = vunpack.c.l.b16 %v44
    %v195 = vunpack.c.l.b16 %v45
    %v196 = vunpack.c.l.b16 %v46
    %v197 = vunpack.c.l.b16 %v47
    %v198 = vunpack.c.l.b16 %v48
    %v199 = vunpack.c.l.b16 %v49
    %v200 = vunpack.c.l.b16 %v50
    %v201 = vunpack.c.l.b16 %v51
    %v202 = vunpack.c.l.b16 %v52
    %v203 = vunpack.c.l.b16 %v53
    %v204 = vunpack.c.l.b16 %v54
    %v205 = vunpack.c.l.b16 %v55
    %v206 = vunpack.c.l.b16 %v56
    %v207 = vunpack.c.l.b16 %v57
    %v208 = vunpack.c.l.b16 %v58
    %v209 = vunpack.c.l.b16 %v59
    %v210 = vunpack.c.l.b16 %v60
    %v211 = vunpack.c.l.b16 %v61
    %v212 = vunpack.c.l.b16 %v62
    %v213 = vunpack.c.l.b16 %v63
    %v214 = vunpack.c.l.b16 %v64
    %v215 = vunpack.c.l.b16 %v65
    %v216 = vunpack.c.l.b16 %v66
    %v217 = vunpack.c.l.b16 %v67
    %v218 = vunpack.c.l.b16 %v68
    %v219 = vunpack.c.l.b16 %v69
    %v220 = vunpack.c.l.b16 %v70
    %v221 = vunpack.c.l.b16 %v71
    %v222 = vunpack.c.l.b16 %v72
    %v223 = vunpack.c.l.b16 %v73
    %v224 = vunpack.c.l.b16 %v74
    %v225 = vunpack.c.l.b16 %v75
    %v226 = vunpack.c.l.b16 %v76
    %v227 = vunpack.c.l.b16 %v77
    %v228 = vunpack.c.l.b16 %v78
    %v229 = vunpack.c.l.b16 %v79
    %v230 = vunpack.c.l.b16 %v80
    %v231 = vunpack.c.l.b16 %v81
    %v232 = vunpack.c.l.b16 %v82
    %v233 = vunpack.c.l.b16 %v83
    %v234 = vunpack.c.l.b16 %v84
    %v235 = vunpack.c.l.b16 %v85
    %v236 = vpack.c.b16 %v173, %v172
    %v237 = vpack.c.b16 %v175, %v174
    %v238 = vpack.c.b16 %v177, %v176
    %v239 = vpack.c.b16 %v179, %v178
    %v240 = vpack.c.b16 %v181, %v180
    %v241 = vpack.c.b16 %v183, %v182
    %v242 = vpack.c.b16 %v185, %v184
    %v243 = vpack.c.b16 %v187, %v186
    %v244 = vpack.c.b16 %v189, %v188
    %v245 = vpack.c.b16 %v191, %v190
    %v246 = vpack.c.b16 %v193, %v192
    %v247 = vpack.c.b16 %v195, %v194
    %v248 = vpack.c.b16 %v197, %v196
    %v249 = vpack.c.b16 %v199, %v198
    %v250 = vpack.c.b16 %v201, %v200
    %v251 = vpack.c.b16 %v203, %v202
    %v252 = vpack.c.b16 %v205, %v204
    %v253 = vpack.c.b16 %v207, %v206
    %v254 = vpack.c.b16 %v209, %v208
    %v255 = vpack.c.b16 %v211, %v210
    %v256 = vpack.c.b16 %v213, %v212
    %v257 = vpack.c.b16 %v215, %v214
    %v258 = vpack.c.b16 %v217, %v216
    %v259 = vpack.c.b16 %v219, %v218
    %v260 = vpack.c.b16 %v221, %v220
    %v261 = vpack.c.b16 %v223, %v222
    %v262 = vpack.c.b16 %v225, %v224
    %v263 = vpack.c.b16 %v227, %v226
    %v264 = vpack.c.b16 %v229, %v228
    %v265 = vpack.c.b16 %v231, %v230
    %v266 = vpack.c.b16 %v233, %v232
    %v267 = vpack.c.b16 %v235, %v234
    %v283 = vunpack.c.l.b16 %v86
    %v284 = vunpack.c.l.b16 %v87
    %v285 = vunpack.c.l.b16 %v88
    %v286 = vunpack.c.l.b16 %v89
    %v287 = vunpack.c.l.b16 %v90
    %v288 = vunpack.c.l.b16 %v91
    %v289 = vunpack.c.l.b16 %v92
    %v290 = vunpack.c.l.b16 %v93
    %v291 = vunpack.c.l.b16 %v94
    %v292 = vunpack.c.l.b16 %v95
    %v293 = vunpack.c.l.b16 %v96
    %v294 = vunpack.c.l.b16 %v97
    %v295 = vunpack.c.l.b16 %v98
    %v296 = vunpack.c.l.b16 %v99
    %v297 = vunpack.c.l.b16 %v100
    %v298 = vpack.c.b16 %v284, %v283
    %v299 = vpack.c.b16 %v286, %v285
    %v300 = vpack.c.b16 %v288, %v287
    %v301 = vpack.c.b16 %v290, %v289
    %v302 = vpack.c.b16 %v292, %v291
    %v303 = vpack.c.b16 %v294, %v293
    %v304 = vpack.c.b16 %v296, %v295
    %v305 = vpack.c.b16 %v297, %v297
    %vm313 = vcmask 941056
    %v315 = vsel %vm313, %v236, 0
    %v318 = vsel %vm313, %v237, 0
    %v321 = vsel %vm313, %v238, 0
    %v324 = vsel %vm313, %v239, 0
    %v327 = vsel %vm313, %v240, 0
    %v330 = vsel %vm313, %v241, 0
    %v333 = vsel %vm313, %v242, 0
    %v336 = vsel %vm313, %v243, 0
    %v339 = vsel %vm313, %v244, 0
    %v342 = vsel %vm313, %v245, 0
    %v345 = vsel %vm313, %v246, 0
    %v348 = vsel %vm313, %v247, 0
    %v351 = vsel %vm313, %v248, 0
    %v354 = vsel %vm313, %v249, 0
    %v357 = vsel %vm313, %v250, 0
    %v360 = vsel %vm313, %v251, 0
    %v363 = vsel %vm313, %v252, 0
    %v366 = vsel %vm313, %v253, 0
    %v369 = vsel %vm313, %v254, 0
    %v372 = vsel %vm313, %v255, 0
    %v375 = vsel %vm313, %v256, 0
    %v378 = vsel %vm313, %v257, 0
    %v381 = vsel %vm313, %v258, 0
    %v384 = vsel %vm313, %v259, 0
    %v387 = vsel %vm313, %v260, 0
    %v390 = vsel %vm313, %v261, 0
    %v393 = vsel %vm313, %v262, 0
    %v396 = vsel %vm313, %v263, 0
    %v399 = vsel %vm313, %v264, 0
    %v402 = vsel %vm313, %v265, 0
    %v405 = vsel %vm313, %v266, 0
    %v408 = vsel %vm313, %v267, 0
    %vm410 = vcmask 1040384
    %vm411 = vcmask 1041408
    %v412 = vsel %vm410, 4294967295, 65535
    %v413 = vsel %vm411, %v412, 0
    %v415 = vand.u32 %v305, %v413
    %417 = vmatprep.subr.bf16.mxu0 0
    %418 = vmatpush1.bf16.msra.mxu0 %v415
    %419 = vmatprep.subr.bf16.mxu0 0
    %420 = vmatpush1.bf16.msra.mxu0 %v304
    %421 = vmatprep.subr.bf16.mxu0 0
    %422 = vmatpush1.bf16.msra.mxu0 %v303
    %423 = vmatprep.subr.bf16.mxu0 0
    %424 = vmatpush1.bf16.msra.mxu0 %v302
    %425 = vmatprep.subr.bf16.mxu0 0
    %426 = vmatpush1.bf16.msra.mxu0 %v301
    %427 = vmatprep.subr.bf16.mxu0 0
    %428 = vmatpush1.bf16.msra.mxu0 %v300
    %429 = vmatprep.subr.bf16.mxu0 0
    %430 = vmatpush1.bf16.msra.mxu0 %v299
    %431 = vmatprep.subr.bf16.mxu0 0
    %432 = vmatpush1.bf16.msra.mxu0 %v298
    %433 = vmatprep.subr.bf16.mxu0 0
    %434 = vmatpush2.bf16.msra.mxu0 0
    %435 = vmatprep.subr.bf16.mxu0 0
    %436 = vmatpush2.bf16.msra.mxu0 0
    %437 = vmatprep.subr.bf16.mxu0 0
    %438 = vmatpush2.bf16.msra.mxu0 0
    %439 = vmatprep.subr.bf16.mxu0 0
    %440 = vmatpush2.bf16.msra.mxu0 0
    %441 = vmatprep.subr.bf16.mxu0 0
    %442 = vmatpush2.bf16.msra.mxu0 0
    %443 = vmatprep.subr.bf16.mxu0 0
    %444 = vmatpush2.bf16.msra.mxu0 0
    %445 = vmatprep.subr.bf16.mxu0 0
    %446 = vmatpush2.bf16.msra.mxu0 0
    %447 = vmatprep.subr.bf16.mxu0 0
    %448 = vmatpush2.bf16.msra.mxu0 0
    %449 = vmatprep.mubr.bf16.mxu0 0
    %450 = vmatmul.mubr.bf16.gmra.mxu0 %v315
    %v451 = vpop.f32.mrf.mxu0
    %v452 = vadd.f32 %v106, %v451
    %v453 = vpop.f32.mrf.mxu0
    %v454 = vpop.f32.mrf.mxu0
    %v455 = vadd.f32 %v106, %v454
    %v456 = vpop.f32.mrf.mxu0
    %457 = vmatprep.mubr.bf16.mxu0 0
    %458 = vmatmul.mubr.bf16.gmra.mxu0 %v318
    %v459 = vpop.f32.mrf.mxu0
    %v460 = vadd.f32 %v106, %v459
    %v461 = vpop.f32.mrf.mxu0
    %v462 = vpop.f32.mrf.mxu0
    %v463 = vadd.f32 %v106, %v462
    %v464 = vpop.f32.mrf.mxu0
    %465 = vmatprep.mubr.bf16.mxu0 0
    %466 = vmatmul.mubr.bf16.gmra.mxu0 %v321
    %v467 = vpop.f32.mrf.mxu0
    %v468 = vadd.f32 %v106, %v467
    %v469 = vpop.f32.mrf.mxu0
    %v470 = vpop.f32.mrf.mxu0
    %v471 = vadd.f32 %v106, %v470
    %v472 = vpop.f32.mrf.mxu0
    %473 = vmatprep.mubr.bf16.mxu0 0
    %474 = vmatmul.mubr.bf16.gmra.mxu0 %v324
    %v475 = vpop.f32.mrf.mxu0
    %v476 = vadd.f32 %v106, %v475
    %v477 = vpop.f32.mrf.mxu0
    %v478 = vpop.f32.mrf.mxu0
    %v479 = vadd.f32 %v106, %v478
    %v480 = vpop.f32.mrf.mxu0
    %481 = vmatprep.mubr.bf16.mxu0 0
    %482 = vmatmul.mubr.bf16.gmra.mxu0 %v327
    %v483 = vpop.f32.mrf.mxu0
    %v484 = vadd.f32 %v106, %v483
    %v485 = vpop.f32.mrf.mxu0
    %v486 = vpop.f32.mrf.mxu0
    %v487 = vadd.f32 %v106, %v486
    %v488 = vpop.f32.mrf.mxu0
    %489 = vmatprep.mubr.bf16.mxu0 0
    %490 = vmatmul.mubr.bf16.gmra.mxu0 %v330
    %v491 = vpop.f32.mrf.mxu0
    %v492 = vadd.f32 %v106, %v491
    %v493 = vpop.f32.mrf.mxu0
    %v494 = vpop.f32.mrf.mxu0
    %v495 = vadd.f32 %v106, %v494
    %v496 = vpop.f32.mrf.mxu0
    %497 = vmatprep.mubr.bf16.mxu0 0
    %498 = vmatmul.mubr.bf16.gmra.mxu0 %v333
    %v499 = vpop.f32.mrf.mxu0
    %v500 = vadd.f32 %v106, %v499
    %v501 = vpop.f32.mrf.mxu0
    %v502 = vpop.f32.mrf.mxu0
    %v503 = vadd.f32 %v106, %v502
    %v504 = vpop.f32.mrf.mxu0
    %505 = vmatprep.mubr.bf16.mxu0 0
    %506 = vmatmul.mubr.bf16.gmra.mxu0 %v336
    %v507 = vpop.f32.mrf.mxu0
    %v508 = vadd.f32 %v106, %v507
    %v509 = vpop.f32.mrf.mxu0
    %v510 = vpop.f32.mrf.mxu0
    %v511 = vadd.f32 %v106, %v510
    %v512 = vpop.f32.mrf.mxu0
    %513 = vmatprep.mubr.bf16.mxu0 0
    %514 = vmatmul.mubr.bf16.gmra.mxu0 %v339
    %v515 = vpop.f32.mrf.mxu0
    %v516 = vadd.f32 %v106, %v515
    %v517 = vpop.f32.mrf.mxu0
    %v518 = vpop.f32.mrf.mxu0
    %v519 = vadd.f32 %v106, %v518
    %v520 = vpop.f32.mrf.mxu0
    %521 = vmatprep.mubr.bf16.mxu0 0
    %522 = vmatmul.mubr.bf16.gmra.mxu0 %v342
    %v523 = vpop.f32.mrf.mxu0
    %v524 = vadd.f32 %v106, %v523
    %v525 = vpop.f32.mrf.mxu0
    %v526 = vpop.f32.mrf.mxu0
    %v527 = vadd.f32 %v106, %v526
    %v528 = vpop.f32.mrf.mxu0
    %529 = vmatprep.mubr.bf16.mxu0 0
    %530 = vmatmul.mubr.bf16.gmra.mxu0 %v345
    %v531 = vpop.f32.mrf.mxu0
    %v532 = vadd.f32 %v106, %v531
    %v533 = vpop.f32.mrf.mxu0
    %v534 = vpop.f32.mrf.mxu0
    %v535 = vadd.f32 %v106, %v534
    %v536 = vpop.f32.mrf.mxu0
    %537 = vmatprep.mubr.bf16.mxu0 0
    %538 = vmatmul.mubr.bf16.gmra.mxu0 %v348
    %v539 = vpop.f32.mrf.mxu0
    %v540 = vadd.f32 %v106, %v539
    %v541 = vpop.f32.mrf.mxu0
    %v542 = vpop.f32.mrf.mxu0
    %v543 = vadd.f32 %v106, %v542
    %v544 = vpop.f32.mrf.mxu0
    %545 = vmatprep.mubr.bf16.mxu0 0
    %546 = vmatmul.mubr.bf16.gmra.mxu0 %v351
    %v547 = vpop.f32.mrf.mxu0
    %v548 = vadd.f32 %v106, %v547
    %v549 = vpop.f32.mrf.mxu0
    %v550 = vpop.f32.mrf.mxu0
    %v551 = vadd.f32 %v106, %v550
    %v552 = vpop.f32.mrf.mxu0
    %553 = vmatprep.mubr.bf16.mxu0 0
    %554 = vmatmul.mubr.bf16.gmra.mxu0 %v354
    %v555 = vpop.f32.mrf.mxu0
    %v556 = vadd.f32 %v106, %v555
    %v557 = vpop.f32.mrf.mxu0
    %v558 = vpop.f32.mrf.mxu0
    %v559 = vadd.f32 %v106, %v558
    %v560 = vpop.f32.mrf.mxu0
    %561 = vmatprep.mubr.bf16.mxu0 0
    %562 = vmatmul.mubr.bf16.gmra.mxu0 %v357
    %v563 = vpop.f32.mrf.mxu0
    %v564 = vadd.f32 %v106, %v563
    %v565 = vpop.f32.mrf.mxu0
    %v566 = vpop.f32.mrf.mxu0
    %v567 = vadd.f32 %v106, %v566
    %v568 = vpop.f32.mrf.mxu0
    %569 = vmatprep.mubr.bf16.mxu0 0
    %570 = vmatmul.mubr.bf16.gmra.mxu0 %v360
    %v571 = vpop.f32.mrf.mxu0
    %v572 = vadd.f32 %v106, %v571
    %v573 = vpop.f32.mrf.mxu0
    %v574 = vpop.f32.mrf.mxu0
    %v575 = vadd.f32 %v106, %v574
    %v576 = vpop.f32.mrf.mxu0
    %577 = vmatprep.mubr.bf16.mxu0 0
    %578 = vmatmul.mubr.bf16.gmra.mxu0 %v363
    %v579 = vpop.f32.mrf.mxu0
    %v580 = vadd.f32 %v106, %v579
    %v581 = vpop.f32.mrf.mxu0
    %v582 = vpop.f32.mrf.mxu0
    %v583 = vadd.f32 %v106, %v582
    %v584 = vpop.f32.mrf.mxu0
    %585 = vmatprep.mubr.bf16.mxu0 0
    %586 = vmatmul.mubr.bf16.gmra.mxu0 %v366
    %v587 = vpop.f32.mrf.mxu0
    %v588 = vadd.f32 %v106, %v587
    %v589 = vpop.f32.mrf.mxu0
    %v590 = vpop.f32.mrf.mxu0
    %v591 = vadd.f32 %v106, %v590
    %v592 = vpop.f32.mrf.mxu0
    %593 = vmatprep.mubr.bf16.mxu0 0
    %594 = vmatmul.mubr.bf16.gmra.mxu0 %v369
    %v595 = vpop.f32.mrf.mxu0
    %v596 = vadd.f32 %v106, %v595
    %v597 = vpop.f32.mrf.mxu0
    %v598 = vpop.f32.mrf.mxu0
    %v599 = vadd.f32 %v106, %v598
    %v600 = vpop.f32.mrf.mxu0
    %601 = vmatprep.mubr.bf16.mxu0 0
    %602 = vmatmul.mubr.bf16.gmra.mxu0 %v372
    %v603 = vpop.f32.mrf.mxu0
    %v604 = vadd.f32 %v106, %v603
    %v605 = vpop.f32.mrf.mxu0
    %v606 = vpop.f32.mrf.mxu0
    %v607 = vadd.f32 %v106, %v606
    %v608 = vpop.f32.mrf.mxu0
    %609 = vmatprep.mubr.bf16.mxu0 0
    %610 = vmatmul.mubr.bf16.gmra.mxu0 %v375
    %v611 = vpop.f32.mrf.mxu0
    %v612 = vadd.f32 %v106, %v611
    %v613 = vpop.f32.mrf.mxu0
    %v614 = vpop.f32.mrf.mxu0
    %v615 = vadd.f32 %v106, %v614
    %v616 = vpop.f32.mrf.mxu0
    %617 = vmatprep.mubr.bf16.mxu0 0
    %618 = vmatmul.mubr.bf16.gmra.mxu0 %v378
    %v619 = vpop.f32.mrf.mxu0
    %v620 = vadd.f32 %v106, %v619
    %v621 = vpop.f32.mrf.mxu0
    %v622 = vpop.f32.mrf.mxu0
    %v623 = vadd.f32 %v106, %v622
    %v624 = vpop.f32.mrf.mxu0
    %625 = vmatprep.mubr.bf16.mxu0 0
    %626 = vmatmul.mubr.bf16.gmra.mxu0 %v381
    %v627 = vpop.f32.mrf.mxu0
    %v628 = vadd.f32 %v106, %v627
    %v629 = vpop.f32.mrf.mxu0
    %v630 = vpop.f32.mrf.mxu0
    %v631 = vadd.f32 %v106, %v630
    %v632 = vpop.f32.mrf.mxu0
    %633 = vmatprep.mubr.bf16.mxu0 0
    %634 = vmatmul.mubr.bf16.gmra.mxu0 %v384
    %v635 = vpop.f32.mrf.mxu0
    %v636 = vadd.f32 %v106, %v635
    %v637 = vpop.f32.mrf.mxu0
    %v638 = vpop.f32.mrf.mxu0
    %v639 = vadd.f32 %v106, %v638
    %v640 = vpop.f32.mrf.mxu0
    %641 = vmatprep.mubr.bf16.mxu0 0
    %642 = vmatmul.mubr.bf16.gmra.mxu0 %v387
    %v643 = vpop.f32.mrf.mxu0
    %v644 = vadd.f32 %v106, %v643
    %v645 = vpop.f32.mrf.mxu0
    %v646 = vpop.f32.mrf.mxu0
    %v647 = vadd.f32 %v106, %v646
    %v648 = vpop.f32.mrf.mxu0
    %649 = vmatprep.mubr.bf16.mxu0 0
    %650 = vmatmul.mubr.bf16.gmra.mxu0 %v390
    %v651 = vpop.f32.mrf.mxu0
    %v652 = vadd.f32 %v106, %v651
    %v653 = vpop.f32.mrf.mxu0
    %v654 = vpop.f32.mrf.mxu0
    %v655 = vadd.f32 %v106, %v654
    %v656 = vpop.f32.mrf.mxu0
    %657 = vmatprep.mubr.bf16.mxu0 0
    %658 = vmatmul.mubr.bf16.gmra.mxu0 %v393
    %v659 = vpop.f32.mrf.mxu0
    %v660 = vadd.f32 %v106, %v659
    %v661 = vpop.f32.mrf.mxu0
    %v662 = vpop.f32.mrf.mxu0
    %v663 = vadd.f32 %v106, %v662
    %v664 = vpop.f32.mrf.mxu0
    %665 = vmatprep.mubr.bf16.mxu0 0
    %666 = vmatmul.mubr.bf16.gmra.mxu0 %v396
    %v667 = vpop.f32.mrf.mxu0
    %v668 = vadd.f32 %v106, %v667
    %v669 = vpop.f32.mrf.mxu0
    %v670 = vpop.f32.mrf.mxu0
    %v671 = vadd.f32 %v106, %v670
    %v672 = vpop.f32.mrf.mxu0
    %673 = vmatprep.mubr.bf16.mxu0 0
    %674 = vmatmul.mubr.bf16.gmra.mxu0 %v399
    %v675 = vpop.f32.mrf.mxu0
    %v676 = vadd.f32 %v106, %v675
    %v677 = vpop.f32.mrf.mxu0
    %v678 = vpop.f32.mrf.mxu0
    %v679 = vadd.f32 %v106, %v678
    %v680 = vpop.f32.mrf.mxu0
    %681 = vmatprep.mubr.bf16.mxu0 0
    %682 = vmatmul.mubr.bf16.gmra.mxu0 %v402
    %v683 = vpop.f32.mrf.mxu0
    %v684 = vadd.f32 %v106, %v683
    %v685 = vpop.f32.mrf.mxu0
    %v686 = vpop.f32.mrf.mxu0
    %v687 = vadd.f32 %v106, %v686
    %v688 = vpop.f32.mrf.mxu0
    %689 = vmatprep.mubr.bf16.mxu0 0
    %690 = vmatmul.mubr.bf16.gmra.mxu0 %v405
    %v691 = vpop.f32.mrf.mxu0
    %v692 = vadd.f32 %v106, %v691
    %v693 = vpop.f32.mrf.mxu0
    %v694 = vpop.f32.mrf.mxu0
    %v695 = vadd.f32 %v106, %v694
    %v696 = vpop.f32.mrf.mxu0
    %697 = vmatprep.mubr.bf16.mxu0 0
    %698 = vmatmul.mubr.bf16.gmra.mxu0 %v408
    %v699 = vpop.f32.mrf.mxu0
    %v700 = vadd.f32 %v106, %v699
    %v701 = vpop.f32.mrf.mxu0
    %v702 = vpop.f32.mrf.mxu0
    %v703 = vadd.f32 %v106, %v702
    %v704 = vpop.f32.mrf.mxu0
    %705 = vdwg.mxu0
    %706 = vadd.xlane.f32.xlu0 %v452
    %v707 = vpop.xlane.xlu0 %706
    %708 = vadd.xlane.f32.xlu0 %v455
    %v709 = vpop.xlane.xlu0 %708
    %710 = vadd.xlane.f32.xlu0 %v460
    %v711 = vpop.xlane.xlu0 %710
    %712 = vadd.xlane.f32.xlu0 %v463
    %v713 = vpop.xlane.xlu0 %712
    %714 = vadd.xlane.f32.xlu0 %v468
    %v715 = vpop.xlane.xlu0 %714
    %716 = vadd.xlane.f32.xlu0 %v471
    %v717 = vpop.xlane.xlu0 %716
    %718 = vadd.xlane.f32.xlu0 %v476
    %v719 = vpop.xlane.xlu0 %718
    %720 = vadd.xlane.f32.xlu0 %v479
    %v721 = vpop.xlane.xlu0 %720
    %722 = vadd.xlane.f32.xlu0 %v484
    %v723 = vpop.xlane.xlu0 %722
    %724 = vadd.xlane.f32.xlu0 %v487
    %v725 = vpop.xlane.xlu0 %724
    %726 = vadd.xlane.f32.xlu0 %v492
    %v727 = vpop.xlane.xlu0 %726
    %728 = vadd.xlane.f32.xlu0 %v495
    %v729 = vpop.xlane.xlu0 %728
    %730 = vadd.xlane.f32.xlu0 %v500
    %v731 = vpop.xlane.xlu0 %730
    %732 = vadd.xlane.f32.xlu0 %v503
    %v733 = vpop.xlane.xlu0 %732
    %734 = vadd.xlane.f32.xlu0 %v508
    %v735 = vpop.xlane.xlu0 %734
    %736 = vadd.xlane.f32.xlu0 %v511
    %v737 = vpop.xlane.xlu0 %736
    %738 = vadd.xlane.f32.xlu0 %v516
    %v739 = vpop.xlane.xlu0 %738
    %740 = vadd.xlane.f32.xlu0 %v519
    %v741 = vpop.xlane.xlu0 %740
    %742 = vadd.xlane.f32.xlu0 %v524
    %v743 = vpop.xlane.xlu0 %742
    %744 = vadd.xlane.f32.xlu0 %v527
    %v745 = vpop.xlane.xlu0 %744
    %746 = vadd.xlane.f32.xlu0 %v532
    %v747 = vpop.xlane.xlu0 %746
    %748 = vadd.xlane.f32.xlu0 %v535
    %v749 = vpop.xlane.xlu0 %748
    %750 = vadd.xlane.f32.xlu0 %v540
    %v751 = vpop.xlane.xlu0 %750
    %752 = vadd.xlane.f32.xlu0 %v543
    %v753 = vpop.xlane.xlu0 %752
    %754 = vadd.xlane.f32.xlu0 %v548
    %v755 = vpop.xlane.xlu0 %754
    %756 = vadd.xlane.f32.xlu0 %v551
    %v757 = vpop.xlane.xlu0 %756
    %758 = vadd.xlane.f32.xlu0 %v556
    %v759 = vpop.xlane.xlu0 %758
    %760 = vadd.xlane.f32.xlu0 %v559
    %v761 = vpop.xlane.xlu0 %760
    %762 = vadd.xlane.f32.xlu0 %v564
    %v763 = vpop.xlane.xlu0 %762
    %764 = vadd.xlane.f32.xlu0 %v567
    %v765 = vpop.xlane.xlu0 %764
    %766 = vadd.xlane.f32.xlu0 %v572
    %v767 = vpop.xlane.xlu0 %766
    %768 = vadd.xlane.f32.xlu0 %v575
    %v769 = vpop.xlane.xlu0 %768
    %770 = vadd.xlane.f32.xlu0 %v580
    %v771 = vpop.xlane.xlu0 %770
    %772 = vadd.xlane.f32.xlu0 %v583
    %v773 = vpop.xlane.xlu0 %772
    %774 = vadd.xlane.f32.xlu0 %v588
    %v775 = vpop.xlane.xlu0 %774
    %776 = vadd.xlane.f32.xlu0 %v591
    %v777 = vpop.xlane.xlu0 %776
    %778 = vadd.xlane.f32.xlu0 %v596
    %v779 = vpop.xlane.xlu0 %778
    %780 = vadd.xlane.f32.xlu0 %v599
    %v781 = vpop.xlane.xlu0 %780
    %782 = vadd.xlane.f32.xlu0 %v604
    %v783 = vpop.xlane.xlu0 %782
    %784 = vadd.xlane.f32.xlu0 %v607
    %v785 = vpop.xlane.xlu0 %784
    %786 = vadd.xlane.f32.xlu0 %v612
    %v787 = vpop.xlane.xlu0 %786
    %788 = vadd.xlane.f32.xlu0 %v615
    %v789 = vpop.xlane.xlu0 %788
    %790 = vadd.xlane.f32.xlu0 %v620
    %v791 = vpop.xlane.xlu0 %790
    %792 = vadd.xlane.f32.xlu0 %v623
    %v793 = vpop.xlane.xlu0 %792
    %794 = vadd.xlane.f32.xlu0 %v628
    %v795 = vpop.xlane.xlu0 %794
    %796 = vadd.xlane.f32.xlu0 %v631
    %v797 = vpop.xlane.xlu0 %796
    %798 = vadd.xlane.f32.xlu0 %v636
    %v799 = vpop.xlane.xlu0 %798
    %800 = vadd.xlane.f32.xlu0 %v639
    %v801 = vpop.xlane.xlu0 %800
    %802 = vadd.xlane.f32.xlu0 %v644
    %v803 = vpop.xlane.xlu0 %802
    %804 = vadd.xlane.f32.xlu0 %v647
    %v805 = vpop.xlane.xlu0 %804
    %806 = vadd.xlane.f32.xlu0 %v652
    %v807 = vpop.xlane.xlu0 %806
    %808 = vadd.xlane.f32.xlu0 %v655
    %v809 = vpop.xlane.xlu0 %808
    %810 = vadd.xlane.f32.xlu0 %v660
    %v811 = vpop.xlane.xlu0 %810
    %812 = vadd.xlane.f32.xlu0 %v663
    %v813 = vpop.xlane.xlu0 %812
    %814 = vadd.xlane.f32.xlu0 %v668
    %v815 = vpop.xlane.xlu0 %814
    %816 = vadd.xlane.f32.xlu0 %v671
    %v817 = vpop.xlane.xlu0 %816
    %818 = vadd.xlane.f32.xlu0 %v676
    %v819 = vpop.xlane.xlu0 %818
    %820 = vadd.xlane.f32.xlu0 %v679
    %v821 = vpop.xlane.xlu0 %820
    %822 = vadd.xlane.f32.xlu0 %v684
    %v823 = vpop.xlane.xlu0 %822
    %824 = vadd.xlane.f32.xlu0 %v687
    %v825 = vpop.xlane.xlu0 %824
    %826 = vadd.xlane.f32.xlu0 %v692
    %v827 = vpop.xlane.xlu0 %826
    %828 = vadd.xlane.f32.xlu0 %v695
    %v829 = vpop.xlane.xlu0 %828
    %830 = vadd.xlane.f32.xlu0 %v700
    %v831 = vpop.xlane.xlu0 %830
    %832 = vadd.xlane.f32.xlu0 %v703
    %v833 = vpop.xlane.xlu0 %832
    %v834 = vrcp.pop 128.0
    %v835 = vmul.f32 %v707, %v834
    %v836 = vmul.f32 %v709, %v834
    %v837 = vmul.f32 %v711, %v834
    %v838 = vmul.f32 %v713, %v834
    %v839 = vmul.f32 %v715, %v834
    %v840 = vmul.f32 %v717, %v834
    %v841 = vmul.f32 %v719, %v834
    %v842 = vmul.f32 %v721, %v834
    %v843 = vmul.f32 %v723, %v834
    %v844 = vmul.f32 %v725, %v834
    %v845 = vmul.f32 %v727, %v834
    %v846 = vmul.f32 %v729, %v834
    %v847 = vmul.f32 %v731, %v834
    %v848 = vmul.f32 %v733, %v834
    %v849 = vmul.f32 %v735, %v834
    %v850 = vmul.f32 %v737, %v834
    %v851 = vmul.f32 %v739, %v834
    %v852 = vmul.f32 %v741, %v834
    %v853 = vmul.f32 %v743, %v834
    %v854 = vmul.f32 %v745, %v834
    %v855 = vmul.f32 %v747, %v834
    %v856 = vmul.f32 %v749, %v834
    %v857 = vmul.f32 %v751, %v834
    %v858 = vmul.f32 %v753, %v834
    %v859 = vmul.f32 %v755, %v834
    %v860 = vmul.f32 %v757, %v834
    %v861 = vmul.f32 %v759, %v834
    %v862 = vmul.f32 %v761, %v834
    %v863 = vmul.f32 %v763, %v834
    %v864 = vmul.f32 %v765, %v834
    %v865 = vmul.f32 %v767, %v834
    %v866 = vmul.f32 %v769, %v834
    %v867 = vmul.f32 %v771, %v834
    %v868 = vmul.f32 %v773, %v834
    %v869 = vmul.f32 %v775, %v834
    %v870 = vmul.f32 %v777, %v834
    %v871 = vmul.f32 %v779, %v834
    %v872 = vmul.f32 %v781, %v834
    %v873 = vmul.f32 %v783, %v834
    %v874 = vmul.f32 %v785, %v834
    %v875 = vmul.f32 %v787, %v834
    %v876 = vmul.f32 %v789, %v834
    %v877 = vmul.f32 %v791, %v834
    %v878 = vmul.f32 %v793, %v834
    %v879 = vmul.f32 %v795, %v834
    %v880 = vmul.f32 %v797, %v834
    %v881 = vmul.f32 %v799, %v834
    %v882 = vmul.f32 %v801, %v834
    %v883 = vmul.f32 %v803, %v834
    %v884 = vmul.f32 %v805, %v834
    %v885 = vmul.f32 %v807, %v834
    %v886 = vmul.f32 %v809, %v834
    %v887 = vmul.f32 %v811, %v834
    %v888 = vmul.f32 %v813, %v834
    %v889 = vmul.f32 %v815, %v834
    %v890 = vmul.f32 %v817, %v834
    %v891 = vmul.f32 %v819, %v834
    %v892 = vmul.f32 %v821, %v834
    %v893 = vmul.f32 %v823, %v834
    %v894 = vmul.f32 %v825, %v834
    %v895 = vmul.f32 %v827, %v834
    %v896 = vmul.f32 %v829, %v834
    %v897 = vmul.f32 %v831, %v834
    %v898 = vmul.f32 %v833, %v834
    %v899 = vsub.f32 %v452, %v835
    %v900 = vsub.f32 %v455, %v836
    %v901 = vsub.f32 %v460, %v837
    %v902 = vsub.f32 %v463, %v838
    %v903 = vsub.f32 %v468, %v839
    %v904 = vsub.f32 %v471, %v840
    %v905 = vsub.f32 %v476, %v841
    %v906 = vsub.f32 %v479, %v842
    %v907 = vsub.f32 %v484, %v843
    %v908 = vsub.f32 %v487, %v844
    %v909 = vsub.f32 %v492, %v845
    %v910 = vsub.f32 %v495, %v846
    %v911 = vsub.f32 %v500, %v847
    %v912 = vsub.f32 %v503, %v848
    %v913 = vsub.f32 %v508, %v849
    %v914 = vsub.f32 %v511, %v850
    %v915 = vsub.f32 %v516, %v851
    %v916 = vsub.f32 %v519, %v852
    %v917 = vsub.f32 %v524, %v853
    %v918 = vsub.f32 %v527, %v854
    %v919 = vsub.f32 %v532, %v855
    %v920 = vsub.f32 %v535, %v856
    %v921 = vsub.f32 %v540, %v857
    %v922 = vsub.f32 %v543, %v858
    %v923 = vsub.f32 %v548, %v859
    %v924 = vsub.f32 %v551, %v860
    %v925 = vsub.f32 %v556, %v861
    %v926 = vsub.f32 %v559, %v862
    %v927 = vsub.f32 %v564, %v863
    %v928 = vsub.f32 %v567, %v864
    %v929 = vsub.f32 %v572, %v865
    %v930 = vsub.f32 %v575, %v866
    %v931 = vsub.f32 %v580, %v867
    %v932 = vsub.f32 %v583, %v868
    %v933 = vsub.f32 %v588, %v869
    %v934 = vsub.f32 %v591, %v870
    %v935 = vsub.f32 %v596, %v871
    %v936 = vsub.f32 %v599, %v872
    %v937 = vsub.f32 %v604, %v873
    %v938 = vsub.f32 %v607, %v874
    %v939 = vsub.f32 %v612, %v875
    %v940 = vsub.f32 %v615, %v876
    %v941 = vsub.f32 %v620, %v877
    %v942 = vsub.f32 %v623, %v878
    %v943 = vsub.f32 %v628, %v879
    %v944 = vsub.f32 %v631, %v880
    %v945 = vsub.f32 %v636, %v881
    %v946 = vsub.f32 %v639, %v882
    %v947 = vsub.f32 %v644, %v883
    %v948 = vsub.f32 %v647, %v884
    %v949 = vsub.f32 %v652, %v885
    %v950 = vsub.f32 %v655, %v886
    %v951 = vsub.f32 %v660, %v887
    %v952 = vsub.f32 %v663, %v888
    %v953 = vsub.f32 %v668, %v889
    %v954 = vsub.f32 %v671, %v890
    %v955 = vsub.f32 %v676, %v891
    %v956 = vsub.f32 %v679, %v892
    %v957 = vsub.f32 %v684, %v893
    %v958 = vsub.f32 %v687, %v894
    %v959 = vsub.f32 %v692, %v895
    %v960 = vsub.f32 %v695, %v896
    %v961 = vsub.f32 %v700, %v897
    %v962 = vsub.f32 %v703, %v898
    %v963 = vmul.f32 %v899, %v899
    %v964 = vmul.f32 %v900, %v900
    %v965 = vmul.f32 %v901, %v901
    %v966 = vmul.f32 %v902, %v902
    %v967 = vmul.f32 %v903, %v903
    %v968 = vmul.f32 %v904, %v904
    %v969 = vmul.f32 %v905, %v905
    %v970 = vmul.f32 %v906, %v906
    %v971 = vmul.f32 %v907, %v907
    %v972 = vmul.f32 %v908, %v908
    %v973 = vmul.f32 %v909, %v909
    %v974 = vmul.f32 %v910, %v910
    %v975 = vmul.f32 %v911, %v911
    %v976 = vmul.f32 %v912, %v912
    %v977 = vmul.f32 %v913, %v913
    %v978 = vmul.f32 %v914, %v914
    %v979 = vmul.f32 %v915, %v915
    %v980 = vmul.f32 %v916, %v916
    %v981 = vmul.f32 %v917, %v917
    %v982 = vmul.f32 %v918, %v918
    %v983 = vmul.f32 %v919, %v919
    %v984 = vmul.f32 %v920, %v920
    %v985 = vmul.f32 %v921, %v921
    %v986 = vmul.f32 %v922, %v922
    %v987 = vmul.f32 %v923, %v923
    %v988 = vmul.f32 %v924, %v924
    %v989 = vmul.f32 %v925, %v925
    %v990 = vmul.f32 %v926, %v926
    %v991 = vmul.f32 %v927, %v927
    %v992 = vmul.f32 %v928, %v928
    %v993 = vmul.f32 %v929, %v929
    %v994 = vmul.f32 %v930, %v930
    %v995 = vmul.f32 %v931, %v931
    %v996 = vmul.f32 %v932, %v932
    %v997 = vmul.f32 %v933, %v933
    %v998 = vmul.f32 %v934, %v934
    %v999 = vmul.f32 %v935, %v935
    %v1000 = vmul.f32 %v936, %v936
    %v1001 = vmul.f32 %v937, %v937
    %v1002 = vmul.f32 %v938, %v938
    %v1003 = vmul.f32 %v939, %v939
    %v1004 = vmul.f32 %v940, %v940
    %v1005 = vmul.f32 %v941, %v941
    %v1006 = vmul.f32 %v942, %v942
    %v1007 = vmul.f32 %v943, %v943
    %v1008 = vmul.f32 %v944, %v944
    %v1009 = vmul.f32 %v945, %v945
    %v1010 = vmul.f32 %v946, %v946
    %v1011 = vmul.f32 %v947, %v947
    %v1012 = vmul.f32 %v948, %v948
    %v1013 = vmul.f32 %v949, %v949
    %v1014 = vmul.f32 %v950, %v950
    %v1015 = vmul.f32 %v951, %v951
    %v1016 = vmul.f32 %v952, %v952
    %v1017 = vmul.f32 %v953, %v953
    %v1018 = vmul.f32 %v954, %v954
    %v1019 = vmul.f32 %v955, %v955
    %v1020 = vmul.f32 %v956, %v956
    %v1021 = vmul.f32 %v957, %v957
    %v1022 = vmul.f32 %v958, %v958
    %v1023 = vmul.f32 %v959, %v959
    %v1024 = vmul.f32 %v960, %v960
    %v1025 = vmul.f32 %v961, %v961
    %v1026 = vmul.f32 %v962, %v962
    %1027 = vadd.xlane.f32.xlu0 %v963
    %v1028 = vpop.xlane.xlu0 %1027
    %1029 = vadd.xlane.f32.xlu0 %v964
    %v1030 = vpop.xlane.xlu0 %1029
    %1031 = vadd.xlane.f32.xlu0 %v965
    %v1032 = vpop.xlane.xlu0 %1031
    %1033 = vadd.xlane.f32.xlu0 %v966
    %v1034 = vpop.xlane.xlu0 %1033
    %1035 = vadd.xlane.f32.xlu0 %v967
    %v1036 = vpop.xlane.xlu0 %1035
    %1037 = vadd.xlane.f32.xlu0 %v968
    %v1038 = vpop.xlane.xlu0 %1037
    %1039 = vadd.xlane.f32.xlu0 %v969
    %v1040 = vpop.xlane.xlu0 %1039
    %1041 = vadd.xlane.f32.xlu0 %v970
    %v1042 = vpop.xlane.xlu0 %1041
    %1043 = vadd.xlane.f32.xlu0 %v971
    %v1044 = vpop.xlane.xlu0 %1043
    %1045 = vadd.xlane.f32.xlu0 %v972
    %v1046 = vpop.xlane.xlu0 %1045
    %1047 = vadd.xlane.f32.xlu0 %v973
    %v1048 = vpop.xlane.xlu0 %1047
    %1049 = vadd.xlane.f32.xlu0 %v974
    %v1050 = vpop.xlane.xlu0 %1049
    %1051 = vadd.xlane.f32.xlu0 %v975
    %v1052 = vpop.xlane.xlu0 %1051
    %1053 = vadd.xlane.f32.xlu0 %v976
    %v1054 = vpop.xlane.xlu0 %1053
    %1055 = vadd.xlane.f32.xlu0 %v977
    %v1056 = vpop.xlane.xlu0 %1055
    %1057 = vadd.xlane.f32.xlu0 %v978
    %v1058 = vpop.xlane.xlu0 %1057
    %1059 = vadd.xlane.f32.xlu0 %v979
    %v1060 = vpop.xlane.xlu0 %1059
    %1061 = vadd.xlane.f32.xlu0 %v980
    %v1062 = vpop.xlane.xlu0 %1061
    %1063 = vadd.xlane.f32.xlu0 %v981
    %v1064 = vpop.xlane.xlu0 %1063
    %1065 = vadd.xlane.f32.xlu0 %v982
    %v1066 = vpop.xlane.xlu0 %1065
    %1067 = vadd.xlane.f32.xlu0 %v983
    %v1068 = vpop.xlane.xlu0 %1067
    %1069 = vadd.xlane.f32.xlu0 %v984
    %v1070 = vpop.xlane.xlu0 %1069
    %1071 = vadd.xlane.f32.xlu0 %v985
    %v1072 = vpop.xlane.xlu0 %1071
    %1073 = vadd.xlane.f32.xlu0 %v986
    %v1074 = vpop.xlane.xlu0 %1073
    %1075 = vadd.xlane.f32.xlu0 %v987
    %v1076 = vpop.xlane.xlu0 %1075
    %1077 = vadd.xlane.f32.xlu0 %v988
    %v1078 = vpop.xlane.xlu0 %1077
    %1079 = vadd.xlane.f32.xlu0 %v989
    %v1080 = vpop.xlane.xlu0 %1079
    %1081 = vadd.xlane.f32.xlu0 %v990
    %v1082 = vpop.xlane.xlu0 %1081
    %1083 = vadd.xlane.f32.xlu0 %v991
    %v1084 = vpop.xlane.xlu0 %1083
    %1085 = vadd.xlane.f32.xlu0 %v992
    %v1086 = vpop.xlane.xlu0 %1085
    %1087 = vadd.xlane.f32.xlu0 %v993
    %v1088 = vpop.xlane.xlu0 %1087
    %1089 = vadd.xlane.f32.xlu0 %v994
    %v1090 = vpop.xlane.xlu0 %1089
    %1091 = vadd.xlane.f32.xlu0 %v995
    %v1092 = vpop.xlane.xlu0 %1091
    %1093 = vadd.xlane.f32.xlu0 %v996
    %v1094 = vpop.xlane.xlu0 %1093
    %1095 = vadd.xlane.f32.xlu0 %v997
    %v1096 = vpop.xlane.xlu0 %1095
    %1097 = vadd.xlane.f32.xlu0 %v998
    %v1098 = vpop.xlane.xlu0 %1097
    %1099 = vadd.xlane.f32.xlu0 %v999
    %v1100 = vpop.xlane.xlu0 %1099
    %1101 = vadd.xlane.f32.xlu0 %v1000
    %v1102 = vpop.xlane.xlu0 %1101
    %1103 = vadd.xlane.f32.xlu0 %v1001
    %v1104 = vpop.xlane.xlu0 %1103
    %1105 = vadd.xlane.f32.xlu0 %v1002
    %v1106 = vpop.xlane.xlu0 %1105
    %1107 = vadd.xlane.f32.xlu0 %v1003
    %v1108 = vpop.xlane.xlu0 %1107
    %1109 = vadd.xlane.f32.xlu0 %v1004
    %v1110 = vpop.xlane.xlu0 %1109
    %1111 = vadd.xlane.f32.xlu0 %v1005
    %v1112 = vpop.xlane.xlu0 %1111
    %1113 = vadd.xlane.f32.xlu0 %v1006
    %v1114 = vpop.xlane.xlu0 %1113
    %1115 = vadd.xlane.f32.xlu0 %v1007
    %v1116 = vpop.xlane.xlu0 %1115
    %1117 = vadd.xlane.f32.xlu0 %v1008
    %v1118 = vpop.xlane.xlu0 %1117
    %1119 = vadd.xlane.f32.xlu0 %v1009
    %v1120 = vpop.xlane.xlu0 %1119
    %1121 = vadd.xlane.f32.xlu0 %v1010
    %v1122 = vpop.xlane.xlu0 %1121
    %1123 = vadd.xlane.f32.xlu0 %v1011
    %v1124 = vpop.xlane.xlu0 %1123
    %1125 = vadd.xlane.f32.xlu0 %v1012
    %v1126 = vpop.xlane.xlu0 %1125
    %1127 = vadd.xlane.f32.xlu0 %v1013
    %v1128 = vpop.xlane.xlu0 %1127
    %1129 = vadd.xlane.f32.xlu0 %v1014
    %v1130 = vpop.xlane.xlu0 %1129
    %1131 = vadd.xlane.f32.xlu0 %v1015
    %v1132 = vpop.xlane.xlu0 %1131
    %1133 = vadd.xlane.f32.xlu0 %v1016
    %v1134 = vpop.xlane.xlu0 %1133
    %1135 = vadd.xlane.f32.xlu0 %v1017
    %v1136 = vpop.xlane.xlu0 %1135
    %1137 = vadd.xlane.f32.xlu0 %v1018
    %v1138 = vpop.xlane.xlu0 %1137
    %1139 = vadd.xlane.f32.xlu0 %v1019
    %v1140 = vpop.xlane.xlu0 %1139
    %1141 = vadd.xlane.f32.xlu0 %v1020
    %v1142 = vpop.xlane.xlu0 %1141
    %1143 = vadd.xlane.f32.xlu0 %v1021
    %v1144 = vpop.xlane.xlu0 %1143
    %1145 = vadd.xlane.f32.xlu0 %v1022
    %v1146 = vpop.xlane.xlu0 %1145
    %1147 = vadd.xlane.f32.xlu0 %v1023
    %v1148 = vpop.xlane.xlu0 %1147
    %1149 = vadd.xlane.f32.xlu0 %v1024
    %v1150 = vpop.xlane.xlu0 %1149
    %1151 = vadd.xlane.f32.xlu0 %v1025
    %v1152 = vpop.xlane.xlu0 %1151
    %1153 = vadd.xlane.f32.xlu0 %v1026
    %v1154 = vpop.xlane.xlu0 %1153
    %v1155 = vmul.f32 %v1028, 0.007874016
    %v1156 = vmul.f32 %v1030, 0.007874016
    %v1157 = vmul.f32 %v1032, 0.007874016
    %v1158 = vmul.f32 %v1034, 0.007874016
    %v1159 = vmul.f32 %v1036, 0.007874016
    %v1160 = vmul.f32 %v1038, 0.007874016
    %v1161 = vmul.f32 %v1040, 0.007874016
    %v1162 = vmul.f32 %v1042, 0.007874016
    %v1163 = vmul.f32 %v1044, 0.007874016
    %v1164 = vmul.f32 %v1046, 0.007874016
    %v1165 = vmul.f32 %v1048, 0.007874016
    %v1166 = vmul.f32 %v1050, 0.007874016
    %v1167 = vmul.f32 %v1052, 0.007874016
    %v1168 = vmul.f32 %v1054, 0.007874016
    %v1169 = vmul.f32 %v1056, 0.007874016
    %v1170 = vmul.f32 %v1058, 0.007874016
    %v1171 = vmul.f32 %v1060, 0.007874016
    %v1172 = vmul.f32 %v1062, 0.007874016
    %v1173 = vmul.f32 %v1064, 0.007874016
    %v1174 = vmul.f32 %v1066, 0.007874016
    %v1175 = vmul.f32 %v1068, 0.007874016
    %v1176 = vmul.f32 %v1070, 0.007874016
    %v1177 = vmul.f32 %v1072, 0.007874016
    %v1178 = vmul.f32 %v1074, 0.007874016
    %v1179 = vmul.f32 %v1076, 0.007874016
    %v1180 = vmul.f32 %v1078, 0.007874016
    %v1181 = vmul.f32 %v1080, 0.007874016
    %v1182 = vmul.f32 %v1082, 0.007874016
    %v1183 = vmul.f32 %v1084, 0.007874016
    %v1184 = vmul.f32 %v1086, 0.007874016
    %v1185 = vmul.f32 %v1088, 0.007874016
    %v1186 = vmul.f32 %v1090, 0.007874016
    %v1187 = vmul.f32 %v1092, 0.007874016
    %v1188 = vmul.f32 %v1094, 0.007874016
    %v1189 = vmul.f32 %v1096, 0.007874016
    %v1190 = vmul.f32 %v1098, 0.007874016
    %v1191 = vmul.f32 %v1100, 0.007874016
    %v1192 = vmul.f32 %v1102, 0.007874016
    %v1193 = vmul.f32 %v1104, 0.007874016
    %v1194 = vmul.f32 %v1106, 0.007874016
    %v1195 = vmul.f32 %v1108, 0.007874016
    %v1196 = vmul.f32 %v1110, 0.007874016
    %v1197 = vmul.f32 %v1112, 0.007874016
    %v1198 = vmul.f32 %v1114, 0.007874016
    %v1199 = vmul.f32 %v1116, 0.007874016
    %v1200 = vmul.f32 %v1118, 0.007874016
    %v1201 = vmul.f32 %v1120, 0.007874016
    %v1202 = vmul.f32 %v1122, 0.007874016
    %v1203 = vmul.f32 %v1124, 0.007874016
    %v1204 = vmul.f32 %v1126, 0.007874016
    %v1205 = vmul.f32 %v1128, 0.007874016
    %v1206 = vmul.f32 %v1130, 0.007874016
    %v1207 = vmul.f32 %v1132, 0.007874016
    %v1208 = vmul.f32 %v1134, 0.007874016
    %v1209 = vmul.f32 %v1136, 0.007874016
    %v1210 = vmul.f32 %v1138, 0.007874016
    %v1211 = vmul.f32 %v1140, 0.007874016
    %v1212 = vmul.f32 %v1142, 0.007874016
    %v1213 = vmul.f32 %v1144, 0.007874016
    %v1214 = vmul.f32 %v1146, 0.007874016
    %v1215 = vmul.f32 %v1148, 0.007874016
    %v1216 = vmul.f32 %v1150, 0.007874016
    %v1217 = vmul.f32 %v1152, 0.007874016
    %v1218 = vmul.f32 %v1154, 0.007874016
    %v1219 = vadd.f32 %v1155, 1e-06
    %v1220 = vadd.f32 %v1156, 1e-06
    %v1221 = vadd.f32 %v1157, 1e-06
    %v1222 = vadd.f32 %v1158, 1e-06
    %v1223 = vadd.f32 %v1159, 1e-06
    %v1224 = vadd.f32 %v1160, 1e-06
    %v1225 = vadd.f32 %v1161, 1e-06
    %v1226 = vadd.f32 %v1162, 1e-06
    %v1227 = vadd.f32 %v1163, 1e-06
    %v1228 = vadd.f32 %v1164, 1e-06
    %v1229 = vadd.f32 %v1165, 1e-06
    %v1230 = vadd.f32 %v1166, 1e-06
    %v1231 = vadd.f32 %v1167, 1e-06
    %v1232 = vadd.f32 %v1168, 1e-06
    %v1233 = vadd.f32 %v1169, 1e-06
    %v1234 = vadd.f32 %v1170, 1e-06
    %v1235 = vadd.f32 %v1171, 1e-06
    %v1236 = vadd.f32 %v1172, 1e-06
    %v1237 = vadd.f32 %v1173, 1e-06
    %v1238 = vadd.f32 %v1174, 1e-06
    %v1239 = vadd.f32 %v1175, 1e-06
    %v1240 = vadd.f32 %v1176, 1e-06
    %v1241 = vadd.f32 %v1177, 1e-06
    %v1242 = vadd.f32 %v1178, 1e-06
    %v1243 = vadd.f32 %v1179, 1e-06
    %v1244 = vadd.f32 %v1180, 1e-06
    %v1245 = vadd.f32 %v1181, 1e-06
    %v1246 = vadd.f32 %v1182, 1e-06
    %v1247 = vadd.f32 %v1183, 1e-06
    %v1248 = vadd.f32 %v1184, 1e-06
    %v1249 = vadd.f32 %v1185, 1e-06
    %v1250 = vadd.f32 %v1186, 1e-06
    %v1251 = vadd.f32 %v1187, 1e-06
    %v1252 = vadd.f32 %v1188, 1e-06
    %v1253 = vadd.f32 %v1189, 1e-06
    %v1254 = vadd.f32 %v1190, 1e-06
    %v1255 = vadd.f32 %v1191, 1e-06
    %v1256 = vadd.f32 %v1192, 1e-06
    %v1257 = vadd.f32 %v1193, 1e-06
    %v1258 = vadd.f32 %v1194, 1e-06
    %v1259 = vadd.f32 %v1195, 1e-06
    %v1260 = vadd.f32 %v1196, 1e-06
    %v1261 = vadd.f32 %v1197, 1e-06
    %v1262 = vadd.f32 %v1198, 1e-06
    %v1263 = vadd.f32 %v1199, 1e-06
    %v1264 = vadd.f32 %v1200, 1e-06
    %v1265 = vadd.f32 %v1201, 1e-06
    %v1266 = vadd.f32 %v1202, 1e-06
    %v1267 = vadd.f32 %v1203, 1e-06
    %v1268 = vadd.f32 %v1204, 1e-06
    %v1269 = vadd.f32 %v1205, 1e-06
    %v1270 = vadd.f32 %v1206, 1e-06
    %v1271 = vadd.f32 %v1207, 1e-06
    %v1272 = vadd.f32 %v1208, 1e-06
    %v1273 = vadd.f32 %v1209, 1e-06
    %v1274 = vadd.f32 %v1210, 1e-06
    %v1275 = vadd.f32 %v1211, 1e-06
    %v1276 = vadd.f32 %v1212, 1e-06
    %v1277 = vadd.f32 %v1213, 1e-06
    %v1278 = vadd.f32 %v1214, 1e-06
    %v1279 = vadd.f32 %v1215, 1e-06
    %v1280 = vadd.f32 %v1216, 1e-06
    %v1281 = vadd.f32 %v1217, 1e-06
    %v1282 = vadd.f32 %v1218, 1e-06
    %v1283 = vrsqrt.pop %v1219
    %v1284 = vmul.f32 %v1219, %v1283
    %vm1285 = vcmp.eq.f32.partialorder %v1219, inf
    %v1286 = vsel %vm1285, %v1219, %v1284
    %vm1287 = vcmp.eq.f32.partialorder %v1219, 0.0
    %v1288 = vand.u32 %v1219, 2147483648
    %v1289 = vsel %vm1287, %v1288, %v1286
    %v1290 = vrsqrt.pop %v1220
    %v1291 = vmul.f32 %v1220, %v1290
    %vm1292 = vcmp.eq.f32.partialorder %v1220, inf
    %v1293 = vsel %vm1292, %v1220, %v1291
    %vm1294 = vcmp.eq.f32.partialorder %v1220, 0.0
    %v1295 = vand.u32 %v1220, 2147483648
    %v1296 = vsel %vm1294, %v1295, %v1293
    %v1297 = vrsqrt.pop %v1221
    %v1298 = vmul.f32 %v1221, %v1297
    %vm1299 = vcmp.eq.f32.partialorder %v1221, inf
    %v1300 = vsel %vm1299, %v1221, %v1298
    %vm1301 = vcmp.eq.f32.partialorder %v1221, 0.0
    %v1302 = vand.u32 %v1221, 2147483648
    %v1303 = vsel %vm1301, %v1302, %v1300
    %v1304 = vrsqrt.pop %v1222
    %v1305 = vmul.f32 %v1222, %v1304
    %vm1306 = vcmp.eq.f32.partialorder %v1222, inf
    %v1307 = vsel %vm1306, %v1222, %v1305
    %vm1308 = vcmp.eq.f32.partialorder %v1222, 0.0
    %v1309 = vand.u32 %v1222, 2147483648
    %v1310 = vsel %vm1308, %v1309, %v1307
    %v1311 = vrsqrt.pop %v1223
    %v1312 = vmul.f32 %v1223, %v1311
    %vm1313 = vcmp.eq.f32.partialorder %v1223, inf
    %v1314 = vsel %vm1313, %v1223, %v1312
    %vm1315 = vcmp.eq.f32.partialorder %v1223, 0.0
    %v1316 = vand.u32 %v1223, 2147483648
    %v1317 = vsel %vm1315, %v1316, %v1314
    %v1318 = vrsqrt.pop %v1224
    %v1319 = vmul.f32 %v1224, %v1318
    %vm1320 = vcmp.eq.f32.partialorder %v1224, inf
    %v1321 = vsel %vm1320, %v1224, %v1319
    %vm1322 = vcmp.eq.f32.partialorder %v1224, 0.0
    %v1323 = vand.u32 %v1224, 2147483648
    %v1324 = vsel %vm1322, %v1323, %v1321
    %v1325 = vrsqrt.pop %v1225
    %v1326 = vmul.f32 %v1225, %v1325
    %vm1327 = vcmp.eq.f32.partialorder %v1225, inf
    %v1328 = vsel %vm1327, %v1225, %v1326
    %vm1329 = vcmp.eq.f32.partialorder %v1225, 0.0
    %v1330 = vand.u32 %v1225, 2147483648
    %v1331 = vsel %vm1329, %v1330, %v1328
    %v1332 = vrsqrt.pop %v1226
    %v1333 = vmul.f32 %v1226, %v1332
    %vm1334 = vcmp.eq.f32.partialorder %v1226, inf
    %v1335 = vsel %vm1334, %v1226, %v1333
    %vm1336 = vcmp.eq.f32.partialorder %v1226, 0.0
    %v1337 = vand.u32 %v1226, 2147483648
    %v1338 = vsel %vm1336, %v1337, %v1335
    %v1339 = vrsqrt.pop %v1227
    %v1340 = vmul.f32 %v1227, %v1339
    %vm1341 = vcmp.eq.f32.partialorder %v1227, inf
    %v1342 = vsel %vm1341, %v1227, %v1340
    %vm1343 = vcmp.eq.f32.partialorder %v1227, 0.0
    %v1344 = vand.u32 %v1227, 2147483648
    %v1345 = vsel %vm1343, %v1344, %v1342
    %v1346 = vrsqrt.pop %v1228
    %v1347 = vmul.f32 %v1228, %v1346
    %vm1348 = vcmp.eq.f32.partialorder %v1228, inf
    %v1349 = vsel %vm1348, %v1228, %v1347
    %vm1350 = vcmp.eq.f32.partialorder %v1228, 0.0
    %v1351 = vand.u32 %v1228, 2147483648
    %v1352 = vsel %vm1350, %v1351, %v1349
    %v1353 = vrsqrt.pop %v1229
    %v1354 = vmul.f32 %v1229, %v1353
    %vm1355 = vcmp.eq.f32.partialorder %v1229, inf
    %v1356 = vsel %vm1355, %v1229, %v1354
    %vm1357 = vcmp.eq.f32.partialorder %v1229, 0.0
    %v1358 = vand.u32 %v1229, 2147483648
    %v1359 = vsel %vm1357, %v1358, %v1356
    %v1360 = vrsqrt.pop %v1230
    %v1361 = vmul.f32 %v1230, %v1360
    %vm1362 = vcmp.eq.f32.partialorder %v1230, inf
    %v1363 = vsel %vm1362, %v1230, %v1361
    %vm1364 = vcmp.eq.f32.partialorder %v1230, 0.0
    %v1365 = vand.u32 %v1230, 2147483648
    %v1366 = vsel %vm1364, %v1365, %v1363
    %v1367 = vrsqrt.pop %v1231
    %v1368 = vmul.f32 %v1231, %v1367
    %vm1369 = vcmp.eq.f32.partialorder %v1231, inf
    %v1370 = vsel %vm1369, %v1231, %v1368
    %vm1371 = vcmp.eq.f32.partialorder %v1231, 0.0
    %v1372 = vand.u32 %v1231, 2147483648
    %v1373 = vsel %vm1371, %v1372, %v1370
    %v1374 = vrsqrt.pop %v1232
    %v1375 = vmul.f32 %v1232, %v1374
    %vm1376 = vcmp.eq.f32.partialorder %v1232, inf
    %v1377 = vsel %vm1376, %v1232, %v1375
    %vm1378 = vcmp.eq.f32.partialorder %v1232, 0.0
    %v1379 = vand.u32 %v1232, 2147483648
    %v1380 = vsel %vm1378, %v1379, %v1377
    %v1381 = vrsqrt.pop %v1233
    %v1382 = vmul.f32 %v1233, %v1381
    %vm1383 = vcmp.eq.f32.partialorder %v1233, inf
    %v1384 = vsel %vm1383, %v1233, %v1382
    %vm1385 = vcmp.eq.f32.partialorder %v1233, 0.0
    %v1386 = vand.u32 %v1233, 2147483648
    %v1387 = vsel %vm1385, %v1386, %v1384
    %v1388 = vrsqrt.pop %v1234
    %v1389 = vmul.f32 %v1234, %v1388
    %vm1390 = vcmp.eq.f32.partialorder %v1234, inf
    %v1391 = vsel %vm1390, %v1234, %v1389
    %vm1392 = vcmp.eq.f32.partialorder %v1234, 0.0
    %v1393 = vand.u32 %v1234, 2147483648
    %v1394 = vsel %vm1392, %v1393, %v1391
    %v1395 = vrsqrt.pop %v1235
    %v1396 = vmul.f32 %v1235, %v1395
    %vm1397 = vcmp.eq.f32.partialorder %v1235, inf
    %v1398 = vsel %vm1397, %v1235, %v1396
    %vm1399 = vcmp.eq.f32.partialorder %v1235, 0.0
    %v1400 = vand.u32 %v1235, 2147483648
    %v1401 = vsel %vm1399, %v1400, %v1398
    %v1402 = vrsqrt.pop %v1236
    %v1403 = vmul.f32 %v1236, %v1402
    %vm1404 = vcmp.eq.f32.partialorder %v1236, inf
    %v1405 = vsel %vm1404, %v1236, %v1403
    %vm1406 = vcmp.eq.f32.partialorder %v1236, 0.0
    %v1407 = vand.u32 %v1236, 2147483648
    %v1408 = vsel %vm1406, %v1407, %v1405
    %v1409 = vrsqrt.pop %v1237
    %v1410 = vmul.f32 %v1237, %v1409
    %vm1411 = vcmp.eq.f32.partialorder %v1237, inf
    %v1412 = vsel %vm1411, %v1237, %v1410
    %vm1413 = vcmp.eq.f32.partialorder %v1237, 0.0
    %v1414 = vand.u32 %v1237, 2147483648
    %v1415 = vsel %vm1413, %v1414, %v1412
    %v1416 = vrsqrt.pop %v1238
    %v1417 = vmul.f32 %v1238, %v1416
    %vm1418 = vcmp.eq.f32.partialorder %v1238, inf
    %v1419 = vsel %vm1418, %v1238, %v1417
    %vm1420 = vcmp.eq.f32.partialorder %v1238, 0.0
    %v1421 = vand.u32 %v1238, 2147483648
    %v1422 = vsel %vm1420, %v1421, %v1419
    %v1423 = vrsqrt.pop %v1239
    %v1424 = vmul.f32 %v1239, %v1423
    %vm1425 = vcmp.eq.f32.partialorder %v1239, inf
    %v1426 = vsel %vm1425, %v1239, %v1424
    %vm1427 = vcmp.eq.f32.partialorder %v1239, 0.0
    %v1428 = vand.u32 %v1239, 2147483648
    %v1429 = vsel %vm1427, %v1428, %v1426
    %v1430 = vrsqrt.pop %v1240
    %v1431 = vmul.f32 %v1240, %v1430
    %vm1432 = vcmp.eq.f32.partialorder %v1240, inf
    %v1433 = vsel %vm1432, %v1240, %v1431
    %vm1434 = vcmp.eq.f32.partialorder %v1240, 0.0
    %v1435 = vand.u32 %v1240, 2147483648
    %v1436 = vsel %vm1434, %v1435, %v1433
    %v1437 = vrsqrt.pop %v1241
    %v1438 = vmul.f32 %v1241, %v1437
    %vm1439 = vcmp.eq.f32.partialorder %v1241, inf
    %v1440 = vsel %vm1439, %v1241, %v1438
    %vm1441 = vcmp.eq.f32.partialorder %v1241, 0.0
    %v1442 = vand.u32 %v1241, 2147483648
    %v1443 = vsel %vm1441, %v1442, %v1440
    %v1444 = vrsqrt.pop %v1242
    %v1445 = vmul.f32 %v1242, %v1444
    %vm1446 = vcmp.eq.f32.partialorder %v1242, inf
    %v1447 = vsel %vm1446, %v1242, %v1445
    %vm1448 = vcmp.eq.f32.partialorder %v1242, 0.0
    %v1449 = vand.u32 %v1242, 2147483648
    %v1450 = vsel %vm1448, %v1449, %v1447
    %v1451 = vrsqrt.pop %v1243
    %v1452 = vmul.f32 %v1243, %v1451
    %vm1453 = vcmp.eq.f32.partialorder %v1243, inf
    %v1454 = vsel %vm1453, %v1243, %v1452
    %vm1455 = vcmp.eq.f32.partialorder %v1243, 0.0
    %v1456 = vand.u32 %v1243, 2147483648
    %v1457 = vsel %vm1455, %v1456, %v1454
    %v1458 = vrsqrt.pop %v1244
    %v1459 = vmul.f32 %v1244, %v1458
    %vm1460 = vcmp.eq.f32.partialorder %v1244, inf
    %v1461 = vsel %vm1460, %v1244, %v1459
    %vm1462 = vcmp.eq.f32.partialorder %v1244, 0.0
    %v1463 = vand.u32 %v1244, 2147483648
    %v1464 = vsel %vm1462, %v1463, %v1461
    %v1465 = vrsqrt.pop %v1245
    %v1466 = vmul.f32 %v1245, %v1465
    %vm1467 = vcmp.eq.f32.partialorder %v1245, inf
    %v1468 = vsel %vm1467, %v1245, %v1466
    %vm1469 = vcmp.eq.f32.partialorder %v1245, 0.0
    %v1470 = vand.u32 %v1245, 2147483648
    %v1471 = vsel %vm1469, %v1470, %v1468
    %v1472 = vrsqrt.pop %v1246
    %v1473 = vmul.f32 %v1246, %v1472
    %vm1474 = vcmp.eq.f32.partialorder %v1246, inf
    %v1475 = vsel %vm1474, %v1246, %v1473
    %vm1476 = vcmp.eq.f32.partialorder %v1246, 0.0
    %v1477 = vand.u32 %v1246, 2147483648
    %v1478 = vsel %vm1476, %v1477, %v1475
    %v1479 = vrsqrt.pop %v1247
    %v1480 = vmul.f32 %v1247, %v1479
    %vm1481 = vcmp.eq.f32.partialorder %v1247, inf
    %v1482 = vsel %vm1481, %v1247, %v1480
    %vm1483 = vcmp.eq.f32.partialorder %v1247, 0.0
    %v1484 = vand.u32 %v1247, 2147483648
    %v1485 = vsel %vm1483, %v1484, %v1482
    %v1486 = vrsqrt.pop %v1248
    %v1487 = vmul.f32 %v1248, %v1486
    %vm1488 = vcmp.eq.f32.partialorder %v1248, inf
    %v1489 = vsel %vm1488, %v1248, %v1487
    %vm1490 = vcmp.eq.f32.partialorder %v1248, 0.0
    %v1491 = vand.u32 %v1248, 2147483648
    %v1492 = vsel %vm1490, %v1491, %v1489
    %v1493 = vrsqrt.pop %v1249
    %v1494 = vmul.f32 %v1249, %v1493
    %vm1495 = vcmp.eq.f32.partialorder %v1249, inf
    %v1496 = vsel %vm1495, %v1249, %v1494
    %vm1497 = vcmp.eq.f32.partialorder %v1249, 0.0
    %v1498 = vand.u32 %v1249, 2147483648
    %v1499 = vsel %vm1497, %v1498, %v1496
    %v1500 = vrsqrt.pop %v1250
    %v1501 = vmul.f32 %v1250, %v1500
    %vm1502 = vcmp.eq.f32.partialorder %v1250, inf
    %v1503 = vsel %vm1502, %v1250, %v1501
    %vm1504 = vcmp.eq.f32.partialorder %v1250, 0.0
    %v1505 = vand.u32 %v1250, 2147483648
    %v1506 = vsel %vm1504, %v1505, %v1503
    %v1507 = vrsqrt.pop %v1251
    %v1508 = vmul.f32 %v1251, %v1507
    %vm1509 = vcmp.eq.f32.partialorder %v1251, inf
    %v1510 = vsel %vm1509, %v1251, %v1508
    %vm1511 = vcmp.eq.f32.partialorder %v1251, 0.0
    %v1512 = vand.u32 %v1251, 2147483648
    %v1513 = vsel %vm1511, %v1512, %v1510
    %v1514 = vrsqrt.pop %v1252
    %v1515 = vmul.f32 %v1252, %v1514
    %vm1516 = vcmp.eq.f32.partialorder %v1252, inf
    %v1517 = vsel %vm1516, %v1252, %v1515
    %vm1518 = vcmp.eq.f32.partialorder %v1252, 0.0
    %v1519 = vand.u32 %v1252, 2147483648
    %v1520 = vsel %vm1518, %v1519, %v1517
    %v1521 = vrsqrt.pop %v1253
    %v1522 = vmul.f32 %v1253, %v1521
    %vm1523 = vcmp.eq.f32.partialorder %v1253, inf
    %v1524 = vsel %vm1523, %v1253, %v1522
    %vm1525 = vcmp.eq.f32.partialorder %v1253, 0.0
    %v1526 = vand.u32 %v1253, 2147483648
    %v1527 = vsel %vm1525, %v1526, %v1524
    %v1528 = vrsqrt.pop %v1254
    %v1529 = vmul.f32 %v1254, %v1528
    %vm1530 = vcmp.eq.f32.partialorder %v1254, inf
    %v1531 = vsel %vm1530, %v1254, %v1529
    %vm1532 = vcmp.eq.f32.partialorder %v1254, 0.0
    %v1533 = vand.u32 %v1254, 2147483648
    %v1534 = vsel %vm1532, %v1533, %v1531
    %v1535 = vrsqrt.pop %v1255
    %v1536 = vmul.f32 %v1255, %v1535
    %vm1537 = vcmp.eq.f32.partialorder %v1255, inf
    %v1538 = vsel %vm1537, %v1255, %v1536
    %vm1539 = vcmp.eq.f32.partialorder %v1255, 0.0
    %v1540 = vand.u32 %v1255, 2147483648
    %v1541 = vsel %vm1539, %v1540, %v1538
    %v1542 = vrsqrt.pop %v1256
    %v1543 = vmul.f32 %v1256, %v1542
    %vm1544 = vcmp.eq.f32.partialorder %v1256, inf
    %v1545 = vsel %vm1544, %v1256, %v1543
    %vm1546 = vcmp.eq.f32.partialorder %v1256, 0.0
    %v1547 = vand.u32 %v1256, 2147483648
    %v1548 = vsel %vm1546, %v1547, %v1545
    %v1549 = vrsqrt.pop %v1257
    %v1550 = vmul.f32 %v1257, %v1549
    %vm1551 = vcmp.eq.f32.partialorder %v1257, inf
    %v1552 = vsel %vm1551, %v1257, %v1550
    %vm1553 = vcmp.eq.f32.partialorder %v1257, 0.0
    %v1554 = vand.u32 %v1257, 2147483648
    %v1555 = vsel %vm1553, %v1554, %v1552
    %v1556 = vrsqrt.pop %v1258
    %v1557 = vmul.f32 %v1258, %v1556
    %vm1558 = vcmp.eq.f32.partialorder %v1258, inf
    %v1559 = vsel %vm1558, %v1258, %v1557
    %vm1560 = vcmp.eq.f32.partialorder %v1258, 0.0
    %v1561 = vand.u32 %v1258, 2147483648
    %v1562 = vsel %vm1560, %v1561, %v1559
    %v1563 = vrsqrt.pop %v1259
    %v1564 = vmul.f32 %v1259, %v1563
    %vm1565 = vcmp.eq.f32.partialorder %v1259, inf
    %v1566 = vsel %vm1565, %v1259, %v1564
    %vm1567 = vcmp.eq.f32.partialorder %v1259, 0.0
    %v1568 = vand.u32 %v1259, 2147483648
    %v1569 = vsel %vm1567, %v1568, %v1566
    %v1570 = vrsqrt.pop %v1260
    %v1571 = vmul.f32 %v1260, %v1570
    %vm1572 = vcmp.eq.f32.partialorder %v1260, inf
    %v1573 = vsel %vm1572, %v1260, %v1571
    %vm1574 = vcmp.eq.f32.partialorder %v1260, 0.0
    %v1575 = vand.u32 %v1260, 2147483648
    %v1576 = vsel %vm1574, %v1575, %v1573
    %v1577 = vrsqrt.pop %v1261
    %v1578 = vmul.f32 %v1261, %v1577
    %vm1579 = vcmp.eq.f32.partialorder %v1261, inf
    %v1580 = vsel %vm1579, %v1261, %v1578
    %vm1581 = vcmp.eq.f32.partialorder %v1261, 0.0
    %v1582 = vand.u32 %v1261, 2147483648
    %v1583 = vsel %vm1581, %v1582, %v1580
    %v1584 = vrsqrt.pop %v1262
    %v1585 = vmul.f32 %v1262, %v1584
    %vm1586 = vcmp.eq.f32.partialorder %v1262, inf
    %v1587 = vsel %vm1586, %v1262, %v1585
    %vm1588 = vcmp.eq.f32.partialorder %v1262, 0.0
    %v1589 = vand.u32 %v1262, 2147483648
    %v1590 = vsel %vm1588, %v1589, %v1587
    %v1591 = vrsqrt.pop %v1263
    %v1592 = vmul.f32 %v1263, %v1591
    %vm1593 = vcmp.eq.f32.partialorder %v1263, inf
    %v1594 = vsel %vm1593, %v1263, %v1592
    %vm1595 = vcmp.eq.f32.partialorder %v1263, 0.0
    %v1596 = vand.u32 %v1263, 2147483648
    %v1597 = vsel %vm1595, %v1596, %v1594
    %v1598 = vrsqrt.pop %v1264
    %v1599 = vmul.f32 %v1264, %v1598
    %vm1600 = vcmp.eq.f32.partialorder %v1264, inf
    %v1601 = vsel %vm1600, %v1264, %v1599
    %vm1602 = vcmp.eq.f32.partialorder %v1264, 0.0
    %v1603 = vand.u32 %v1264, 2147483648
    %v1604 = vsel %vm1602, %v1603, %v1601
    %v1605 = vrsqrt.pop %v1265
    %v1606 = vmul.f32 %v1265, %v1605
    %vm1607 = vcmp.eq.f32.partialorder %v1265, inf
    %v1608 = vsel %vm1607, %v1265, %v1606
    %vm1609 = vcmp.eq.f32.partialorder %v1265, 0.0
    %v1610 = vand.u32 %v1265, 2147483648
    %v1611 = vsel %vm1609, %v1610, %v1608
    %v1612 = vrsqrt.pop %v1266
    %v1613 = vmul.f32 %v1266, %v1612
    %vm1614 = vcmp.eq.f32.partialorder %v1266, inf
    %v1615 = vsel %vm1614, %v1266, %v1613
    %vm1616 = vcmp.eq.f32.partialorder %v1266, 0.0
    %v1617 = vand.u32 %v1266, 2147483648
    %v1618 = vsel %vm1616, %v1617, %v1615
    %v1619 = vrsqrt.pop %v1267
    %v1620 = vmul.f32 %v1267, %v1619
    %vm1621 = vcmp.eq.f32.partialorder %v1267, inf
    %v1622 = vsel %vm1621, %v1267, %v1620
    %vm1623 = vcmp.eq.f32.partialorder %v1267, 0.0
    %v1624 = vand.u32 %v1267, 2147483648
    %v1625 = vsel %vm1623, %v1624, %v1622
    %v1626 = vrsqrt.pop %v1268
    %v1627 = vmul.f32 %v1268, %v1626
    %vm1628 = vcmp.eq.f32.partialorder %v1268, inf
    %v1629 = vsel %vm1628, %v1268, %v1627
    %vm1630 = vcmp.eq.f32.partialorder %v1268, 0.0
    %v1631 = vand.u32 %v1268, 2147483648
    %v1632 = vsel %vm1630, %v1631, %v1629
    %v1633 = vrsqrt.pop %v1269
    %v1634 = vmul.f32 %v1269, %v1633
    %vm1635 = vcmp.eq.f32.partialorder %v1269, inf
    %v1636 = vsel %vm1635, %v1269, %v1634
    %vm1637 = vcmp.eq.f32.partialorder %v1269, 0.0
    %v1638 = vand.u32 %v1269, 2147483648
    %v1639 = vsel %vm1637, %v1638, %v1636
    %v1640 = vrsqrt.pop %v1270
    %v1641 = vmul.f32 %v1270, %v1640
    %vm1642 = vcmp.eq.f32.partialorder %v1270, inf
    %v1643 = vsel %vm1642, %v1270, %v1641
    %vm1644 = vcmp.eq.f32.partialorder %v1270, 0.0
    %v1645 = vand.u32 %v1270, 2147483648
    %v1646 = vsel %vm1644, %v1645, %v1643
    %v1647 = vrsqrt.pop %v1271
    %v1648 = vmul.f32 %v1271, %v1647
    %vm1649 = vcmp.eq.f32.partialorder %v1271, inf
    %v1650 = vsel %vm1649, %v1271, %v1648
    %vm1651 = vcmp.eq.f32.partialorder %v1271, 0.0
    %v1652 = vand.u32 %v1271, 2147483648
    %v1653 = vsel %vm1651, %v1652, %v1650
    %v1654 = vrsqrt.pop %v1272
    %v1655 = vmul.f32 %v1272, %v1654
    %vm1656 = vcmp.eq.f32.partialorder %v1272, inf
    %v1657 = vsel %vm1656, %v1272, %v1655
    %vm1658 = vcmp.eq.f32.partialorder %v1272, 0.0
    %v1659 = vand.u32 %v1272, 2147483648
    %v1660 = vsel %vm1658, %v1659, %v1657
    %v1661 = vrsqrt.pop %v1273
    %v1662 = vmul.f32 %v1273, %v1661
    %vm1663 = vcmp.eq.f32.partialorder %v1273, inf
    %v1664 = vsel %vm1663, %v1273, %v1662
    %vm1665 = vcmp.eq.f32.partialorder %v1273, 0.0
    %v1666 = vand.u32 %v1273, 2147483648
    %v1667 = vsel %vm1665, %v1666, %v1664
    %v1668 = vrsqrt.pop %v1274
    %v1669 = vmul.f32 %v1274, %v1668
    %vm1670 = vcmp.eq.f32.partialorder %v1274, inf
    %v1671 = vsel %vm1670, %v1274, %v1669
    %vm1672 = vcmp.eq.f32.partialorder %v1274, 0.0
    %v1673 = vand.u32 %v1274, 2147483648
    %v1674 = vsel %vm1672, %v1673, %v1671
    %v1675 = vrsqrt.pop %v1275
    %v1676 = vmul.f32 %v1275, %v1675
    %vm1677 = vcmp.eq.f32.partialorder %v1275, inf
    %v1678 = vsel %vm1677, %v1275, %v1676
    %vm1679 = vcmp.eq.f32.partialorder %v1275, 0.0
    %v1680 = vand.u32 %v1275, 2147483648
    %v1681 = vsel %vm1679, %v1680, %v1678
    %v1682 = vrsqrt.pop %v1276
    %v1683 = vmul.f32 %v1276, %v1682
    %vm1684 = vcmp.eq.f32.partialorder %v1276, inf
    %v1685 = vsel %vm1684, %v1276, %v1683
    %vm1686 = vcmp.eq.f32.partialorder %v1276, 0.0
    %v1687 = vand.u32 %v1276, 2147483648
    %v1688 = vsel %vm1686, %v1687, %v1685
    %v1689 = vrsqrt.pop %v1277
    %v1690 = vmul.f32 %v1277, %v1689
    %vm1691 = vcmp.eq.f32.partialorder %v1277, inf
    %v1692 = vsel %vm1691, %v1277, %v1690
    %vm1693 = vcmp.eq.f32.partialorder %v1277, 0.0
    %v1694 = vand.u32 %v1277, 2147483648
    %v1695 = vsel %vm1693, %v1694, %v1692
    %v1696 = vrsqrt.pop %v1278
    %v1697 = vmul.f32 %v1278, %v1696
    %vm1698 = vcmp.eq.f32.partialorder %v1278, inf
    %v1699 = vsel %vm1698, %v1278, %v1697
    %vm1700 = vcmp.eq.f32.partialorder %v1278, 0.0
    %v1701 = vand.u32 %v1278, 2147483648
    %v1702 = vsel %vm1700, %v1701, %v1699
    %v1703 = vrsqrt.pop %v1279
    %v1704 = vmul.f32 %v1279, %v1703
    %vm1705 = vcmp.eq.f32.partialorder %v1279, inf
    %v1706 = vsel %vm1705, %v1279, %v1704
    %vm1707 = vcmp.eq.f32.partialorder %v1279, 0.0
    %v1708 = vand.u32 %v1279, 2147483648
    %v1709 = vsel %vm1707, %v1708, %v1706
    %v1710 = vrsqrt.pop %v1280
    %v1711 = vmul.f32 %v1280, %v1710
    %vm1712 = vcmp.eq.f32.partialorder %v1280, inf
    %v1713 = vsel %vm1712, %v1280, %v1711
    %vm1714 = vcmp.eq.f32.partialorder %v1280, 0.0
    %v1715 = vand.u32 %v1280, 2147483648
    %v1716 = vsel %vm1714, %v1715, %v1713
    %v1717 = vrsqrt.pop %v1281
    %v1718 = vmul.f32 %v1281, %v1717
    %vm1719 = vcmp.eq.f32.partialorder %v1281, inf
    %v1720 = vsel %vm1719, %v1281, %v1718
    %vm1721 = vcmp.eq.f32.partialorder %v1281, 0.0
    %v1722 = vand.u32 %v1281, 2147483648
    %v1723 = vsel %vm1721, %v1722, %v1720
    %v1724 = vrsqrt.pop %v1282
    %v1725 = vmul.f32 %v1282, %v1724
    %vm1726 = vcmp.eq.f32.partialorder %v1282, inf
    %v1727 = vsel %vm1726, %v1282, %v1725
    %vm1728 = vcmp.eq.f32.partialorder %v1282, 0.0
    %v1729 = vand.u32 %v1282, 2147483648
    %v1730 = vsel %vm1728, %v1729, %v1727
    %v1731 = vadd.f32 %v1289, 1e-06
    %v1732 = vadd.f32 %v1296, 1e-06
    %v1733 = vadd.f32 %v1303, 1e-06
    %v1734 = vadd.f32 %v1310, 1e-06
    %v1735 = vadd.f32 %v1317, 1e-06
    %v1736 = vadd.f32 %v1324, 1e-06
    %v1737 = vadd.f32 %v1331, 1e-06
    %v1738 = vadd.f32 %v1338, 1e-06
    %v1739 = vadd.f32 %v1345, 1e-06
    %v1740 = vadd.f32 %v1352, 1e-06
    %v1741 = vadd.f32 %v1359, 1e-06
    %v1742 = vadd.f32 %v1366, 1e-06
    %v1743 = vadd.f32 %v1373, 1e-06
    %v1744 = vadd.f32 %v1380, 1e-06
    %v1745 = vadd.f32 %v1387, 1e-06
    %v1746 = vadd.f32 %v1394, 1e-06
    %v1747 = vadd.f32 %v1401, 1e-06
    %v1748 = vadd.f32 %v1408, 1e-06
    %v1749 = vadd.f32 %v1415, 1e-06
    %v1750 = vadd.f32 %v1422, 1e-06
    %v1751 = vadd.f32 %v1429, 1e-06
    %v1752 = vadd.f32 %v1436, 1e-06
    %v1753 = vadd.f32 %v1443, 1e-06
    %v1754 = vadd.f32 %v1450, 1e-06
    %v1755 = vadd.f32 %v1457, 1e-06
    %v1756 = vadd.f32 %v1464, 1e-06
    %v1757 = vadd.f32 %v1471, 1e-06
    %v1758 = vadd.f32 %v1478, 1e-06
    %v1759 = vadd.f32 %v1485, 1e-06
    %v1760 = vadd.f32 %v1492, 1e-06
    %v1761 = vadd.f32 %v1499, 1e-06
    %v1762 = vadd.f32 %v1506, 1e-06
    %v1763 = vadd.f32 %v1513, 1e-06
    %v1764 = vadd.f32 %v1520, 1e-06
    %v1765 = vadd.f32 %v1527, 1e-06
    %v1766 = vadd.f32 %v1534, 1e-06
    %v1767 = vadd.f32 %v1541, 1e-06
    %v1768 = vadd.f32 %v1548, 1e-06
    %v1769 = vadd.f32 %v1555, 1e-06
    %v1770 = vadd.f32 %v1562, 1e-06
    %v1771 = vadd.f32 %v1569, 1e-06
    %v1772 = vadd.f32 %v1576, 1e-06
    %v1773 = vadd.f32 %v1583, 1e-06
    %v1774 = vadd.f32 %v1590, 1e-06
    %v1775 = vadd.f32 %v1597, 1e-06
    %v1776 = vadd.f32 %v1604, 1e-06
    %v1777 = vadd.f32 %v1611, 1e-06
    %v1778 = vadd.f32 %v1618, 1e-06
    %v1779 = vadd.f32 %v1625, 1e-06
    %v1780 = vadd.f32 %v1632, 1e-06
    %v1781 = vadd.f32 %v1639, 1e-06
    %v1782 = vadd.f32 %v1646, 1e-06
    %v1783 = vadd.f32 %v1653, 1e-06
    %v1784 = vadd.f32 %v1660, 1e-06
    %v1785 = vadd.f32 %v1667, 1e-06
    %v1786 = vadd.f32 %v1674, 1e-06
    %v1787 = vadd.f32 %v1681, 1e-06
    %v1788 = vadd.f32 %v1688, 1e-06
    %v1789 = vadd.f32 %v1695, 1e-06
    %v1790 = vadd.f32 %v1702, 1e-06
    %v1791 = vadd.f32 %v1709, 1e-06
    %v1792 = vadd.f32 %v1716, 1e-06
    %v1793 = vadd.f32 %v1723, 1e-06
    %v1794 = vadd.f32 %v1730, 1e-06
    %v1795 = vrcp.pop %v1731
    %v1796 = vrcp.pop %v1732
    %v1797 = vrcp.pop %v1733
    %v1798 = vrcp.pop %v1734
    %v1799 = vrcp.pop %v1735
    %v1800 = vrcp.pop %v1736
    %v1801 = vrcp.pop %v1737
    %v1802 = vrcp.pop %v1738
    %v1803 = vrcp.pop %v1739
    %v1804 = vrcp.pop %v1740
    %v1805 = vrcp.pop %v1741
    %v1806 = vrcp.pop %v1742
    %v1807 = vrcp.pop %v1743
    %v1808 = vrcp.pop %v1744
    %v1809 = vrcp.pop %v1745
    %v1810 = vrcp.pop %v1746
    %v1811 = vrcp.pop %v1747
    %v1812 = vrcp.pop %v1748
    %v1813 = vrcp.pop %v1749
    %v1814 = vrcp.pop %v1750
    %v1815 = vrcp.pop %v1751
    %v1816 = vrcp.pop %v1752
    %v1817 = vrcp.pop %v1753
    %v1818 = vrcp.pop %v1754
    %v1819 = vrcp.pop %v1755
    %v1820 = vrcp.pop %v1756
    %v1821 = vrcp.pop %v1757
    %v1822 = vrcp.pop %v1758
    %v1823 = vrcp.pop %v1759
    %v1824 = vrcp.pop %v1760
    %v1825 = vrcp.pop %v1761
    %v1826 = vrcp.pop %v1762
    %v1827 = vrcp.pop %v1763
    %v1828 = vrcp.pop %v1764
    %v1829 = vrcp.pop %v1765
    %v1830 = vrcp.pop %v1766
    %v1831 = vrcp.pop %v1767
    %v1832 = vrcp.pop %v1768
    %v1833 = vrcp.pop %v1769
    %v1834 = vrcp.pop %v1770
    %v1835 = vrcp.pop %v1771
    %v1836 = vrcp.pop %v1772
    %v1837 = vrcp.pop %v1773
    %v1838 = vrcp.pop %v1774
    %v1839 = vrcp.pop %v1775
    %v1840 = vrcp.pop %v1776
    %v1841 = vrcp.pop %v1777
    %v1842 = vrcp.pop %v1778
    %v1843 = vrcp.pop %v1779
    %v1844 = vrcp.pop %v1780
    %v1845 = vrcp.pop %v1781
    %v1846 = vrcp.pop %v1782
    %v1847 = vrcp.pop %v1783
    %v1848 = vrcp.pop %v1784
    %v1849 = vrcp.pop %v1785
    %v1850 = vrcp.pop %v1786
    %v1851 = vrcp.pop %v1787
    %v1852 = vrcp.pop %v1788
    %v1853 = vrcp.pop %v1789
    %v1854 = vrcp.pop %v1790
    %v1855 = vrcp.pop %v1791
    %v1856 = vrcp.pop %v1792
    %v1857 = vrcp.pop %v1793
    %v1858 = vrcp.pop %v1794
    %v1859 = vld [vmem:[%s3] sm:$0x1]
    %v1861 = vlaneseq
    %v1862 = vshrl.u32 %v1861, 7
    %v1863 = vsub.s32 0, %v1862
    %v1864 = vrot.slane %v1859, %v1863
    %v1866 = vmul.f32 %v1864, %v899
    %v1867 = vmul.f32 %v1864, %v900
    %v1868 = vmul.f32 %v1864, %v901
    %v1869 = vmul.f32 %v1864, %v902
    %v1870 = vmul.f32 %v1864, %v903
    %v1871 = vmul.f32 %v1864, %v904
    %v1872 = vmul.f32 %v1864, %v905
    %v1873 = vmul.f32 %v1864, %v906
    %v1874 = vmul.f32 %v1864, %v907
    %v1875 = vmul.f32 %v1864, %v908
    %v1876 = vmul.f32 %v1864, %v909
    %v1877 = vmul.f32 %v1864, %v910
    %v1878 = vmul.f32 %v1864, %v911
    %v1879 = vmul.f32 %v1864, %v912
    %v1880 = vmul.f32 %v1864, %v913
    %v1881 = vmul.f32 %v1864, %v914
    %v1882 = vmul.f32 %v1864, %v915
    %v1883 = vmul.f32 %v1864, %v916
    %v1884 = vmul.f32 %v1864, %v917
    %v1885 = vmul.f32 %v1864, %v918
    %v1886 = vmul.f32 %v1864, %v919
    %v1887 = vmul.f32 %v1864, %v920
    %v1888 = vmul.f32 %v1864, %v921
    %v1889 = vmul.f32 %v1864, %v922
    %v1890 = vmul.f32 %v1864, %v923
    %v1891 = vmul.f32 %v1864, %v924
    %v1892 = vmul.f32 %v1864, %v925
    %v1893 = vmul.f32 %v1864, %v926
    %v1894 = vmul.f32 %v1864, %v927
    %v1895 = vmul.f32 %v1864, %v928
    %v1896 = vmul.f32 %v1864, %v929
    %v1897 = vmul.f32 %v1864, %v930
    %v1898 = vmul.f32 %v1864, %v931
    %v1899 = vmul.f32 %v1864, %v932
    %v1900 = vmul.f32 %v1864, %v933
    %v1901 = vmul.f32 %v1864, %v934
    %v1902 = vmul.f32 %v1864, %v935
    %v1903 = vmul.f32 %v1864, %v936
    %v1904 = vmul.f32 %v1864, %v937
    %v1905 = vmul.f32 %v1864, %v938
    %v1906 = vmul.f32 %v1864, %v939
    %v1907 = vmul.f32 %v1864, %v940
    %v1908 = vmul.f32 %v1864, %v941
    %v1909 = vmul.f32 %v1864, %v942
    %v1910 = vmul.f32 %v1864, %v943
    %v1911 = vmul.f32 %v1864, %v944
    %v1912 = vmul.f32 %v1864, %v945
    %v1913 = vmul.f32 %v1864, %v946
    %v1914 = vmul.f32 %v1864, %v947
    %v1915 = vmul.f32 %v1864, %v948
    %v1916 = vmul.f32 %v1864, %v949
    %v1917 = vmul.f32 %v1864, %v950
    %v1918 = vmul.f32 %v1864, %v951
    %v1919 = vmul.f32 %v1864, %v952
    %v1920 = vmul.f32 %v1864, %v953
    %v1921 = vmul.f32 %v1864, %v954
    %v1922 = vmul.f32 %v1864, %v955
    %v1923 = vmul.f32 %v1864, %v956
    %v1924 = vmul.f32 %v1864, %v957
    %v1925 = vmul.f32 %v1864, %v958
    %v1926 = vmul.f32 %v1864, %v959
    %v1927 = vmul.f32 %v1864, %v960
    %v1928 = vmul.f32 %v1864, %v961
    %v1929 = vmul.f32 %v1864, %v962
    %v1930 = vmul.f32 %v1866, %v1795
    %v1931 = vmul.f32 %v1867, %v1796
    %v1932 = vmul.f32 %v1868, %v1797
    %v1933 = vmul.f32 %v1869, %v1798
    %v1934 = vmul.f32 %v1870, %v1799
    %v1935 = vmul.f32 %v1871, %v1800
    %v1936 = vmul.f32 %v1872, %v1801
    %v1937 = vmul.f32 %v1873, %v1802
    %v1938 = vmul.f32 %v1874, %v1803
    %v1939 = vmul.f32 %v1875, %v1804
    %v1940 = vmul.f32 %v1876, %v1805
    %v1941 = vmul.f32 %v1877, %v1806
    %v1942 = vmul.f32 %v1878, %v1807
    %v1943 = vmul.f32 %v1879, %v1808
    %v1944 = vmul.f32 %v1880, %v1809
    %v1945 = vmul.f32 %v1881, %v1810
    %v1946 = vmul.f32 %v1882, %v1811
    %v1947 = vmul.f32 %v1883, %v1812
    %v1948 = vmul.f32 %v1884, %v1813
    %v1949 = vmul.f32 %v1885, %v1814
    %v1950 = vmul.f32 %v1886, %v1815
    %v1951 = vmul.f32 %v1887, %v1816
    %v1952 = vmul.f32 %v1888, %v1817
    %v1953 = vmul.f32 %v1889, %v1818
    %v1954 = vmul.f32 %v1890, %v1819
    %v1955 = vmul.f32 %v1891, %v1820
    %v1956 = vmul.f32 %v1892, %v1821
    %v1957 = vmul.f32 %v1893, %v1822
    %v1958 = vmul.f32 %v1894, %v1823
    %v1959 = vmul.f32 %v1895, %v1824
    %v1960 = vmul.f32 %v1896, %v1825
    %v1961 = vmul.f32 %v1897, %v1826
    %v1962 = vmul.f32 %v1898, %v1827
    %v1963 = vmul.f32 %v1899, %v1828
    %v1964 = vmul.f32 %v1900, %v1829
    %v1965 = vmul.f32 %v1901, %v1830
    %v1966 = vmul.f32 %v1902, %v1831
    %v1967 = vmul.f32 %v1903, %v1832
    %v1968 = vmul.f32 %v1904, %v1833
    %v1969 = vmul.f32 %v1905, %v1834
    %v1970 = vmul.f32 %v1906, %v1835
    %v1971 = vmul.f32 %v1907, %v1836
    %v1972 = vmul.f32 %v1908, %v1837
    %v1973 = vmul.f32 %v1909, %v1838
    %v1974 = vmul.f32 %v1910, %v1839
    %v1975 = vmul.f32 %v1911, %v1840
    %v1976 = vmul.f32 %v1912, %v1841
    %v1977 = vmul.f32 %v1913, %v1842
    %v1978 = vmul.f32 %v1914, %v1843
    %v1979 = vmul.f32 %v1915, %v1844
    %v1980 = vmul.f32 %v1916, %v1845
    %v1981 = vmul.f32 %v1917, %v1846
    %v1982 = vmul.f32 %v1918, %v1847
    %v1983 = vmul.f32 %v1919, %v1848
    %v1984 = vmul.f32 %v1920, %v1849
    %v1985 = vmul.f32 %v1921, %v1850
    %v1986 = vmul.f32 %v1922, %v1851
    %v1987 = vmul.f32 %v1923, %v1852
    %v1988 = vmul.f32 %v1924, %v1853
    %v1989 = vmul.f32 %v1925, %v1854
    %v1990 = vmul.f32 %v1926, %v1855
    %v1991 = vmul.f32 %v1927, %v1856
    %v1992 = vmul.f32 %v1928, %v1857
    %v1993 = vmul.f32 %v1929, %v1858
    %v1994 = vld [vmem:[%s4] sm:$0x1]
    %v1996 = vlaneseq
    %v1997 = vshrl.u32 %v1996, 7
    %v1998 = vsub.s32 0, %v1997
    %v1999 = vrot.slane %v1994, %v1998
    %v2001 = vadd.f32 %v1930, %v1999
    %v2002 = vadd.f32 %v1931, %v1999
    %v2003 = vadd.f32 %v1932, %v1999
    %v2004 = vadd.f32 %v1933, %v1999
    %v2005 = vadd.f32 %v1934, %v1999
    %v2006 = vadd.f32 %v1935, %v1999
    %v2007 = vadd.f32 %v1936, %v1999
    %v2008 = vadd.f32 %v1937, %v1999
    %v2009 = vadd.f32 %v1938, %v1999
    %v2010 = vadd.f32 %v1939, %v1999
    %v2011 = vadd.f32 %v1940, %v1999
    %v2012 = vadd.f32 %v1941, %v1999
    %v2013 = vadd.f32 %v1942, %v1999
    %v2014 = vadd.f32 %v1943, %v1999
    %v2015 = vadd.f32 %v1944, %v1999
    %v2016 = vadd.f32 %v1945, %v1999
    %v2017 = vadd.f32 %v1946, %v1999
    %v2018 = vadd.f32 %v1947, %v1999
    %v2019 = vadd.f32 %v1948, %v1999
    %v2020 = vadd.f32 %v1949, %v1999
    %v2021 = vadd.f32 %v1950, %v1999
    %v2022 = vadd.f32 %v1951, %v1999
    %v2023 = vadd.f32 %v1952, %v1999
    %v2024 = vadd.f32 %v1953, %v1999
    %v2025 = vadd.f32 %v1954, %v1999
    %v2026 = vadd.f32 %v1955, %v1999
    %v2027 = vadd.f32 %v1956, %v1999
    %v2028 = vadd.f32 %v1957, %v1999
    %v2029 = vadd.f32 %v1958, %v1999
    %v2030 = vadd.f32 %v1959, %v1999
    %v2031 = vadd.f32 %v1960, %v1999
    %v2032 = vadd.f32 %v1961, %v1999
    %v2033 = vadd.f32 %v1962, %v1999
    %v2034 = vadd.f32 %v1963, %v1999
    %v2035 = vadd.f32 %v1964, %v1999
    %v2036 = vadd.f32 %v1965, %v1999
    %v2037 = vadd.f32 %v1966, %v1999
    %v2038 = vadd.f32 %v1967, %v1999
    %v2039 = vadd.f32 %v1968, %v1999
    %v2040 = vadd.f32 %v1969, %v1999
    %v2041 = vadd.f32 %v1970, %v1999
    %v2042 = vadd.f32 %v1971, %v1999
    %v2043 = vadd.f32 %v1972, %v1999
    %v2044 = vadd.f32 %v1973, %v1999
    %v2045 = vadd.f32 %v1974, %v1999
    %v2046 = vadd.f32 %v1975, %v1999
    %v2047 = vadd.f32 %v1976, %v1999
    %v2048 = vadd.f32 %v1977, %v1999
    %v2049 = vadd.f32 %v1978, %v1999
    %v2050 = vadd.f32 %v1979, %v1999
    %v2051 = vadd.f32 %v1980, %v1999
    %v2052 = vadd.f32 %v1981, %v1999
    %v2053 = vadd.f32 %v1982, %v1999
    %v2054 = vadd.f32 %v1983, %v1999
    %v2055 = vadd.f32 %v1984, %v1999
    %v2056 = vadd.f32 %v1985, %v1999
    %v2057 = vadd.f32 %v1986, %v1999
    %v2058 = vadd.f32 %v1987, %v1999
    %v2059 = vadd.f32 %v1988, %v1999
    %v2060 = vadd.f32 %v1989, %v1999
    %v2061 = vadd.f32 %v1990, %v1999
    %v2062 = vadd.f32 %v1991, %v1999
    %v2063 = vadd.f32 %v1992, %v1999
    %v2064 = vadd.f32 %v1993, %v1999
    %2065 = vst [vmem:[#allocation2] sm:$0xff] %v2001
    %2066 = vst [vmem:[#allocation2 + $0x8] sm:$0xff] %v2002
    %2067 = vst [vmem:[#allocation2 + $0x10] sm:$0xff] %v2003
    %2068 = vst [vmem:[#allocation2 + $0x18] sm:$0xff] %v2004
    %2069 = vst [vmem:[#allocation2 + $0x20] sm:$0xff] %v2005
    %2070 = vst [vmem:[#allocation2 + $0x28] sm:$0xff] %v2006
    %2071 = vst [vmem:[#allocation2 + $0x30] sm:$0xff] %v2007
    %2072 = vst [vmem:[#allocation2 + $0x38] sm:$0xff] %v2008
    %2073 = vst [vmem:[#allocation2 + $0x40] sm:$0xff] %v2009
    %2074 = vst [vmem:[#allocation2 + $0x48] sm:$0xff] %v2010
    %2075 = vst [vmem:[#allocation2 + $0x50] sm:$0xff] %v2011
    %2076 = vst [vmem:[#allocation2 + $0x58] sm:$0xff] %v2012
    %2077 = vst [vmem:[#allocation2 + $0x60] sm:$0xff] %v2013
    %2078 = vst [vmem:[#allocation2 + $0x68] sm:$0xff] %v2014
    %2079 = vst [vmem:[#allocation2 + $0x70] sm:$0xff] %v2015
    %2080 = vst [vmem:[#allocation2 + $0x78] sm:$0xff] %v2016
    %2081 = vst [vmem:[#allocation2 + $0x80] sm:$0xff] %v2017
    %2082 = vst [vmem:[#allocation2 + $0x88] sm:$0xff] %v2018
    %2083 = vst [vmem:[#allocation2 + $0x90] sm:$0xff] %v2019
    %2084 = vst [vmem:[#allocation2 + $0x98] sm:$0xff] %v2020
    %2085 = vst [vmem:[#allocation2 + $0xa0] sm:$0xff] %v2021
    %2086 = vst [vmem:[#allocation2 + $0xa8] sm:$0xff] %v2022
    %2087 = vst [vmem:[#allocation2 + $0xb0] sm:$0xff] %v2023
    %2088 = vst [vmem:[#allocation2 + $0xb8] sm:$0xff] %v2024
    %2089 = vst [vmem:[#allocation2 + $0xc0] sm:$0xff] %v2025
    %2090 = vst [vmem:[#allocation2 + $0xc8] sm:$0xff] %v2026
    %2091 = vst [vmem:[#allocation2 + $0xd0] sm:$0xff] %v2027
    %2092 = vst [vmem:[#allocation2 + $0xd8] sm:$0xff] %v2028
    %2093 = vst [vmem:[#allocation2 + $0xe0] sm:$0xff] %v2029
    %2094 = vst [vmem:[#allocation2 + $0xe8] sm:$0xff] %v2030
    %2095 = vst [vmem:[#allocation2 + $0xf0] sm:$0xff] %v2031
    %2096 = vst [vmem:[#allocation2 + $0xf8] sm:$0xff] %v2032
    %2097 = vst [vmem:[#allocation2 + $0x100] sm:$0xff] %v2033
    %2098 = vst [vmem:[#allocation2 + $0x108] sm:$0xff] %v2034
    %2099 = vst [vmem:[#allocation2 + $0x110] sm:$0xff] %v2035
    %2100 = vst [vmem:[#allocation2 + $0x118] sm:$0xff] %v2036
    %2101 = vst [vmem:[#allocation2 + $0x120] sm:$0xff] %v2037
    %2102 = vst [vmem:[#allocation2 + $0x128] sm:$0xff] %v2038
    %2103 = vst [vmem:[#allocation2 + $0x130] sm:$0xff] %v2039
    %2104 = vst [vmem:[#allocation2 + $0x138] sm:$0xff] %v2040
    %2105 = vst [vmem:[#allocation2 + $0x140] sm:$0xff] %v2041
    %2106 = vst [vmem:[#allocation2 + $0x148] sm:$0xff] %v2042
    %2107 = vst [vmem:[#allocation2 + $0x150] sm:$0xff] %v2043
    %2108 = vst [vmem:[#allocation2 + $0x158] sm:$0xff] %v2044
    %2109 = vst [vmem:[#allocation2 + $0x160] sm:$0xff] %v2045
    %2110 = vst [vmem:[#allocation2 + $0x168] sm:$0xff] %v2046
    %2111 = vst [vmem:[#allocation2 + $0x170] sm:$0xff] %v2047
    %2112 = vst [vmem:[#allocation2 + $0x178] sm:$0xff] %v2048
    %2113 = vst [vmem:[#allocation2 + $0x180] sm:$0xff] %v2049
    %2114 = vst [vmem:[#allocation2 + $0x188] sm:$0xff] %v2050
    %2115 = vst [vmem:[#allocation2 + $0x190] sm:$0xff] %v2051
    %2116 = vst [vmem:[#allocation2 + $0x198] sm:$0xff] %v2052
    %2117 = vst [vmem:[#allocation2 + $0x1a0] sm:$0xff] %v2053
    %2118 = vst [vmem:[#allocation2 + $0x1a8] sm:$0xff] %v2054
    %2119 = vst [vmem:[#allocation2 + $0x1b0] sm:$0xff] %v2055
    %2120 = vst [vmem:[#allocation2 + $0x1b8] sm:$0xff] %v2056
    %2121 = vst [vmem:[#allocation2 + $0x1c0] sm:$0xff] %v2057
    %2122 = vst [vmem:[#allocation2 + $0x1c8] sm:$0xff] %v2058
    %2123 = vst [vmem:[#allocation2 + $0x1d0] sm:$0xff] %v2059
    %2124 = vst [vmem:[#allocation2 + $0x1d8] sm:$0xff] %v2060
    %2125 = vst [vmem:[#allocation2 + $0x1e0] sm:$0xff] %v2061
    %2126 = vst [vmem:[#allocation2 + $0x1e8] sm:$0xff] %v2062
    %2127 = vst [vmem:[#allocation2 + $0x1f0] sm:$0xff] %v2063
    %2128 = vst [vmem:[#allocation2 + $0x1f8] sm:$0xff] %v2064
    // Predicated region
    $region22: #{_device_forward.5} parent=1 // pred_check
      _
    $region23: #{_device_forward.5} parent=1 // pred_check_branch
      %2130 = sbr.rel (0) target = $region25
    $region24: #{_device_forward.5} parent=1 // pred_region
      %s2132 = ssub.s32 8192, 8192
      %2133 = vsyncadd [#allocation3], %s2132
      %s2134 = sshll.u32 [#allocation2], 4
      %s2135 = int_to_ptr.vmem [resolvable:$true] %s2134
      %2140 = dma.vmem_to_hbm [thread:$0]  %s2135, 8192, %s5, [#allocation3], 128, 128, 8
    $region25: #{_device_forward.5} parent=1 // pred_fallthru
      _
    // Predicated region
    $region26: #{_device_forward.5} parent=1 // pred_check
      _
    $region27: #{_device_forward.5} parent=1 // pred_check_branch
      %2142 = sbr.rel (0) target = $region29
    $region28: #{_device_forward.5} parent=1 // pred_region
      %2143 = dma.done [#allocation3], 8192
    $region29: #{_device_forward.5} parent=1 // pred_fallthru
      _
    %2144 = vsyncpa [#allocation3], 1

</llo_original>
